<compile_context>
chip_gen: v7x
topology: tpu7x:2x2x1
jax: 0.10.0
libtpu: 0.0.40
codegen_flags: <defaults>
</compile_context>

<pallas_src>
import functools
import types

import jax
import jax.numpy as jnp
from jax.experimental import pallas as pl
from jax.experimental.pallas import tpu as pltpu


# ----------------------------------------------------------------------------
# Config (stands in for `args`)
# ----------------------------------------------------------------------------
def make_cfg():
    cfg = types.SimpleNamespace()
    cfg.hidden_size = 32          # dynamic critic hidden dim (args.hidden_size)
    cfg.node_num = 20             # args.node_num
    cfg.defender_num = 3          # args.defender_num
    cfg.state_emb_dim = 8         # embedding dim for cent_obs indices
    cfg.max_time = 10             # time-index embedding table size - 1
    cfg.hypernet_hidden = 32      # hidden dim of each hyper-net head
    cfg.pooled_dim = 16           # pooled graph-node embedding dim
    cfg.time_feat_dim = 8         # dim of T feature vector
    cfg.hyper_input_dim = cfg.pooled_dim + cfg.time_feat_dim          # 24
    cfg.state_dim = cfg.state_emb_dim * (cfg.defender_num + 2)        # 40
    H, Ds = cfg.hidden_size, cfg.state_dim
    cfg.head_dims = (Ds * H, H, H * H, H, H, 1)   # W1,b1,W2,b2,W3,b3
    cfg.num_heads = len(cfg.head_dims)

    offs, off = [], 0
    for d in cfg.head_dims:
        offs.append(off)
        off += d
    cfg.head_offsets = tuple(offs)                # (0,1280,1312,2336,2368,2400)
    cfg.total_gen = off                           # 2401
    cfg.total_gen_pad = ((off + 7) // 8) * 8      # 2408

    # padded hyper-net dims: +1 for the folded-bias ones row / constant row,
    # rounded up to a multiple of 8 sublanes.
    cfg.hyper_in_pad = ((cfg.hyper_input_dim + 1 + 7) // 8) * 8               # 32
    cfg.hyper_hidden_pad = ((cfg.num_heads * cfg.hypernet_hidden + 1 + 7) // 8) * 8  # 200
    return cfg


# ----------------------------------------------------------------------------
# Fused kernel: hyper-net (MXU, bf16 / f32-acc) + per-sample dynamic critic MLP
# (VPU), one tile of TB samples per grid step.  Feature-major: [feat, batch].
# ----------------------------------------------------------------------------
def _fused_critic_kernel(hx1_ref, sT_ref, wa_ref, wb_ref, out_ref,
                         gen_scr, h1_scr, *,
                         hidden, state_dim, head_offsets, n_acc):
    H, Ds = hidden, state_dim
    o_w1, o_b1, o_w2, o_b2, o_w3, o_b3 = head_offsets

    # ---- hyper-network (MXU, bf16 operands, f32 accumulation) ---------------
    # First layer: all six heads fused into one matmul.  The first-layer bias
    # is folded in as the last feature column (hx1 carries a ones row); one
    # extra weight row generates a constant 1.0 after the relu so the second
    # layer's biases ride the same matmul.
    hT = jnp.maximum(
        jnp.dot(wa_ref[...], hx1_ref[...],
                preferred_element_type=jnp.float32), 0.0)           # (Ha, TB)

    # Second layer: ONE block-diagonal matmul emits every per-sample parameter
    # (W1,b1,W2,b2,W3,b3) of the dynamic critic; result stays in VMEM.
    gen_scr[...] = jnp.dot(wb_ref[...], hT.astype(jnp.bfloat16),
                           preferred_element_type=jnp.float32)      # (TGpad, TB)

    # ---- dynamic per-sample critic (VPU broadcast-FMA, batch on lanes) ------
    # TODO(synk): stride-0 sublane-broadcast loads (sT_ref[pl.ds(d, H, stride=0)])
    # would move the row broadcast into the load slots, but pl.Slice requires
    # stride >= 1, so the broadcast stays implicit in the multiply.
    def fma_layer(x_row, w_off, b_off, n_in):
        acc = [gen_scr[b_off:b_off + H, :]]                # start from the bias
        acc += [jnp.zeros_like(acc[0]) for _ in range(n_acc - 1)]
        for i in range(n_in):
            w_blk = gen_scr[w_off + i * H: w_off + (i + 1) * H, :]   # (H, TB)
            acc[i % n_acc] = acc[i % n_acc] + x_row(i) * w_blk
        tot = acc[0]
        for a in acc[1:]:
            tot = tot + a
        return jnp.maximum(tot, 0.0)

    # layer 1: h1 = relu(s @ W1 + b1)
    h1_scr[...] = fma_layer(lambda d: sT_ref[d:d + 1, :], o_w1, o_b1, Ds)
    # layer 2: h2 = relu(h1 @ W2 + b2)
    h2 = fma_layer(lambda k: h1_scr[k:k + 1, :], o_w2, o_b2, H)

    # output layer: v[b] = sum_h h2[h,b] * W3[h,b] + b3[b]  (lane-dense row)
    v = (jnp.sum(h2 * gen_scr[o_w3:o_w3 + H, :], axis=0, keepdims=True)
         + gen_scr[o_b3:o_b3 + 1, :])
    out_ref[...] = v.astype(out_ref.dtype)


def fused_forward_pallas(wa_f, wb_f, hx1T, sT, cfg, tb=512):
    """hx1T: (Din, B) bf16 hyper input (+ones row), sT: (Ds, B) f32 -> (B, 1)."""
    Din, B = hx1T.shape
    Ds = sT.shape[0]
    H = cfg.hidden_size
    Ha = wa_f.shape[0]            # 200
    TG = wb_f.shape[0]            # 2408

    assert tb % 128 == 0
    # Lane-dense batch tiles: pad B up to a multiple of 128 even for tiny
    # batches, tile at <= tb.  (Pick tb per generation: v7x wants >=2 tiles and
    # tighter VMEM; v6e/v5e can go to 1024+ with a larger vmem_limit_bytes.)
    TB = min(tb, pl.cdiv(B, 128) * 128)
    ntiles = pl.cdiv(B, TB)
    Bp = ntiles * TB
    if Bp != B:
        hx1T = jnp.pad(hx1T, ((0, 0), (0, Bp - B)))
        sT = jnp.pad(sT, ((0, 0), (0, Bp - B)))

    # Multiple partial accumulators break the serial FMA chain; only needed at
    # small TB — at TB>=512 one accumulator already spans 16 vregs of ILP and
    # more would overflow the 64-vreg file.
    n_acc = max(1, min(4, 512 // TB))

    tilemap = lambda i: (0, i)        # batch-tile axis is axis 1
    const = lambda i: (0, 0)          # weights stay VMEM-resident across grid

    kernel = functools.partial(
        _fused_critic_kernel, hidden=H, state_dim=Ds,
        head_offsets=cfg.head_offsets, n_acc=n_acc)

    out = pl.pallas_call(
        kernel,
        out_shape=jax.ShapeDtypeStruct((1, Bp), jnp.float32),
        grid=(ntiles,),
        in_specs=[
            pl.BlockSpec((Din, TB), tilemap),     # hyper input tile (bf16)
            pl.BlockSpec((Ds, TB), tilemap),      # state embedding tile (f32)
            pl.BlockSpec((Ha, Din), const),       # fused hyper layer-1 W (bf16)
            pl.BlockSpec((TG, Ha), const),        # block-diag layer-2 W (bf16)
        ],
        out_specs=pl.BlockSpec((1, TB), tilemap),
        scratch_shapes=[pltpu.VMEM((TG, TB), jnp.float32),   # generated params
                        pltpu.VMEM((H, TB), jnp.float32)],   # h1
        compiler_params=pltpu.CompilerParams(
            dimension_semantics=("parallel",),
            vmem_limit_bytes=32 * 1024 * 1024),
    )(hx1T, sT, wa_f, wb_f)

    return out[0, :B].reshape(B, 1)


# ----------------------------------------------------------------------------
# Glue: embedding lookup + full forward
# ----------------------------------------------------------------------------
def embed_cent_obs(params, cent_obs, cfg):
    # cent_obs: int32 [B, defender_num + 2] = [evader, defenders..., time_idx]
    pos_idx = cent_obs[:, : cfg.defender_num + 1]
    t_idx = cent_obs[:, cfg.defender_num + 1]
    pos_e = jnp.take(params["node_emb"], pos_idx, axis=0)          # [B, nd+1, E]
    t_e = jnp.take(params["time_emb"], t_idx, axis=0)              # [B, E]
    B = cent_obs.shape[0]
    return jnp.concatenate([pos_e.reshape(B, -1), t_e], axis=-1)   # [B, Ds]


def h_critic_forward(params, wa_f, wb_f, pooled_node_emb, T, cent_obs, cfg,
                     batch=True, tb=512):
    if not batch:
        pooled_node_emb = pooled_node_emb[None]
        T = T[None]
        cent_obs = cent_obs[None]
    B = pooled_node_emb.shape[0]
    # TODO(synk): the tiny embedding gather + concat/transpose stay in XLA
    # (tables < 1 KB); they could be folded into the kernel via scalar prefetch
    # for a minor launch-overhead win at small B.
    pad = cfg.hyper_in_pad - cfg.hyper_input_dim - 1
    hx1 = jnp.concatenate(
        [pooled_node_emb.astype(jnp.float32), T.astype(jnp.float32),
         jnp.ones((B, 1), jnp.float32),
         jnp.zeros((B, pad), jnp.float32)], axis=-1)                # [B, Din]
    hx1T = hx1.T.astype(jnp.bfloat16)                               # (Din, B)
    sT = embed_cent_obs(params, cent_obs, cfg).astype(jnp.float32).T  # (Ds, B)
    values = fused_forward_pallas(wa_f, wb_f, hx1T, sT, cfg, tb=tb)   # [B, 1]
    if not batch:
        values = values[0]
    return values


# ----------------------------------------------------------------------------
# Fused / augmented weight construction (host-side, done once)
# ----------------------------------------------------------------------------
def build_fused_weights(params, cfg):
    nh, Hh = cfg.num_heads, cfg.hypernet_hidden
    Dh, Din = cfg.hyper_input_dim, cfg.hyper_in_pad
    Ha = nh * Hh
    Hap = cfg.hyper_hidden_pad

    # first layer: heads stacked, bias folded as column Dh, row Ha -> const 1.
    wa = jnp.zeros((Hap, Din), jnp.float32)
    wa = wa.at[:Ha, :Dh].set(params["Wa"])
    wa = wa.at[:Ha, Dh].set(params["ba"])
    wa = wa.at[Ha, Dh].set(1.0)

    # second layer: block-diagonal, head biases folded as column Ha.
    wb = jnp.zeros((cfg.total_gen_pad, Hap), jnp.float32)
    for j in range(nh):
        o, dj = cfg.head_offsets[j], cfg.head_dims[j]
        wb = wb.at[o:o + dj, j * Hh:(j + 1) * Hh].set(params["Wb"][j])
        wb = wb.at[o:o + dj, Ha].set(params["bb"][j])
    return wa.astype(jnp.bfloat16), wb.astype(jnp.bfloat16)


# ----------------------------------------------------------------------------
# Pure-JAX reference (same math; mirrors the kernel's bf16-matmul / f32-acc
# hyper-net numerics, which is the standard TPU precision policy).
# ----------------------------------------------------------------------------
def reference_forward(params, pooled_node_emb, T, cent_obs, cfg):
    f32, bf16 = jnp.float32, jnp.bfloat16
    hx = jnp.concatenate([pooled_node_emb, T], axis=-1).astype(f32)
    s = embed_cent_obs(params, cent_obs, cfg).astype(f32)
    B = hx.shape[0]
    H, Ds, Hh = cfg.hidden_size, cfg.state_dim, cfg.hypernet_hidden

    h = jax.nn.relu(
        jnp.dot(hx.astype(bf16), params["Wa"].astype(bf16).T,
                preferred_element_type=f32)
        + params["ba"].astype(bf16).astype(f32))
    hb = h.astype(bf16)
    gens = []
    for j in range(cfg.num_heads):
        hj = hb[:, j * Hh:(j + 1) * Hh]
        gens.append(jnp.dot(hj, params["Wb"][j].astype(bf16).T,
                            preferred_element_type=f32)
                    + params["bb"][j].astype(bf16).astype(f32))
    w1 = gens[0].reshape(B, Ds, H); b1 = gens[1]
    w2 = gens[2].reshape(B, H, H);  b2 = gens[3]
    w3 = gens[4].reshape(B, H, 1);  b3 = gens[5]
    h1 = jax.nn.relu(jnp.einsum("bd,bdh->bh", s, w1) + b1)
    h2 = jax.nn.relu(jnp.einsum("bh,bhk->bk", h1, w2) + b2)
    return jnp.einsum("bh,bhk->bk", h2, w3) + b3


# ----------------------------------------------------------------------------
# Deterministic parameter init (synthetic weights; shapes from __init__).
# ----------------------------------------------------------------------------
def init_params(key, cfg):
    # TODO(synk): head_init_method (args.h_init, e.g. orthogonal head init) not
    # replicated; deterministic scaled-Gaussian init used instead.
    nh = cfg.num_heads
    ks = jax.random.split(key, 4 + 2 * nh)
    E = cfg.state_emb_dim
    Dh, Hh = cfg.hyper_input_dim, cfg.hypernet_hidden

    node_emb = 0.1 * jax.random.normal(ks[0], (cfg.node_num + 1, E), jnp.float32)
    time_emb = 0.1 * jax.random.normal(ks[1], (cfg.max_time + 1, E), jnp.float32)

    Wa = jax.random.normal(ks[2], (nh * Hh, Dh), jnp.float32) / jnp.sqrt(Dh)
    ba = 0.01 * jax.random.normal(ks[3], (nh * Hh,), jnp.float32)

    Wb, bb = [], []
    for j, dj in enumerate(cfg.head_dims):
        Wb.append(0.1 * jax.random.normal(ks[4 + 2 * j], (dj, Hh), jnp.float32)
                  / jnp.sqrt(Hh))
        bb.append(0.01 * jax.random.normal(ks[5 + 2 * j], (dj,), jnp.float32))

    return {"node_emb": node_emb, "time_emb": time_emb,
            "Wa": Wa, "ba": ba, "Wb": tuple(Wb), "bb": tuple(bb)}


# ----------------------------------------------------------------------------
if __name__ == "__main__":
    cfg = make_cfg()
    key = jax.random.PRNGKey(0)
    k_in, k_t, k_obs, k_time, k_par = jax.random.split(key, 5)
    params = init_params(k_par, cfg)
    wa_f, wb_f = build_fused_weights(params, cfg)

    # (B=256, tb=128): two 128-lane tiles, 4 partial accumulators (multi-tile
    #                  "parallel" grid path).
    # (B=300, tb=512): single 384-lane tile with batch padding.
    # (B=4,   tb=512): small-batch path padded up to a lane-dense 128 tile.
    for B, tb in ((256, 128), (300, 512), (4, 512)):
        pooled = jax.random.normal(jax.random.fold_in(k_in, B),
                                   (B, cfg.pooled_dim), jnp.float32)
        T = jax.random.normal(jax.random.fold_in(k_t, B),
                              (B, cfg.time_feat_dim), jnp.float32)
        pos = jax.random.randint(jax.random.fold_in(k_obs, B),
                                 (B, cfg.defender_num + 1), 0, cfg.node_num + 1)
        tstep = jax.random.randint(jax.random.fold_in(k_time, B),
                                   (B, 1), 0, cfg.max_time + 1)
        cent_obs = jnp.concatenate([pos, tstep], axis=-1).astype(jnp.int32)

        values = h_critic_forward(params, wa_f, wb_f, pooled, T, cent_obs, cfg,
                                  batch=True, tb=tb)
        values = jax.block_until_ready(values)

        ref = reference_forward(params, pooled, T, cent_obs, cfg)
        assert values.shape == (B, 1)
        err = float(jnp.max(jnp.abs(values - ref)))
        assert jnp.allclose(values, ref, rtol=1e-3, atol=1e-3), (B, tb, err)

    print("KERNEL_OK")
</pallas_src>

<mosaic_0001>
module attributes {stable_mosaic.version = 11 : i64} {
  func.func @_fused_critic_kernel(%arg0: i32, %arg1: memref<32x128xbf16, #tpu.memory_space<vmem>>, %arg2: memref<40x128xf32, #tpu.memory_space<vmem>>, %arg3: memref<200x32xbf16, #tpu.memory_space<vmem>>, %arg4: memref<2408x200xbf16, #tpu.memory_space<vmem>>, %arg5: memref<1x128xf32, #tpu.memory_space<vmem>>, %arg6: memref<2408x128xf32, #tpu.memory_space<vmem>>, %arg7: memref<32x128xf32, #tpu.memory_space<vmem>>) attributes {dimension_semantics = [#tpu.dimension_semantics<parallel>], iteration_bounds = array<i64: 2>, scalar_prefetch = 0 : i64, scratch_operands = 2 : i64, tpu.core_type = #tpu.core_type<tc>, window_params = [{transform_indices = @transform_0, window_bounds = array<i64: 32, 128>}, {transform_indices = @transform_1, window_bounds = array<i64: 40, 128>}, {pipeline_mode = #tpu.pipeline_mode<synchronous>, transform_indices = @transform_2, window_bounds = array<i64: 200, 32>}, {pipeline_mode = #tpu.pipeline_mode<synchronous>, transform_indices = @transform_3, window_bounds = array<i64: 2408, 200>}, {transform_indices = @transform_4, window_bounds = array<i64: 1, 128>}]} {
    %c0 = arith.constant 0 : index
    %c0_0 = arith.constant 0 : index
    %0 = vector.load %arg3[%c0, %c0_0] : memref<200x32xbf16, #tpu.memory_space<vmem>>, vector<200x32xbf16>
    %c0_1 = arith.constant 0 : index
    %c0_2 = arith.constant 0 : index
    %1 = vector.load %arg1[%c0_1, %c0_2] : memref<32x128xbf16, #tpu.memory_space<vmem>>, vector<32x128xbf16>
    %cst = arith.constant dense<0.000000e+00> : vector<200x128xf32>
    %2 = tpu.matmul %0, %1, %cst {dimension_numbers = #tpu.dot_dimension_numbers<[1], [0], [0], [1], [0, 0, 1, 1], [], []>} : vector<200x32xbf16>, vector<32x128xbf16>, vector<200x128xf32> -> vector<200x128xf32>
    %cst_3 = arith.constant 0.000000e+00 : f32
    %3 = vector.broadcast %cst_3 : f32 to vector<200x128xf32>
    %4 = arith.maximumf %2, %3 : vector<200x128xf32>
    %c0_4 = arith.constant 0 : index
    %c0_5 = arith.constant 0 : index
    %5 = vector.load %arg4[%c0_4, %c0_5] : memref<2408x200xbf16, #tpu.memory_space<vmem>>, vector<2408x200xbf16>
    %6 = arith.truncf %4 : vector<200x128xf32> to vector<200x128xbf16>
    %cst_6 = arith.constant dense<0.000000e+00> : vector<2408x128xf32>
    %7 = tpu.matmul %5, %6, %cst_6 {dimension_numbers = #tpu.dot_dimension_numbers<[1], [0], [0], [1], [0, 0, 1, 1], [], []>} : vector<2408x200xbf16>, vector<200x128xbf16>, vector<2408x128xf32> -> vector<2408x128xf32>
    %c0_7 = arith.constant 0 : index
    %c0_8 = arith.constant 0 : index
    %8 = vector.load %arg6[%c0_7, %c0_8] : memref<2408x128xf32, #tpu.memory_space<vmem>>, vector<2408x128xf32>
    tpu.vector_store %arg6[%c0_7, %c0_8], %7 {strides = array<i32>} : memref<2408x128xf32, #tpu.memory_space<vmem>>, vector<2408x128xf32>,
    %c1280 = arith.constant 1280 : index
    %c0_9 = arith.constant 0 : index
    %9 = vector.load %arg6[%c1280, %c0_9] : memref<2408x128xf32, #tpu.memory_space<vmem>>, vector<32x128xf32>
    %cst_10 = arith.constant 0.000000e+00 : f32
    %10 = vector.broadcast %cst_10 : f32 to vector<32x128xf32>
    %cst_11 = arith.constant 0.000000e+00 : f32
    %11 = vector.broadcast %cst_11 : f32 to vector<32x128xf32>
    %cst_12 = arith.constant 0.000000e+00 : f32
    %12 = vector.broadcast %cst_12 : f32 to vector<32x128xf32>
    %c0_13 = arith.constant 0 : index
    %c0_14 = arith.constant 0 : index
    %13 = vector.load %arg6[%c0_13, %c0_14] : memref<2408x128xf32, #tpu.memory_space<vmem>>, vector<32x128xf32>
    %c0_15 = arith.constant 0 : index
    %c0_16 = arith.constant 0 : index
    %14 = vector.load %arg2[%c0_15, %c0_16] : memref<40x128xf32, #tpu.memory_space<vmem>>, vector<1x128xf32>
    %15 = vector.broadcast %14 : vector<1x128xf32> to vector<32x128xf32>
    %16 = arith.mulf %15, %13 : vector<32x128xf32>
    %17 = arith.addf %9, %16 : vector<32x128xf32>
    %c32 = arith.constant 32 : index
    %c0_17 = arith.constant 0 : index
    %18 = vector.load %arg6[%c32, %c0_17] : memref<2408x128xf32, #tpu.memory_space<vmem>>, vector<32x128xf32>
    %c1 = arith.constant 1 : index
    %c0_18 = arith.constant 0 : index
    %19 = vector.load %arg2[%c1, %c0_18] : memref<40x128xf32, #tpu.memory_space<vmem>>, vector<1x128xf32>
    %20 = vector.broadcast %19 : vector<1x128xf32> to vector<32x128xf32>
    %21 = arith.mulf %20, %18 : vector<32x128xf32>
    %22 = arith.addf %10, %21 : vector<32x128xf32>
    %c64 = arith.constant 64 : index
    %c0_19 = arith.constant 0 : index
    %23 = vector.load %arg6[%c64, %c0_19] : memref<2408x128xf32, #tpu.memory_space<vmem>>, vector<32x128xf32>
    %c2 = arith.constant 2 : index
    %c0_20 = arith.constant 0 : index
    %24 = vector.load %arg2[%c2, %c0_20] : memref<40x128xf32, #tpu.memory_space<vmem>>, vector<1x128xf32>
    %25 = vector.broadcast %24 : vector<1x128xf32> to vector<32x128xf32>
    %26 = arith.mulf %25, %23 : vector<32x128xf32>
    %27 = arith.addf %11, %26 : vector<32x128xf32>
    %c96 = arith.constant 96 : index
    %c0_21 = arith.constant 0 : index
    %28 = vector.load %arg6[%c96, %c0_21] : memref<2408x128xf32, #tpu.memory_space<vmem>>, vector<32x128xf32>
    %c3 = arith.constant 3 : index
    %c0_22 = arith.constant 0 : index
    %29 = vector.load %arg2[%c3, %c0_22] : memref<40x128xf32, #tpu.memory_space<vmem>>, vector<1x128xf32>
    %30 = vector.broadcast %29 : vector<1x128xf32> to vector<32x128xf32>
    %31 = arith.mulf %30, %28 : vector<32x128xf32>
    %32 = arith.addf %12, %31 : vector<32x128xf32>
    %c128 = arith.constant 128 : index
    %c0_23 = arith.constant 0 : index
    %33 = vector.load %arg6[%c128, %c0_23] : memref<2408x128xf32, #tpu.memory_space<vmem>>, vector<32x128xf32>
    %c4 = arith.constant 4 : index
    %c0_24 = arith.constant 0 : index
    %34 = vector.load %arg2[%c4, %c0_24] : memref<40x128xf32, #tpu.memory_space<vmem>>, vector<1x128xf32>
    %35 = vector.broadcast %34 : vector<1x128xf32> to vector<32x128xf32>
    %36 = arith.mulf %35, %33 : vector<32x128xf32>
    %37 = arith.addf %17, %36 : vector<32x128xf32>
    %c160 = arith.constant 160 : index
    %c0_25 = arith.constant 0 : index
    %38 = vector.load %arg6[%c160, %c0_25] : memref<2408x128xf32, #tpu.memory_space<vmem>>, vector<32x128xf32>
    %c5 = arith.constant 5 : index
    %c0_26 = arith.constant 0 : index
    %39 = vector.load %arg2[%c5, %c0_26] : memref<40x128xf32, #tpu.memory_space<vmem>>, vector<1x128xf32>
    %40 = vector.broadcast %39 : vector<1x128xf32> to vector<32x128xf32>
    %41 = arith.mulf %40, %38 : vector<32x128xf32>
    %42 = arith.addf %22, %41 : vector<32x128xf32>
    %c192 = arith.constant 192 : index
    %c0_27 = arith.constant 0 : index
    %43 = vector.load %arg6[%c192, %c0_27] : memref<2408x128xf32, #tpu.memory_space<vmem>>, vector<32x128xf32>
    %c6 = arith.constant 6 : index
    %c0_28 = arith.constant 0 : index
    %44 = vector.load %arg2[%c6, %c0_28] : memref<40x128xf32, #tpu.memory_space<vmem>>, vector<1x128xf32>
    %45 = vector.broadcast %44 : vector<1x128xf32> to vector<32x128xf32>
    %46 = arith.mulf %45, %43 : vector<32x128xf32>
    %47 = arith.addf %27, %46 : vector<32x128xf32>
    %c224 = arith.constant 224 : index
    %c0_29 = arith.constant 0 : index
    %48 = vector.load %arg6[%c224, %c0_29] : memref<2408x128xf32, #tpu.memory_space<vmem>>, vector<32x128xf32>
    %c7 = arith.constant 7 : index
    %c0_30 = arith.constant 0 : index
    %49 = vector.load %arg2[%c7, %c0_30] : memref<40x128xf32, #tpu.memory_space<vmem>>, vector<1x128xf32>
    %50 = vector.broadcast %49 : vector<1x128xf32> to vector<32x128xf32>
    %51 = arith.mulf %50, %48 : vector<32x128xf32>
    %52 = arith.addf %32, %51 : vector<32x128xf32>
    %c256 = arith.constant 256 : index
    %c0_31 = arith.constant 0 : index
    %53 = vector.load %arg6[%c256, %c0_31] : memref<2408x128xf32, #tpu.memory_space<vmem>>, vector<32x128xf32>
    %c8 = arith.constant 8 : index
    %c0_32 = arith.constant 0 : index
    %54 = vector.load %arg2[%c8, %c0_32] : memref<40x128xf32, #tpu.memory_space<vmem>>, vector<1x128xf32>
    %55 = vector.broadcast %54 : vector<1x128xf32> to vector<32x128xf32>
    %56 = arith.mulf %55, %53 : vector<32x128xf32>
    %57 = arith.addf %37, %56 : vector<32x128xf32>
    %c288 = arith.constant 288 : index
    %c0_33 = arith.constant 0 : index
    %58 = vector.load %arg6[%c288, %c0_33] : memref<2408x128xf32, #tpu.memory_space<vmem>>, vector<32x128xf32>
    %c9 = arith.constant 9 : index
    %c0_34 = arith.constant 0 : index
    %59 = vector.load %arg2[%c9, %c0_34] : memref<40x128xf32, #tpu.memory_space<vmem>>, vector<1x128xf32>
    %60 = vector.broadcast %59 : vector<1x128xf32> to vector<32x128xf32>
    %61 = arith.mulf %60, %58 : vector<32x128xf32>
    %62 = arith.addf %42, %61 : vector<32x128xf32>
    %c320 = arith.constant 320 : index
    %c0_35 = arith.constant 0 : index
    %63 = vector.load %arg6[%c320, %c0_35] : memref<2408x128xf32, #tpu.memory_space<vmem>>, vector<32x128xf32>
    %c10 = arith.constant 10 : index
    %c0_36 = arith.constant 0 : index
    %64 = vector.load %arg2[%c10, %c0_36] : memref<40x128xf32, #tpu.memory_space<vmem>>, vector<1x128xf32>
    %65 = vector.broadcast %64 : vector<1x128xf32> to vector<32x128xf32>
    %66 = arith.mulf %65, %63 : vector<32x128xf32>
    %67 = arith.addf %47, %66 : vector<32x128xf32>
    %c352 = arith.constant 352 : index
    %c0_37 = arith.constant 0 : index
    %68 = vector.load %arg6[%c352, %c0_37] : memref<2408x128xf32, #tpu.memory_space<vmem>>, vector<32x128xf32>
    %c11 = arith.constant 11 : index
    %c0_38 = arith.constant 0 : index
    %69 = vector.load %arg2[%c11, %c0_38] : memref<40x128xf32, #tpu.memory_space<vmem>>, vector<1x128xf32>
    %70 = vector.broadcast %69 : vector<1x128xf32> to vector<32x128xf32>
    %71 = arith.mulf %70, %68 : vector<32x128xf32>
    %72 = arith.addf %52, %71 : vector<32x128xf32>
    %c384 = arith.constant 384 : index
    %c0_39 = arith.constant 0 : index
    %73 = vector.load %arg6[%c384, %c0_39] : memref<2408x128xf32, #tpu.memory_space<vmem>>, vector<32x128xf32>
    %c12 = arith.constant 12 : index
    %c0_40 = arith.constant 0 : index
    %74 = vector.load %arg2[%c12, %c0_40] : memref<40x128xf32, #tpu.memory_space<vmem>>, vector<1x128xf32>
    %75 = vector.broadcast %74 : vector<1x128xf32> to vector<32x128xf32>
    %76 = arith.mulf %75, %73 : vector<32x128xf32>
    %77 = arith.addf %57, %76 : vector<32x128xf32>
    %c416 = arith.constant 416 : index
    %c0_41 = arith.constant 0 : index
    %78 = vector.load %arg6[%c416, %c0_41] : memref<2408x128xf32, #tpu.memory_space<vmem>>, vector<32x128xf32>
    %c13 = arith.constant 13 : index
    %c0_42 = arith.constant 0 : index
    %79 = vector.load %arg2[%c13, %c0_42] : memref<40x128xf32, #tpu.memory_space<vmem>>, vector<1x128xf32>
    %80 = vector.broadcast %79 : vector<1x128xf32> to vector<32x128xf32>
    %81 = arith.mulf %80, %78 : vector<32x128xf32>
    %82 = arith.addf %62, %81 : vector<32x128xf32>
    %c448 = arith.constant 448 : index
    %c0_43 = arith.constant 0 : index
    %83 = vector.load %arg6[%c448, %c0_43] : memref<2408x128xf32, #tpu.memory_space<vmem>>, vector<32x128xf32>
    %c14 = arith.constant 14 : index
    %c0_44 = arith.constant 0 : index
    %84 = vector.load %arg2[%c14, %c0_44] : memref<40x128xf32, #tpu.memory_space<vmem>>, vector<1x128xf32>
    %85 = vector.broadcast %84 : vector<1x128xf32> to vector<32x128xf32>
    %86 = arith.mulf %85, %83 : vector<32x128xf32>
    %87 = arith.addf %67, %86 : vector<32x128xf32>
    %c480 = arith.constant 480 : index
    %c0_45 = arith.constant 0 : index
    %88 = vector.load %arg6[%c480, %c0_45] : memref<2408x128xf32, #tpu.memory_space<vmem>>, vector<32x128xf32>
    %c15 = arith.constant 15 : index
    %c0_46 = arith.constant 0 : index
    %89 = vector.load %arg2[%c15, %c0_46] : memref<40x128xf32, #tpu.memory_space<vmem>>, vector<1x128xf32>
    %90 = vector.broadcast %89 : vector<1x128xf32> to vector<32x128xf32>
    %91 = arith.mulf %90, %88 : vector<32x128xf32>
    %92 = arith.addf %72, %91 : vector<32x128xf32>
    %c512 = arith.constant 512 : index
    %c0_47 = arith.constant 0 : index
    %93 = vector.load %arg6[%c512, %c0_47] : memref<2408x128xf32, #tpu.memory_space<vmem>>, vector<32x128xf32>
    %c16 = arith.constant 16 : index
    %c0_48 = arith.constant 0 : index
    %94 = vector.load %arg2[%c16, %c0_48] : memref<40x128xf32, #tpu.memory_space<vmem>>, vector<1x128xf32>
    %95 = vector.broadcast %94 : vector<1x128xf32> to vector<32x128xf32>
    %96 = arith.mulf %95, %93 : vector<32x128xf32>
    %97 = arith.addf %77, %96 : vector<32x128xf32>
    %c544 = arith.constant 544 : index
    %c0_49 = arith.constant 0 : index
    %98 = vector.load %arg6[%c544, %c0_49] : memref<2408x128xf32, #tpu.memory_space<vmem>>, vector<32x128xf32>
    %c17 = arith.constant 17 : index
    %c0_50 = arith.constant 0 : index
    %99 = vector.load %arg2[%c17, %c0_50] : memref<40x128xf32, #tpu.memory_space<vmem>>, vector<1x128xf32>
    %100 = vector.broadcast %99 : vector<1x128xf32> to vector<32x128xf32>
    %101 = arith.mulf %100, %98 : vector<32x128xf32>
    %102 = arith.addf %82, %101 : vector<32x128xf32>
    %c576 = arith.constant 576 : index
    %c0_51 = arith.constant 0 : index
    %103 = vector.load %arg6[%c576, %c0_51] : memref<2408x128xf32, #tpu.memory_space<vmem>>, vector<32x128xf32>
    %c18 = arith.constant 18 : index
    %c0_52 = arith.constant 0 : index
    %104 = vector.load %arg2[%c18, %c0_52] : memref<40x128xf32, #tpu.memory_space<vmem>>, vector<1x128xf32>
    %105 = vector.broadcast %104 : vector<1x128xf32> to vector<32x128xf32>
    %106 = arith.mulf %105, %103 : vector<32x128xf32>
    %107 = arith.addf %87, %106 : vector<32x128xf32>
    %c608 = arith.constant 608 : index
    %c0_53 = arith.constant 0 : index
    %108 = vector.load %arg6[%c608, %c0_53] : memref<2408x128xf32, #tpu.memory_space<vmem>>, vector<32x128xf32>
    %c19 = arith.constant 19 : index
    %c0_54 = arith.constant 0 : index
    %109 = vector.load %arg2[%c19, %c0_54] : memref<40x128xf32, #tpu.memory_space<vmem>>, vector<1x128xf32>
    %110 = vector.broadcast %109 : vector<1x128xf32> to vector<32x128xf32>
    %111 = arith.mulf %110, %108 : vector<32x128xf32>
    %112 = arith.addf %92, %111 : vector<32x128xf32>
    %c640 = arith.constant 640 : index
    %c0_55 = arith.constant 0 : index
    %113 = vector.load %arg6[%c640, %c0_55] : memref<2408x128xf32, #tpu.memory_space<vmem>>, vector<32x128xf32>
    %c20 = arith.constant 20 : index
    %c0_56 = arith.constant 0 : index
    %114 = vector.load %arg2[%c20, %c0_56] : memref<40x128xf32, #tpu.memory_space<vmem>>, vector<1x128xf32>
    %115 = vector.broadcast %114 : vector<1x128xf32> to vector<32x128xf32>
    %116 = arith.mulf %115, %113 : vector<32x128xf32>
    %117 = arith.addf %97, %116 : vector<32x128xf32>
    %c672 = arith.constant 672 : index
    %c0_57 = arith.constant 0 : index
    %118 = vector.load %arg6[%c672, %c0_57] : memref<2408x128xf32, #tpu.memory_space<vmem>>, vector<32x128xf32>
    %c21 = arith.constant 21 : index
    %c0_58 = arith.constant 0 : index
    %119 = vector.load %arg2[%c21, %c0_58] : memref<40x128xf32, #tpu.memory_space<vmem>>, vector<1x128xf32>
    %120 = vector.broadcast %119 : vector<1x128xf32> to vector<32x128xf32>
    %121 = arith.mulf %120, %118 : vector<32x128xf32>
    %122 = arith.addf %102, %121 : vector<32x128xf32>
    %c704 = arith.constant 704 : index
    %c0_59 = arith.constant 0 : index
    %123 = vector.load %arg6[%c704, %c0_59] : memref<2408x128xf32, #tpu.memory_space<vmem>>, vector<32x128xf32>
    %c22 = arith.constant 22 : index
    %c0_60 = arith.constant 0 : index
    %124 = vector.load %arg2[%c22, %c0_60] : memref<40x128xf32, #tpu.memory_space<vmem>>, vector<1x128xf32>
    %125 = vector.broadcast %124 : vector<1x128xf32> to vector<32x128xf32>
    %126 = arith.mulf %125, %123 : vector<32x128xf32>
    %127 = arith.addf %107, %126 : vector<32x128xf32>
    %c736 = arith.constant 736 : index
    %c0_61 = arith.constant 0 : index
    %128 = vector.load %arg6[%c736, %c0_61] : memref<2408x128xf32, #tpu.memory_space<vmem>>, vector<32x128xf32>
    %c23 = arith.constant 23 : index
    %c0_62 = arith.constant 0 : index
    %129 = vector.load %arg2[%c23, %c0_62] : memref<40x128xf32, #tpu.memory_space<vmem>>, vector<1x128xf32>
    %130 = vector.broadcast %129 : vector<1x128xf32> to vector<32x128xf32>
    %131 = arith.mulf %130, %128 : vector<32x128xf32>
    %132 = arith.addf %112, %131 : vector<32x128xf32>
    %c768 = arith.constant 768 : index
    %c0_63 = arith.constant 0 : index
    %133 = vector.load %arg6[%c768, %c0_63] : memref<2408x128xf32, #tpu.memory_space<vmem>>, vector<32x128xf32>
    %c24 = arith.constant 24 : index
    %c0_64 = arith.constant 0 : index
    %134 = vector.load %arg2[%c24, %c0_64] : memref<40x128xf32, #tpu.memory_space<vmem>>, vector<1x128xf32>
    %135 = vector.broadcast %134 : vector<1x128xf32> to vector<32x128xf32>
    %136 = arith.mulf %135, %133 : vector<32x128xf32>
    %137 = arith.addf %117, %136 : vector<32x128xf32>
    %c800 = arith.constant 800 : index
    %c0_65 = arith.constant 0 : index
    %138 = vector.load %arg6[%c800, %c0_65] : memref<2408x128xf32, #tpu.memory_space<vmem>>, vector<32x128xf32>
    %c25 = arith.constant 25 : index
    %c0_66 = arith.constant 0 : index
    %139 = vector.load %arg2[%c25, %c0_66] : memref<40x128xf32, #tpu.memory_space<vmem>>, vector<1x128xf32>
    %140 = vector.broadcast %139 : vector<1x128xf32> to vector<32x128xf32>
    %141 = arith.mulf %140, %138 : vector<32x128xf32>
    %142 = arith.addf %122, %141 : vector<32x128xf32>
    %c832 = arith.constant 832 : index
    %c0_67 = arith.constant 0 : index
    %143 = vector.load %arg6[%c832, %c0_67] : memref<2408x128xf32, #tpu.memory_space<vmem>>, vector<32x128xf32>
    %c26 = arith.constant 26 : index
    %c0_68 = arith.constant 0 : index
    %144 = vector.load %arg2[%c26, %c0_68] : memref<40x128xf32, #tpu.memory_space<vmem>>, vector<1x128xf32>
    %145 = vector.broadcast %144 : vector<1x128xf32> to vector<32x128xf32>
    %146 = arith.mulf %145, %143 : vector<32x128xf32>
    %147 = arith.addf %127, %146 : vector<32x128xf32>
    %c864 = arith.constant 864 : index
    %c0_69 = arith.constant 0 : index
    %148 = vector.load %arg6[%c864, %c0_69] : memref<2408x128xf32, #tpu.memory_space<vmem>>, vector<32x128xf32>
    %c27 = arith.constant 27 : index
    %c0_70 = arith.constant 0 : index
    %149 = vector.load %arg2[%c27, %c0_70] : memref<40x128xf32, #tpu.memory_space<vmem>>, vector<1x128xf32>
    %150 = vector.broadcast %149 : vector<1x128xf32> to vector<32x128xf32>
    %151 = arith.mulf %150, %148 : vector<32x128xf32>
    %152 = arith.addf %132, %151 : vector<32x128xf32>
    %c896 = arith.constant 896 : index
    %c0_71 = arith.constant 0 : index
    %153 = vector.load %arg6[%c896, %c0_71] : memref<2408x128xf32, #tpu.memory_space<vmem>>, vector<32x128xf32>
    %c28 = arith.constant 28 : index
    %c0_72 = arith.constant 0 : index
    %154 = vector.load %arg2[%c28, %c0_72] : memref<40x128xf32, #tpu.memory_space<vmem>>, vector<1x128xf32>
    %155 = vector.broadcast %154 : vector<1x128xf32> to vector<32x128xf32>
    %156 = arith.mulf %155, %153 : vector<32x128xf32>
    %157 = arith.addf %137, %156 : vector<32x128xf32>
    %c928 = arith.constant 928 : index
    %c0_73 = arith.constant 0 : index
    %158 = vector.load %arg6[%c928, %c0_73] : memref<2408x128xf32, #tpu.memory_space<vmem>>, vector<32x128xf32>
    %c29 = arith.constant 29 : index
    %c0_74 = arith.constant 0 : index
    %159 = vector.load %arg2[%c29, %c0_74] : memref<40x128xf32, #tpu.memory_space<vmem>>, vector<1x128xf32>
    %160 = vector.broadcast %159 : vector<1x128xf32> to vector<32x128xf32>
    %161 = arith.mulf %160, %158 : vector<32x128xf32>
    %162 = arith.addf %142, %161 : vector<32x128xf32>
    %c960 = arith.constant 960 : index
    %c0_75 = arith.constant 0 : index
    %163 = vector.load %arg6[%c960, %c0_75] : memref<2408x128xf32, #tpu.memory_space<vmem>>, vector<32x128xf32>
    %c30 = arith.constant 30 : index
    %c0_76 = arith.constant 0 : index
    %164 = vector.load %arg2[%c30, %c0_76] : memref<40x128xf32, #tpu.memory_space<vmem>>, vector<1x128xf32>
    %165 = vector.broadcast %164 : vector<1x128xf32> to vector<32x128xf32>
    %166 = arith.mulf %165, %163 : vector<32x128xf32>
    %167 = arith.addf %147, %166 : vector<32x128xf32>
    %c992 = arith.constant 992 : index
    %c0_77 = arith.constant 0 : index
    %168 = vector.load %arg6[%c992, %c0_77] : memref<2408x128xf32, #tpu.memory_space<vmem>>, vector<32x128xf32>
    %c31 = arith.constant 31 : index
    %c0_78 = arith.constant 0 : index
    %169 = vector.load %arg2[%c31, %c0_78] : memref<40x128xf32, #tpu.memory_space<vmem>>, vector<1x128xf32>
    %170 = vector.broadcast %169 : vector<1x128xf32> to vector<32x128xf32>
    %171 = arith.mulf %170, %168 : vector<32x128xf32>
    %172 = arith.addf %152, %171 : vector<32x128xf32>
    %c1024 = arith.constant 1024 : index
    %c0_79 = arith.constant 0 : index
    %173 = vector.load %arg6[%c1024, %c0_79] : memref<2408x128xf32, #tpu.memory_space<vmem>>, vector<32x128xf32>
    %c32_80 = arith.constant 32 : index
    %c0_81 = arith.constant 0 : index
    %174 = vector.load %arg2[%c32_80, %c0_81] : memref<40x128xf32, #tpu.memory_space<vmem>>, vector<1x128xf32>
    %175 = vector.broadcast %174 : vector<1x128xf32> to vector<32x128xf32>
    %176 = arith.mulf %175, %173 : vector<32x128xf32>
    %177 = arith.addf %157, %176 : vector<32x128xf32>
    %c1056 = arith.constant 1056 : index
    %c0_82 = arith.constant 0 : index
    %178 = vector.load %arg6[%c1056, %c0_82] : memref<2408x128xf32, #tpu.memory_space<vmem>>, vector<32x128xf32>
    %c33 = arith.constant 33 : index
    %c0_83 = arith.constant 0 : index
    %179 = vector.load %arg2[%c33, %c0_83] : memref<40x128xf32, #tpu.memory_space<vmem>>, vector<1x128xf32>
    %180 = vector.broadcast %179 : vector<1x128xf32> to vector<32x128xf32>
    %181 = arith.mulf %180, %178 : vector<32x128xf32>
    %182 = arith.addf %162, %181 : vector<32x128xf32>
    %c1088 = arith.constant 1088 : index
    %c0_84 = arith.constant 0 : index
    %183 = vector.load %arg6[%c1088, %c0_84] : memref<2408x128xf32, #tpu.memory_space<vmem>>, vector<32x128xf32>
    %c34 = arith.constant 34 : index
    %c0_85 = arith.constant 0 : index
    %184 = vector.load %arg2[%c34, %c0_85] : memref<40x128xf32, #tpu.memory_space<vmem>>, vector<1x128xf32>
    %185 = vector.broadcast %184 : vector<1x128xf32> to vector<32x128xf32>
    %186 = arith.mulf %185, %183 : vector<32x128xf32>
    %187 = arith.addf %167, %186 : vector<32x128xf32>
    %c1120 = arith.constant 1120 : index
    %c0_86 = arith.constant 0 : index
    %188 = vector.load %arg6[%c1120, %c0_86] : memref<2408x128xf32, #tpu.memory_space<vmem>>, vector<32x128xf32>
    %c35 = arith.constant 35 : index
    %c0_87 = arith.constant 0 : index
    %189 = vector.load %arg2[%c35, %c0_87] : memref<40x128xf32, #tpu.memory_space<vmem>>, vector<1x128xf32>
    %190 = vector.broadcast %189 : vector<1x128xf32> to vector<32x128xf32>
    %191 = arith.mulf %190, %188 : vector<32x128xf32>
    %192 = arith.addf %172, %191 : vector<32x128xf32>
    %c1152 = arith.constant 1152 : index
    %c0_88 = arith.constant 0 : index
    %193 = vector.load %arg6[%c1152, %c0_88] : memref<2408x128xf32, #tpu.memory_space<vmem>>, vector<32x128xf32>
    %c36 = arith.constant 36 : index
    %c0_89 = arith.constant 0 : index
    %194 = vector.load %arg2[%c36, %c0_89] : memref<40x128xf32, #tpu.memory_space<vmem>>, vector<1x128xf32>
    %195 = vector.broadcast %194 : vector<1x128xf32> to vector<32x128xf32>
    %196 = arith.mulf %195, %193 : vector<32x128xf32>
    %197 = arith.addf %177, %196 : vector<32x128xf32>
    %c1184 = arith.constant 1184 : index
    %c0_90 = arith.constant 0 : index
    %198 = vector.load %arg6[%c1184, %c0_90] : memref<2408x128xf32, #tpu.memory_space<vmem>>, vector<32x128xf32>
    %c37 = arith.constant 37 : index
    %c0_91 = arith.constant 0 : index
    %199 = vector.load %arg2[%c37, %c0_91] : memref<40x128xf32, #tpu.memory_space<vmem>>, vector<1x128xf32>
    %200 = vector.broadcast %199 : vector<1x128xf32> to vector<32x128xf32>
    %201 = arith.mulf %200, %198 : vector<32x128xf32>
    %202 = arith.addf %182, %201 : vector<32x128xf32>
    %c1216 = arith.constant 1216 : index
    %c0_92 = arith.constant 0 : index
    %203 = vector.load %arg6[%c1216, %c0_92] : memref<2408x128xf32, #tpu.memory_space<vmem>>, vector<32x128xf32>
    %c38 = arith.constant 38 : index
    %c0_93 = arith.constant 0 : index
    %204 = vector.load %arg2[%c38, %c0_93] : memref<40x128xf32, #tpu.memory_space<vmem>>, vector<1x128xf32>
    %205 = vector.broadcast %204 : vector<1x128xf32> to vector<32x128xf32>
    %206 = arith.mulf %205, %203 : vector<32x128xf32>
    %207 = arith.addf %187, %206 : vector<32x128xf32>
    %c1248 = arith.constant 1248 : index
    %c0_94 = arith.constant 0 : index
    %208 = vector.load %arg6[%c1248, %c0_94] : memref<2408x128xf32, #tpu.memory_space<vmem>>, vector<32x128xf32>
    %c39 = arith.constant 39 : index
    %c0_95 = arith.constant 0 : index
    %209 = vector.load %arg2[%c39, %c0_95] : memref<40x128xf32, #tpu.memory_space<vmem>>, vector<1x128xf32>
    %210 = vector.broadcast %209 : vector<1x128xf32> to vector<32x128xf32>
    %211 = arith.mulf %210, %208 : vector<32x128xf32>
    %212 = arith.addf %192, %211 : vector<32x128xf32>
    %213 = arith.addf %197, %202 : vector<32x128xf32>
    %214 = arith.addf %213, %207 : vector<32x128xf32>
    %215 = arith.addf %214, %212 : vector<32x128xf32>
    %cst_96 = arith.constant 0.000000e+00 : f32
    %216 = vector.broadcast %cst_96 : f32 to vector<32x128xf32>
    %217 = arith.maximumf %215, %216 : vector<32x128xf32>
    %c0_97 = arith.constant 0 : index
    %c0_98 = arith.constant 0 : index
    %218 = vector.load %arg7[%c0_97, %c0_98] : memref<32x128xf32, #tpu.memory_space<vmem>>, vector<32x128xf32>
    tpu.vector_store %arg7[%c0_97, %c0_98], %217 {strides = array<i32>} : memref<32x128xf32, #tpu.memory_space<vmem>>, vector<32x128xf32>,
    %c2336 = arith.constant 2336 : index
    %c0_99 = arith.constant 0 : index
    %219 = vector.load %arg6[%c2336, %c0_99] : memref<2408x128xf32, #tpu.memory_space<vmem>>, vector<32x128xf32>
    %cst_100 = arith.constant 0.000000e+00 : f32
    %220 = vector.broadcast %cst_100 : f32 to vector<32x128xf32>
    %cst_101 = arith.constant 0.000000e+00 : f32
    %221 = vector.broadcast %cst_101 : f32 to vector<32x128xf32>
    %cst_102 = arith.constant 0.000000e+00 : f32
    %222 = vector.broadcast %cst_102 : f32 to vector<32x128xf32>
    %c1312 = arith.constant 1312 : index
    %c0_103 = arith.constant 0 : index
    %223 = vector.load %arg6[%c1312, %c0_103] : memref<2408x128xf32, #tpu.memory_space<vmem>>, vector<32x128xf32>
    %c0_104 = arith.constant 0 : index
    %c0_105 = arith.constant 0 : index
    %224 = vector.load %arg7[%c0_104, %c0_105] : memref<32x128xf32, #tpu.memory_space<vmem>>, vector<1x128xf32>
    %225 = vector.broadcast %224 : vector<1x128xf32> to vector<32x128xf32>
    %226 = arith.mulf %225, %223 : vector<32x128xf32>
    %227 = arith.addf %219, %226 : vector<32x128xf32>
    %c1344 = arith.constant 1344 : index
    %c0_106 = arith.constant 0 : index
    %228 = vector.load %arg6[%c1344, %c0_106] : memref<2408x128xf32, #tpu.memory_space<vmem>>, vector<32x128xf32>
    %c1_107 = arith.constant 1 : index
    %c0_108 = arith.constant 0 : index
    %229 = vector.load %arg7[%c1_107, %c0_108] : memref<32x128xf32, #tpu.memory_space<vmem>>, vector<1x128xf32>
    %230 = vector.broadcast %229 : vector<1x128xf32> to vector<32x128xf32>
    %231 = arith.mulf %230, %228 : vector<32x128xf32>
    %232 = arith.addf %220, %231 : vector<32x128xf32>
    %c1376 = arith.constant 1376 : index
    %c0_109 = arith.constant 0 : index
    %233 = vector.load %arg6[%c1376, %c0_109] : memref<2408x128xf32, #tpu.memory_space<vmem>>, vector<32x128xf32>
    %c2_110 = arith.constant 2 : index
    %c0_111 = arith.constant 0 : index
    %234 = vector.load %arg7[%c2_110, %c0_111] : memref<32x128xf32, #tpu.memory_space<vmem>>, vector<1x128xf32>
    %235 = vector.broadcast %234 : vector<1x128xf32> to vector<32x128xf32>
    %236 = arith.mulf %235, %233 : vector<32x128xf32>
    %237 = arith.addf %221, %236 : vector<32x128xf32>
    %c1408 = arith.constant 1408 : index
    %c0_112 = arith.constant 0 : index
    %238 = vector.load %arg6[%c1408, %c0_112] : memref<2408x128xf32, #tpu.memory_space<vmem>>, vector<32x128xf32>
    %c3_113 = arith.constant 3 : index
    %c0_114 = arith.constant 0 : index
    %239 = vector.load %arg7[%c3_113, %c0_114] : memref<32x128xf32, #tpu.memory_space<vmem>>, vector<1x128xf32>
    %240 = vector.broadcast %239 : vector<1x128xf32> to vector<32x128xf32>
    %241 = arith.mulf %240, %238 : vector<32x128xf32>
    %242 = arith.addf %222, %241 : vector<32x128xf32>
    %c1440 = arith.constant 1440 : index
    %c0_115 = arith.constant 0 : index
    %243 = vector.load %arg6[%c1440, %c0_115] : memref<2408x128xf32, #tpu.memory_space<vmem>>, vector<32x128xf32>
    %c4_116 = arith.constant 4 : index
    %c0_117 = arith.constant 0 : index
    %244 = vector.load %arg7[%c4_116, %c0_117] : memref<32x128xf32, #tpu.memory_space<vmem>>, vector<1x128xf32>
    %245 = vector.broadcast %244 : vector<1x128xf32> to vector<32x128xf32>
    %246 = arith.mulf %245, %243 : vector<32x128xf32>
    %247 = arith.addf %227, %246 : vector<32x128xf32>
    %c1472 = arith.constant 1472 : index
    %c0_118 = arith.constant 0 : index
    %248 = vector.load %arg6[%c1472, %c0_118] : memref<2408x128xf32, #tpu.memory_space<vmem>>, vector<32x128xf32>
    %c5_119 = arith.constant 5 : index
    %c0_120 = arith.constant 0 : index
    %249 = vector.load %arg7[%c5_119, %c0_120] : memref<32x128xf32, #tpu.memory_space<vmem>>, vector<1x128xf32>
    %250 = vector.broadcast %249 : vector<1x128xf32> to vector<32x128xf32>
    %251 = arith.mulf %250, %248 : vector<32x128xf32>
    %252 = arith.addf %232, %251 : vector<32x128xf32>
    %c1504 = arith.constant 1504 : index
    %c0_121 = arith.constant 0 : index
    %253 = vector.load %arg6[%c1504, %c0_121] : memref<2408x128xf32, #tpu.memory_space<vmem>>, vector<32x128xf32>
    %c6_122 = arith.constant 6 : index
    %c0_123 = arith.constant 0 : index
    %254 = vector.load %arg7[%c6_122, %c0_123] : memref<32x128xf32, #tpu.memory_space<vmem>>, vector<1x128xf32>
    %255 = vector.broadcast %254 : vector<1x128xf32> to vector<32x128xf32>
    %256 = arith.mulf %255, %253 : vector<32x128xf32>
    %257 = arith.addf %237, %256 : vector<32x128xf32>
    %c1536 = arith.constant 1536 : index
    %c0_124 = arith.constant 0 : index
    %258 = vector.load %arg6[%c1536, %c0_124] : memref<2408x128xf32, #tpu.memory_space<vmem>>, vector<32x128xf32>
    %c7_125 = arith.constant 7 : index
    %c0_126 = arith.constant 0 : index
    %259 = vector.load %arg7[%c7_125, %c0_126] : memref<32x128xf32, #tpu.memory_space<vmem>>, vector<1x128xf32>
    %260 = vector.broadcast %259 : vector<1x128xf32> to vector<32x128xf32>
    %261 = arith.mulf %260, %258 : vector<32x128xf32>
    %262 = arith.addf %242, %261 : vector<32x128xf32>
    %c1568 = arith.constant 1568 : index
    %c0_127 = arith.constant 0 : index
    %263 = vector.load %arg6[%c1568, %c0_127] : memref<2408x128xf32, #tpu.memory_space<vmem>>, vector<32x128xf32>
    %c8_128 = arith.constant 8 : index
    %c0_129 = arith.constant 0 : index
    %264 = vector.load %arg7[%c8_128, %c0_129] : memref<32x128xf32, #tpu.memory_space<vmem>>, vector<1x128xf32>
    %265 = vector.broadcast %264 : vector<1x128xf32> to vector<32x128xf32>
    %266 = arith.mulf %265, %263 : vector<32x128xf32>
    %267 = arith.addf %247, %266 : vector<32x128xf32>
    %c1600 = arith.constant 1600 : index
    %c0_130 = arith.constant 0 : index
    %268 = vector.load %arg6[%c1600, %c0_130] : memref<2408x128xf32, #tpu.memory_space<vmem>>, vector<32x128xf32>
    %c9_131 = arith.constant 9 : index
    %c0_132 = arith.constant 0 : index
    %269 = vector.load %arg7[%c9_131, %c0_132] : memref<32x128xf32, #tpu.memory_space<vmem>>, vector<1x128xf32>
    %270 = vector.broadcast %269 : vector<1x128xf32> to vector<32x128xf32>
    %271 = arith.mulf %270, %268 : vector<32x128xf32>
    %272 = arith.addf %252, %271 : vector<32x128xf32>
    %c1632 = arith.constant 1632 : index
    %c0_133 = arith.constant 0 : index
    %273 = vector.load %arg6[%c1632, %c0_133] : memref<2408x128xf32, #tpu.memory_space<vmem>>, vector<32x128xf32>
    %c10_134 = arith.constant 10 : index
    %c0_135 = arith.constant 0 : index
    %274 = vector.load %arg7[%c10_134, %c0_135] : memref<32x128xf32, #tpu.memory_space<vmem>>, vector<1x128xf32>
    %275 = vector.broadcast %274 : vector<1x128xf32> to vector<32x128xf32>
    %276 = arith.mulf %275, %273 : vector<32x128xf32>
    %277 = arith.addf %257, %276 : vector<32x128xf32>
    %c1664 = arith.constant 1664 : index
    %c0_136 = arith.constant 0 : index
    %278 = vector.load %arg6[%c1664, %c0_136] : memref<2408x128xf32, #tpu.memory_space<vmem>>, vector<32x128xf32>
    %c11_137 = arith.constant 11 : index
    %c0_138 = arith.constant 0 : index
    %279 = vector.load %arg7[%c11_137, %c0_138] : memref<32x128xf32, #tpu.memory_space<vmem>>, vector<1x128xf32>
    %280 = vector.broadcast %279 : vector<1x128xf32> to vector<32x128xf32>
    %281 = arith.mulf %280, %278 : vector<32x128xf32>
    %282 = arith.addf %262, %281 : vector<32x128xf32>
    %c1696 = arith.constant 1696 : index
    %c0_139 = arith.constant 0 : index
    %283 = vector.load %arg6[%c1696, %c0_139] : memref<2408x128xf32, #tpu.memory_space<vmem>>, vector<32x128xf32>
    %c12_140 = arith.constant 12 : index
    %c0_141 = arith.constant 0 : index
    %284 = vector.load %arg7[%c12_140, %c0_141] : memref<32x128xf32, #tpu.memory_space<vmem>>, vector<1x128xf32>
    %285 = vector.broadcast %284 : vector<1x128xf32> to vector<32x128xf32>
    %286 = arith.mulf %285, %283 : vector<32x128xf32>
    %287 = arith.addf %267, %286 : vector<32x128xf32>
    %c1728 = arith.constant 1728 : index
    %c0_142 = arith.constant 0 : index
    %288 = vector.load %arg6[%c1728, %c0_142] : memref<2408x128xf32, #tpu.memory_space<vmem>>, vector<32x128xf32>
    %c13_143 = arith.constant 13 : index
    %c0_144 = arith.constant 0 : index
    %289 = vector.load %arg7[%c13_143, %c0_144] : memref<32x128xf32, #tpu.memory_space<vmem>>, vector<1x128xf32>
    %290 = vector.broadcast %289 : vector<1x128xf32> to vector<32x128xf32>
    %291 = arith.mulf %290, %288 : vector<32x128xf32>
    %292 = arith.addf %272, %291 : vector<32x128xf32>
    %c1760 = arith.constant 1760 : index
    %c0_145 = arith.constant 0 : index
    %293 = vector.load %arg6[%c1760, %c0_145] : memref<2408x128xf32, #tpu.memory_space<vmem>>, vector<32x128xf32>
    %c14_146 = arith.constant 14 : index
    %c0_147 = arith.constant 0 : index
    %294 = vector.load %arg7[%c14_146, %c0_147] : memref<32x128xf32, #tpu.memory_space<vmem>>, vector<1x128xf32>
    %295 = vector.broadcast %294 : vector<1x128xf32> to vector<32x128xf32>
    %296 = arith.mulf %295, %293 : vector<32x128xf32>
    %297 = arith.addf %277, %296 : vector<32x128xf32>
    %c1792 = arith.constant 1792 : index
    %c0_148 = arith.constant 0 : index
    %298 = vector.load %arg6[%c1792, %c0_148] : memref<2408x128xf32, #tpu.memory_space<vmem>>, vector<32x128xf32>
    %c15_149 = arith.constant 15 : index
    %c0_150 = arith.constant 0 : index
    %299 = vector.load %arg7[%c15_149, %c0_150] : memref<32x128xf32, #tpu.memory_space<vmem>>, vector<1x128xf32>
    %300 = vector.broadcast %299 : vector<1x128xf32> to vector<32x128xf32>
    %301 = arith.mulf %300, %298 : vector<32x128xf32>
    %302 = arith.addf %282, %301 : vector<32x128xf32>
    %c1824 = arith.constant 1824 : index
    %c0_151 = arith.constant 0 : index
    %303 = vector.load %arg6[%c1824, %c0_151] : memref<2408x128xf32, #tpu.memory_space<vmem>>, vector<32x128xf32>
    %c16_152 = arith.constant 16 : index
    %c0_153 = arith.constant 0 : index
    %304 = vector.load %arg7[%c16_152, %c0_153] : memref<32x128xf32, #tpu.memory_space<vmem>>, vector<1x128xf32>
    %305 = vector.broadcast %304 : vector<1x128xf32> to vector<32x128xf32>
    %306 = arith.mulf %305, %303 : vector<32x128xf32>
    %307 = arith.addf %287, %306 : vector<32x128xf32>
    %c1856 = arith.constant 1856 : index
    %c0_154 = arith.constant 0 : index
    %308 = vector.load %arg6[%c1856, %c0_154] : memref<2408x128xf32, #tpu.memory_space<vmem>>, vector<32x128xf32>
    %c17_155 = arith.constant 17 : index
    %c0_156 = arith.constant 0 : index
    %309 = vector.load %arg7[%c17_155, %c0_156] : memref<32x128xf32, #tpu.memory_space<vmem>>, vector<1x128xf32>
    %310 = vector.broadcast %309 : vector<1x128xf32> to vector<32x128xf32>
    %311 = arith.mulf %310, %308 : vector<32x128xf32>
    %312 = arith.addf %292, %311 : vector<32x128xf32>
    %c1888 = arith.constant 1888 : index
    %c0_157 = arith.constant 0 : index
    %313 = vector.load %arg6[%c1888, %c0_157] : memref<2408x128xf32, #tpu.memory_space<vmem>>, vector<32x128xf32>
    %c18_158 = arith.constant 18 : index
    %c0_159 = arith.constant 0 : index
    %314 = vector.load %arg7[%c18_158, %c0_159] : memref<32x128xf32, #tpu.memory_space<vmem>>, vector<1x128xf32>
    %315 = vector.broadcast %314 : vector<1x128xf32> to vector<32x128xf32>
    %316 = arith.mulf %315, %313 : vector<32x128xf32>
    %317 = arith.addf %297, %316 : vector<32x128xf32>
    %c1920 = arith.constant 1920 : index
    %c0_160 = arith.constant 0 : index
    %318 = vector.load %arg6[%c1920, %c0_160] : memref<2408x128xf32, #tpu.memory_space<vmem>>, vector<32x128xf32>
    %c19_161 = arith.constant 19 : index
    %c0_162 = arith.constant 0 : index
    %319 = vector.load %arg7[%c19_161, %c0_162] : memref<32x128xf32, #tpu.memory_space<vmem>>, vector<1x128xf32>
    %320 = vector.broadcast %319 : vector<1x128xf32> to vector<32x128xf32>
    %321 = arith.mulf %320, %318 : vector<32x128xf32>
    %322 = arith.addf %302, %321 : vector<32x128xf32>
    %c1952 = arith.constant 1952 : index
    %c0_163 = arith.constant 0 : index
    %323 = vector.load %arg6[%c1952, %c0_163] : memref<2408x128xf32, #tpu.memory_space<vmem>>, vector<32x128xf32>
    %c20_164 = arith.constant 20 : index
    %c0_165 = arith.constant 0 : index
    %324 = vector.load %arg7[%c20_164, %c0_165] : memref<32x128xf32, #tpu.memory_space<vmem>>, vector<1x128xf32>
    %325 = vector.broadcast %324 : vector<1x128xf32> to vector<32x128xf32>
    %326 = arith.mulf %325, %323 : vector<32x128xf32>
    %327 = arith.addf %307, %326 : vector<32x128xf32>
    %c1984 = arith.constant 1984 : index
    %c0_166 = arith.constant 0 : index
    %328 = vector.load %arg6[%c1984, %c0_166] : memref<2408x128xf32, #tpu.memory_space<vmem>>, vector<32x128xf32>
    %c21_167 = arith.constant 21 : index
    %c0_168 = arith.constant 0 : index
    %329 = vector.load %arg7[%c21_167, %c0_168] : memref<32x128xf32, #tpu.memory_space<vmem>>, vector<1x128xf32>
    %330 = vector.broadcast %329 : vector<1x128xf32> to vector<32x128xf32>
    %331 = arith.mulf %330, %328 : vector<32x128xf32>
    %332 = arith.addf %312, %331 : vector<32x128xf32>
    %c2016 = arith.constant 2016 : index
    %c0_169 = arith.constant 0 : index
    %333 = vector.load %arg6[%c2016, %c0_169] : memref<2408x128xf32, #tpu.memory_space<vmem>>, vector<32x128xf32>
    %c22_170 = arith.constant 22 : index
    %c0_171 = arith.constant 0 : index
    %334 = vector.load %arg7[%c22_170, %c0_171] : memref<32x128xf32, #tpu.memory_space<vmem>>, vector<1x128xf32>
    %335 = vector.broadcast %334 : vector<1x128xf32> to vector<32x128xf32>
    %336 = arith.mulf %335, %333 : vector<32x128xf32>
    %337 = arith.addf %317, %336 : vector<32x128xf32>
    %c2048 = arith.constant 2048 : index
    %c0_172 = arith.constant 0 : index
    %338 = vector.load %arg6[%c2048, %c0_172] : memref<2408x128xf32, #tpu.memory_space<vmem>>, vector<32x128xf32>
    %c23_173 = arith.constant 23 : index
    %c0_174 = arith.constant 0 : index
    %339 = vector.load %arg7[%c23_173, %c0_174] : memref<32x128xf32, #tpu.memory_space<vmem>>, vector<1x128xf32>
    %340 = vector.broadcast %339 : vector<1x128xf32> to vector<32x128xf32>
    %341 = arith.mulf %340, %338 : vector<32x128xf32>
    %342 = arith.addf %322, %341 : vector<32x128xf32>
    %c2080 = arith.constant 2080 : index
    %c0_175 = arith.constant 0 : index
    %343 = vector.load %arg6[%c2080, %c0_175] : memref<2408x128xf32, #tpu.memory_space<vmem>>, vector<32x128xf32>
    %c24_176 = arith.constant 24 : index
    %c0_177 = arith.constant 0 : index
    %344 = vector.load %arg7[%c24_176, %c0_177] : memref<32x128xf32, #tpu.memory_space<vmem>>, vector<1x128xf32>
    %345 = vector.broadcast %344 : vector<1x128xf32> to vector<32x128xf32>
    %346 = arith.mulf %345, %343 : vector<32x128xf32>
    %347 = arith.addf %327, %346 : vector<32x128xf32>
    %c2112 = arith.constant 2112 : index
    %c0_178 = arith.constant 0 : index
    %348 = vector.load %arg6[%c2112, %c0_178] : memref<2408x128xf32, #tpu.memory_space<vmem>>, vector<32x128xf32>
    %c25_179 = arith.constant 25 : index
    %c0_180 = arith.constant 0 : index
    %349 = vector.load %arg7[%c25_179, %c0_180] : memref<32x128xf32, #tpu.memory_space<vmem>>, vector<1x128xf32>
    %350 = vector.broadcast %349 : vector<1x128xf32> to vector<32x128xf32>
    %351 = arith.mulf %350, %348 : vector<32x128xf32>
    %352 = arith.addf %332, %351 : vector<32x128xf32>
    %c2144 = arith.constant 2144 : index
    %c0_181 = arith.constant 0 : index
    %353 = vector.load %arg6[%c2144, %c0_181] : memref<2408x128xf32, #tpu.memory_space<vmem>>, vector<32x128xf32>
    %c26_182 = arith.constant 26 : index
    %c0_183 = arith.constant 0 : index
    %354 = vector.load %arg7[%c26_182, %c0_183] : memref<32x128xf32, #tpu.memory_space<vmem>>, vector<1x128xf32>
    %355 = vector.broadcast %354 : vector<1x128xf32> to vector<32x128xf32>
    %356 = arith.mulf %355, %353 : vector<32x128xf32>
    %357 = arith.addf %337, %356 : vector<32x128xf32>
    %c2176 = arith.constant 2176 : index
    %c0_184 = arith.constant 0 : index
    %358 = vector.load %arg6[%c2176, %c0_184] : memref<2408x128xf32, #tpu.memory_space<vmem>>, vector<32x128xf32>
    %c27_185 = arith.constant 27 : index
    %c0_186 = arith.constant 0 : index
    %359 = vector.load %arg7[%c27_185, %c0_186] : memref<32x128xf32, #tpu.memory_space<vmem>>, vector<1x128xf32>
    %360 = vector.broadcast %359 : vector<1x128xf32> to vector<32x128xf32>
    %361 = arith.mulf %360, %358 : vector<32x128xf32>
    %362 = arith.addf %342, %361 : vector<32x128xf32>
    %c2208 = arith.constant 2208 : index
    %c0_187 = arith.constant 0 : index
    %363 = vector.load %arg6[%c2208, %c0_187] : memref<2408x128xf32, #tpu.memory_space<vmem>>, vector<32x128xf32>
    %c28_188 = arith.constant 28 : index
    %c0_189 = arith.constant 0 : index
    %364 = vector.load %arg7[%c28_188, %c0_189] : memref<32x128xf32, #tpu.memory_space<vmem>>, vector<1x128xf32>
    %365 = vector.broadcast %364 : vector<1x128xf32> to vector<32x128xf32>
    %366 = arith.mulf %365, %363 : vector<32x128xf32>
    %367 = arith.addf %347, %366 : vector<32x128xf32>
    %c2240 = arith.constant 2240 : index
    %c0_190 = arith.constant 0 : index
    %368 = vector.load %arg6[%c2240, %c0_190] : memref<2408x128xf32, #tpu.memory_space<vmem>>, vector<32x128xf32>
    %c29_191 = arith.constant 29 : index
    %c0_192 = arith.constant 0 : index
    %369 = vector.load %arg7[%c29_191, %c0_192] : memref<32x128xf32, #tpu.memory_space<vmem>>, vector<1x128xf32>
    %370 = vector.broadcast %369 : vector<1x128xf32> to vector<32x128xf32>
    %371 = arith.mulf %370, %368 : vector<32x128xf32>
    %372 = arith.addf %352, %371 : vector<32x128xf32>
    %c2272 = arith.constant 2272 : index
    %c0_193 = arith.constant 0 : index
    %373 = vector.load %arg6[%c2272, %c0_193] : memref<2408x128xf32, #tpu.memory_space<vmem>>, vector<32x128xf32>
    %c30_194 = arith.constant 30 : index
    %c0_195 = arith.constant 0 : index
    %374 = vector.load %arg7[%c30_194, %c0_195] : memref<32x128xf32, #tpu.memory_space<vmem>>, vector<1x128xf32>
    %375 = vector.broadcast %374 : vector<1x128xf32> to vector<32x128xf32>
    %376 = arith.mulf %375, %373 : vector<32x128xf32>
    %377 = arith.addf %357, %376 : vector<32x128xf32>
    %c2304 = arith.constant 2304 : index
    %c0_196 = arith.constant 0 : index
    %378 = vector.load %arg6[%c2304, %c0_196] : memref<2408x128xf32, #tpu.memory_space<vmem>>, vector<32x128xf32>
    %c31_197 = arith.constant 31 : index
    %c0_198 = arith.constant 0 : index
    %379 = vector.load %arg7[%c31_197, %c0_198] : memref<32x128xf32, #tpu.memory_space<vmem>>, vector<1x128xf32>
    %380 = vector.broadcast %379 : vector<1x128xf32> to vector<32x128xf32>
    %381 = arith.mulf %380, %378 : vector<32x128xf32>
    %382 = arith.addf %362, %381 : vector<32x128xf32>
    %383 = arith.addf %367, %372 : vector<32x128xf32>
    %384 = arith.addf %383, %377 : vector<32x128xf32>
    %385 = arith.addf %384, %382 : vector<32x128xf32>
    %cst_199 = arith.constant 0.000000e+00 : f32
    %386 = vector.broadcast %cst_199 : f32 to vector<32x128xf32>
    %387 = arith.maximumf %385, %386 : vector<32x128xf32>
    %c2368 = arith.constant 2368 : index
    %c0_200 = arith.constant 0 : index
    %388 = vector.load %arg6[%c2368, %c0_200] : memref<2408x128xf32, #tpu.memory_space<vmem>>, vector<32x128xf32>
    %389 = arith.mulf %387, %388 : vector<32x128xf32>
    %cst_201 = arith.constant dense<0.000000e+00> : vector<128xf32>
    %390 = vector.multi_reduction <add>, %389, %cst_201 [0] : vector<32x128xf32> to vector<128xf32>
    %391 = vector.shape_cast %390 : vector<128xf32> to vector<1x128xf32>
    %c2400 = arith.constant 2400 : index
    %c0_202 = arith.constant 0 : index
    %392 = vector.load %arg6[%c2400, %c0_202] : memref<2408x128xf32, #tpu.memory_space<vmem>>, vector<1x128xf32>
    %393 = arith.addf %391, %392 : vector<1x128xf32>
    %c0_203 = arith.constant 0 : index
    %c0_204 = arith.constant 0 : index
    %394 = vector.load %arg5[%c0_203, %c0_204] : memref<1x128xf32, #tpu.memory_space<vmem>>, vector<1x128xf32>
    tpu.vector_store %arg5[%c0_203, %c0_204], %393 {strides = array<i32>} : memref<1x128xf32, #tpu.memory_space<vmem>>, vector<1x128xf32>,
    return
  }
  func.func @transform_0(%arg0: i32) -> (i32, i32) {
    %c0_i32 = arith.constant 0 : i32
    %c0_i32_0 = arith.constant 0 : i32
    return %c0_i32, %arg0 : i32, i32
  }
  func.func @transform_1(%arg0: i32) -> (i32, i32) {
    %c0_i32 = arith.constant 0 : i32
    %c0_i32_0 = arith.constant 0 : i32
    return %c0_i32, %arg0 : i32, i32
  }
  func.func @transform_2(%arg0: i32) -> (i32, i32) {
    %c0_i32 = arith.constant 0 : i32
    %c0_i32_0 = arith.constant 0 : i32
    %c0_i32_1 = arith.constant 0 : i32
    return %c0_i32, %c0_i32_0 : i32, i32
  }
  func.func @transform_3(%arg0: i32) -> (i32, i32) {
    %c0_i32 = arith.constant 0 : i32
    %c0_i32_0 = arith.constant 0 : i32
    %c0_i32_1 = arith.constant 0 : i32
    return %c0_i32, %c0_i32_0 : i32, i32
  }
  func.func @transform_4(%arg0: i32) -> (i32, i32) {
    %c0_i32 = arith.constant 0 : i32
    %c0_i32_0 = arith.constant 0 : i32
    return %c0_i32, %arg0 : i32, i32
  }
}

</mosaic_0001>

<llo_original>
// kernel: tpu_custom_call.1
$region0: #{tpu_custom_call.1}
  #allocation0 [shape = 'u32[]', space=smem, size = 0x4, offset = 0x4, fixed_abs, tag = 'smem constant byte address 0x4 - core index']
  #allocation1 [shape = 'u32[144,128]{1,0:T(1,128)}', space=vmem, size = 0x12000, scoped, tag = 'internal scratch']
  #allocation2 [shape = 'f32[2408,128]{1,0:T(8,128)}', space=vmem, size = 0x12d000, scoped, tag = 'scratch operand']
  #allocation3 [shape = 'f32[32,128]{1,0:T(8,128)}', space=vmem, size = 0x4000, scoped, tag = 'scratch operand']
  %s0 = inlined_call_operand.vmem [shape: bf16[32,256], index: 0, kind: input, shape index: {}]
  %s1 = inlined_call_operand.vmem [shape: f32[40,256], index: 1, kind: input, shape index: {}]
  %s2 = inlined_call_operand.vmem [shape: bf16[200,32], index: 2, kind: input, shape index: {}]
  %s3 = inlined_call_operand.vmem [shape: bf16[2408,200], index: 3, kind: input, shape index: {}]
  %s4 = inlined_call_operand.hbm [shape: f32[1,256], index: 4, kind: output, shape index: {}]
  %s5 = sld [smem:[#allocation0]]
  $region128: #{tpu_custom_call.1} parent=0
    _
  %s7 = ssub.s32 1, %s5
  %s8 = scalar_select 0, %s7, %s5
  $region1: #{tpu_custom_call.1} parent=0
    #allocation4 [shape = 'u8[16384]{0}', space=vmem, size = 0x4000, scoped, tag = 'input window, operand 0']
    #allocation5 [shape = 'u8[40960]{0}', space=vmem, size = 0xa000, scoped, tag = 'input window, operand 1']
    #allocation6 [shape = 'u8[1024]{0}', space=vmem, size = 0x400, scoped, tag = 'output window, operand 0']
    #allocation7 [shape = 's32[2]{0}', space=sflag, size = 0x8, scoped, tag = 'scoped memory for tpu_custom_call.1']
    %9 = vsyncpa [#allocation7], 0
    %s10 = scalar_lea.sflag [#allocation7], 1
    %11 = vsyncpa %s10, 0
    loop: start=0, step=1, limit=4
    $region2: #{tpu_custom_call.1} parent=1 // loop_pre_header
      _
    $region3: #{tpu_custom_call.1} parent=1 // loop_header
      %s13 = sphi 0, %s17
      %p14 = scmp.ge.s32.totalorder %s13, 4
      %s23 = sphi 0, %s25
      %s26 = sphi 0, %s23
      %s27 = sphi 0, %s26
      %s43 = sphi 0, %s27
      %s49 = sphi 0, %s51
      %s52 = sphi 0, %s49
      %s53 = sphi 0, %s52
      %s69 = sphi 0, %s53
      %s73 = sphi 0, %s73
      %s75 = sphi 0, %s73
      %s76 = sphi 0, %s75
      %s90 = sphi 0, %s76
      %s94 = sphi 0, %s94
      %s96 = sphi 0, %s94
      %s97 = sphi 0, %s96
      %s111 = sphi 0, %s97
      %s117 = sphi 0, %s119
      %s120 = sphi 0, %s117
      %s121 = sphi 0, %s120
      %s137 = sphi 0, %s121
    $region4: #{tpu_custom_call.1} parent=1 // loop_header_branch
      %16 = sbr.rel (%p14) target = $region8
    $region5: #{tpu_custom_call.1} parent=1 // loop_body
      %s18 = ssub.s32 %s13, 1
      %s19 = ssub.s32 %s13, 2
      %s20 = sadd.s32 %s13, 1
      %s21 = ssub.s32 %s13, %s20
      %p22 = scmp.eq.s32.totalorder %s21, 0
      %s24 = sadd.s32 %s23, 1
      %s25 = scalar_select %p22, %s23, %s24
      %p28 = pneg %p22
      %p29 = scmp.eq.s32.totalorder %s13, 1
      %p30 = por %p28, %p29
      %p31 = scmp.ne.s32.totalorder %s23, %s26
      %p32 = scmp.eq.s32.totalorder %s13, 0
      %p33 = por %p31, %p32
      %p34 = scmp.ne.s32.totalorder %s23, %s26
      %p35 = scmp.eq.s32.totalorder %s18, 1
      %p36 = por %p34, %p35
      %p37 = scmp.ne.s32.totalorder %s26, %s27
      %p38 = scmp.eq.s32.totalorder %s18, 0
      %p39 = por %p37, %p38
      %p40 = scmp.ne.s32.totalorder %s26, %s27
      %p41 = scmp.eq.s32.totalorder %s19, 1
      %p42 = por %p40, %p41
      %p44 = scmp.ne.s32.totalorder %s27, %s43
      %p45 = scmp.eq.s32.totalorder %s19, 0
      %p46 = por %p44, %p45
      %s47 = ssub.s32 %s13, %s20
      %p48 = scmp.eq.s32.totalorder %s47, 0
      %s50 = sadd.s32 %s49, 1
      %s51 = scalar_select %p48, %s49, %s50
      %p54 = pneg %p48
      %p55 = scmp.eq.s32.totalorder %s13, 1
      %p56 = por %p54, %p55
      %p57 = scmp.ne.s32.totalorder %s49, %s52
      %p58 = scmp.eq.s32.totalorder %s13, 0
      %p59 = por %p57, %p58
      %p60 = scmp.ne.s32.totalorder %s49, %s52
      %p61 = scmp.eq.s32.totalorder %s18, 1
      %p62 = por %p60, %p61
      %p63 = scmp.ne.s32.totalorder %s52, %s53
      %p64 = scmp.eq.s32.totalorder %s18, 0
      %p65 = por %p63, %p64
      %p66 = scmp.ne.s32.totalorder %s52, %s53
      %p67 = scmp.eq.s32.totalorder %s19, 1
      %p68 = por %p66, %p67
      %p70 = scmp.ne.s32.totalorder %s53, %s69
      %p71 = scmp.eq.s32.totalorder %s19, 0
      %p72 = por %p70, %p71
      %s74 = sadd.s32 %s73, 1
      %p77 = scmp.eq.s32.totalorder %s13, 1
      %p78 = scmp.ne.s32.totalorder %s73, %s75
      %p79 = scmp.eq.s32.totalorder %s13, 0
      %p80 = por %p78, %p79
      %p81 = scmp.ne.s32.totalorder %s73, %s75
      %p82 = scmp.eq.s32.totalorder %s18, 1
      %p83 = por %p81, %p82
      %p84 = scmp.ne.s32.totalorder %s75, %s76
      %p85 = scmp.eq.s32.totalorder %s18, 0
      %p86 = por %p84, %p85
      %p87 = scmp.ne.s32.totalorder %s75, %s76
      %p88 = scmp.eq.s32.totalorder %s19, 1
      %p89 = por %p87, %p88
      %p91 = scmp.ne.s32.totalorder %s76, %s90
      %p92 = scmp.eq.s32.totalorder %s19, 0
      %p93 = por %p91, %p92
      %s95 = sadd.s32 %s94, 1
      %p98 = scmp.eq.s32.totalorder %s13, 1
      %p99 = scmp.ne.s32.totalorder %s94, %s96
      %p100 = scmp.eq.s32.totalorder %s13, 0
      %p101 = por %p99, %p100
      %p102 = scmp.ne.s32.totalorder %s94, %s96
      %p103 = scmp.eq.s32.totalorder %s18, 1
      %p104 = por %p102, %p103
      %p105 = scmp.ne.s32.totalorder %s96, %s97
      %p106 = scmp.eq.s32.totalorder %s18, 0
      %p107 = por %p105, %p106
      %p108 = scmp.ne.s32.totalorder %s96, %s97
      %p109 = scmp.eq.s32.totalorder %s19, 1
      %p110 = por %p108, %p109
      %p112 = scmp.ne.s32.totalorder %s97, %s111
      %p113 = scmp.eq.s32.totalorder %s19, 0
      %p114 = por %p112, %p113
      %s115 = ssub.s32 %s13, %s20
      %p116 = scmp.eq.s32.totalorder %s115, 0
      %s118 = sadd.s32 %s117, 1
      %s119 = scalar_select %p116, %s117, %s118
      %p122 = pneg %p116
      %p123 = scmp.eq.s32.totalorder %s13, 1
      %p124 = por %p122, %p123
      %p125 = scmp.ne.s32.totalorder %s117, %s120
      %p126 = scmp.eq.s32.totalorder %s13, 0
      %p127 = por %p125, %p126
      %p128 = scmp.ne.s32.totalorder %s117, %s120
      %p129 = scmp.eq.s32.totalorder %s18, 1
      %p130 = por %p128, %p129
      %p131 = scmp.ne.s32.totalorder %s120, %s121
      %p132 = scmp.eq.s32.totalorder %s18, 0
      %p133 = por %p131, %p132
      %p134 = scmp.ne.s32.totalorder %s120, %s121
      %p135 = scmp.eq.s32.totalorder %s19, 1
      %p136 = por %p134, %p135
      %p138 = scmp.ne.s32.totalorder %s121, %s137
      %p139 = scmp.eq.s32.totalorder %s19, 0
      %p140 = por %p138, %p139
      %p141 = scmp.le.s32.totalorder 1, %s13
      %p142 = scmp.lt.s32.totalorder %s13, 3
      %p143 = pnand %p141, %p142
      %p144 = pneg %p143
      // Predicated region
      $region9: #{tpu_custom_call.1} parent=5 // pred_check
        _
      $region10: #{tpu_custom_call.1} parent=5 // pred_check_branch
        %146 = sbr.rel (%p143) target = $region12
      $region11: #{tpu_custom_call.1} parent=5 // pred_region
        %s147 = ssub.s32 %s13, 1
        // Predicated region
        $region13: #{tpu_custom_call.1} parent=11 // pred_check
          %p148 = pneg %p86
        $region14: #{tpu_custom_call.1} parent=11 // pred_check_branch
          %150 = sbr.rel (%p148) target = $region16
        $region15: #{tpu_custom_call.1} parent=11 // pred_region
          _
        $region16: #{tpu_custom_call.1} parent=11 // pred_fallthru
          _
        // Predicated region
        $region17: #{tpu_custom_call.1} parent=11 // pred_check
          %p151 = pneg %p107
        $region18: #{tpu_custom_call.1} parent=11 // pred_check_branch
          %153 = sbr.rel (%p151) target = $region20
        $region19: #{tpu_custom_call.1} parent=11 // pred_region
          _
        $region20: #{tpu_custom_call.1} parent=11 // pred_fallthru
          _
      $region12: #{tpu_custom_call.1} parent=5 // pred_fallthru
        _
      %p154 = scmp.lt.s32.totalorder %s13, 2
      // Predicated region
      $region21: #{tpu_custom_call.1} parent=5 // pred_check
        %p155 = pneg %p154
      $region22: #{tpu_custom_call.1} parent=5 // pred_check_branch
        %157 = sbr.rel (%p155) target = $region24
      $region23: #{tpu_custom_call.1} parent=5 // pred_region
        // Predicated region
        $region25: #{tpu_custom_call.1} parent=23 // pred_check
          %p158 = pneg %p33
        $region26: #{tpu_custom_call.1} parent=23 // pred_check_branch
          %160 = sbr.rel (%p158) target = $region28
        $region27: #{tpu_custom_call.1} parent=23 // pred_region
          %s161 = sand.u32 %s23, 1
          %s162 = sand.u32 %s23, 1
          %s163 = smul.addr %s162, 16
          %s164 = scalar_lea.vmem [#allocation4], %s163
          %s165 = smul.addr %s13, 4
          %s166 = scalar_lea.vmem %s0, %s165
          // Predicated region
          $region29: #{tpu_custom_call.1} parent=27 // pred_check
            _
          $region30: #{tpu_custom_call.1} parent=27 // pred_check_branch
            %168 = sbr.rel (0) target = $region32
          $region31: #{tpu_custom_call.1} parent=27 // pred_region
            // Predicated region
            $region33: #{tpu_custom_call.1} parent=31 // pred_check
              _
            $region34: #{tpu_custom_call.1} parent=31 // pred_check_branch
              %170 = sbr.rel target = $region36
            $region35: #{tpu_custom_call.1} parent=31 // pred_region
              // Predicated region
              $region48: #{tpu_custom_call.1} parent=35 // pred_check
                _
              $region49: #{tpu_custom_call.1} parent=35 // pred_check_branch
                %191 = sbr.rel (0) target = $region51
              $region50: #{tpu_custom_call.1} parent=35 // pred_region
                loop: start=0, step=1, limit=1
                $region52: #{tpu_custom_call.1} parent=50 // loop_pre_header
                  _
                $region53: #{tpu_custom_call.1} parent=50 // loop_header
                  %s193 = sphi 0, %s197
                  %p194 = scmp.ge.s32.totalorder %s193, 1
                  %s198 = sphi %s166, %s166
                  %s199 = sphi %s164, %s164
                $region54: #{tpu_custom_call.1} parent=50 // loop_header_branch
                  %196 = sbr.rel (%p194) target = $region58
                $region55: #{tpu_custom_call.1} parent=50 // loop_body
                  _
                $region56: #{tpu_custom_call.1} parent=50 // loop_footer
                  %s197 = sadd.s32 1, %s193
                $region57: #{tpu_custom_call.1} parent=50 // loop_footer_branch
                  %192 = sbr.rel target = $region53
                $region58: #{tpu_custom_call.1} parent=50 // loop_exit
                  _
                loop: start=0, step=1, limit=1
                $region59: #{tpu_custom_call.1} parent=50 // loop_pre_header
                  _
                $region60: #{tpu_custom_call.1} parent=50 // loop_header
                  %s202 = sphi 0, %s206
                  %p203 = scmp.ge.s32.totalorder %s202, 1
                  %s207 = sphi %s166, %s166
                  %s208 = sphi %s164, %s164
                $region61: #{tpu_custom_call.1} parent=50 // loop_header_branch
                  %205 = sbr.rel (%p203) target = $region65
                $region62: #{tpu_custom_call.1} parent=50 // loop_body
                  %v209 = vld [vmem:[%s207] sm:$0xf]
                  %210 = vst [vmem:[%s208] sm:$0xf] %v209
                  %v211 = vld [vmem:[%s207 + $0x8] sm:$0xf]
                  %212 = vst [vmem:[%s208 + $0x4] sm:$0xf] %v211
                  %v213 = vld [vmem:[%s207 + $0x10] sm:$0xf]
                  %214 = vst [vmem:[%s208 + $0x8] sm:$0xf] %v213
                  %v215 = vld [vmem:[%s207 + $0x18] sm:$0xf]
                  %216 = vst [vmem:[%s208 + $0xc] sm:$0xf] %v215
                $region63: #{tpu_custom_call.1} parent=50 // loop_footer
                  %s206 = sadd.s32 1, %s202
                $region64: #{tpu_custom_call.1} parent=50 // loop_footer_branch
                  %201 = sbr.rel target = $region60
                $region65: #{tpu_custom_call.1} parent=50 // loop_exit
                  _
              $region51: #{tpu_custom_call.1} parent=35 // pred_fallthru
                _
            $region36: #{tpu_custom_call.1} parent=31 // pred_fallthru
              _
            // Predicated region
            $region37: #{tpu_custom_call.1} parent=31 // pred_check
              _
            $region38: #{tpu_custom_call.1} parent=31 // pred_check_branch
              %172 = sbr.rel (0) target = $region40
            $region39: #{tpu_custom_call.1} parent=31 // pred_region
              loop: start=0, step=1, limit=1
              $region41: #{tpu_custom_call.1} parent=39 // loop_pre_header
                _
              $region42: #{tpu_custom_call.1} parent=39 // loop_header
                %s175 = sphi 0, %s179
                %p176 = scmp.ge.s32.totalorder %s175, 1
                %s180 = sphi %s166, %s166
                %s181 = sphi %s164, %s164
              $region43: #{tpu_custom_call.1} parent=39 // loop_header_branch
                %178 = sbr.rel (%p176) target = $region47
              $region44: #{tpu_custom_call.1} parent=39 // loop_body
                %v182 = vld [vmem:[%s180] sm:$0xf]
                %183 = vst [vmem:[%s181] sm:$0xf] %v182
                %v184 = vld [vmem:[%s180 + $0x8] sm:$0xf]
                %185 = vst [vmem:[%s181 + $0x4] sm:$0xf] %v184
                %v186 = vld [vmem:[%s180 + $0x10] sm:$0xf]
                %187 = vst [vmem:[%s181 + $0x8] sm:$0xf] %v186
                %v188 = vld [vmem:[%s180 + $0x18] sm:$0xf]
                %189 = vst [vmem:[%s181 + $0xc] sm:$0xf] %v188
              $region45: #{tpu_custom_call.1} parent=39 // loop_footer
                %s179 = sadd.s32 1, %s175
              $region46: #{tpu_custom_call.1} parent=39 // loop_footer_branch
                %174 = sbr.rel target = $region42
              $region47: #{tpu_custom_call.1} parent=39 // loop_exit
                _
            $region40: #{tpu_custom_call.1} parent=31 // pred_fallthru
              _
          $region32: #{tpu_custom_call.1} parent=27 // pred_fallthru
            _
          %217 = vnop
        $region28: #{tpu_custom_call.1} parent=23 // pred_fallthru
          _
        // Predicated region
        $region66: #{tpu_custom_call.1} parent=23 // pred_check
          %p218 = pneg %p59
        $region67: #{tpu_custom_call.1} parent=23 // pred_check_branch
          %220 = sbr.rel (%p218) target = $region69
        $region68: #{tpu_custom_call.1} parent=23 // pred_region
          %s221 = sand.u32 %s49, 1
          %s222 = sand.u32 %s49, 1
          %s223 = smul.addr %s222, 40
          %s224 = scalar_lea.vmem [#allocation5], %s223
          %s225 = smul.addr %s13, 8
          %s226 = scalar_lea.vmem %s1, %s225
          // Predicated region
          $region70: #{tpu_custom_call.1} parent=68 // pred_check
            _
          $region71: #{tpu_custom_call.1} parent=68 // pred_check_branch
            %228 = sbr.rel (0) target = $region73
          $region72: #{tpu_custom_call.1} parent=68 // pred_region
            // Predicated region
            $region74: #{tpu_custom_call.1} parent=72 // pred_check
              _
            $region75: #{tpu_custom_call.1} parent=72 // pred_check_branch
              %230 = sbr.rel (0) target = $region77
            $region76: #{tpu_custom_call.1} parent=72 // pred_region
              // Predicated region
              $region89: #{tpu_custom_call.1} parent=76 // pred_check
                _
              $region90: #{tpu_custom_call.1} parent=76 // pred_check_branch
                %253 = sbr.rel (0) target = $region92
              $region91: #{tpu_custom_call.1} parent=76 // pred_region
                loop: start=0, step=1, limit=1
                $region93: #{tpu_custom_call.1} parent=91 // loop_pre_header
                  _
                $region94: #{tpu_custom_call.1} parent=91 // loop_header
                  %s255 = sphi 0, %s259
                  %p256 = scmp.ge.s32.totalorder %s255, 1
                  %s260 = sphi %s226, %s226
                  %s261 = sphi %s224, %s224
                $region95: #{tpu_custom_call.1} parent=91 // loop_header_branch
                  %258 = sbr.rel (%p256) target = $region99
                $region96: #{tpu_custom_call.1} parent=91 // loop_body
                  %v262 = vld [vmem:[%s260] sm:$0xff]
                  %263 = vst [vmem:[%s261] sm:$0xff] %v262
                  %v264 = vld [vmem:[%s260 + $0x10] sm:$0xff]
                  %265 = vst [vmem:[%s261 + $0x8] sm:$0xff] %v264
                  %v266 = vld [vmem:[%s260 + $0x20] sm:$0xff]
                  %267 = vst [vmem:[%s261 + $0x10] sm:$0xff] %v266
                  %v268 = vld [vmem:[%s260 + $0x30] sm:$0xff]
                  %269 = vst [vmem:[%s261 + $0x18] sm:$0xff] %v268
                  %v270 = vld [vmem:[%s260 + $0x40] sm:$0xff]
                  %271 = vst [vmem:[%s261 + $0x20] sm:$0xff] %v270
                $region97: #{tpu_custom_call.1} parent=91 // loop_footer
                  %s259 = sadd.s32 1, %s255
                $region98: #{tpu_custom_call.1} parent=91 // loop_footer_branch
                  %254 = sbr.rel target = $region94
                $region99: #{tpu_custom_call.1} parent=91 // loop_exit
                  _
              $region92: #{tpu_custom_call.1} parent=76 // pred_fallthru
                _
              // Predicated region
              $region100: #{tpu_custom_call.1} parent=76 // pred_check
                _
              $region101: #{tpu_custom_call.1} parent=76 // pred_check_branch
                %273 = sbr.rel target = $region103
              $region102: #{tpu_custom_call.1} parent=76 // pred_region
                _
              $region103: #{tpu_custom_call.1} parent=76 // pred_fallthru
                _
            $region77: #{tpu_custom_call.1} parent=72 // pred_fallthru
              _
            // Predicated region
            $region78: #{tpu_custom_call.1} parent=72 // pred_check
              _
            $region79: #{tpu_custom_call.1} parent=72 // pred_check_branch
              %232 = sbr.rel target = $region81
            $region80: #{tpu_custom_call.1} parent=72 // pred_region
              loop: start=0, step=1, limit=1
              $region82: #{tpu_custom_call.1} parent=80 // loop_pre_header
                _
              $region83: #{tpu_custom_call.1} parent=80 // loop_header
                %s235 = sphi 0, %s239
                %p236 = scmp.ge.s32.totalorder %s235, 1
                %s240 = sphi %s226, %s226
                %s241 = sphi %s224, %s224
              $region84: #{tpu_custom_call.1} parent=80 // loop_header_branch
                %238 = sbr.rel (%p236) target = $region88
              $region85: #{tpu_custom_call.1} parent=80 // loop_body
                %v242 = vld [vmem:[%s240] sm:$0xff]
                %243 = vst [vmem:[%s241] sm:$0xff] %v242
                %v244 = vld [vmem:[%s240 + $0x10] sm:$0xff]
                %245 = vst [vmem:[%s241 + $0x8] sm:$0xff] %v244
                %v246 = vld [vmem:[%s240 + $0x20] sm:$0xff]
                %247 = vst [vmem:[%s241 + $0x10] sm:$0xff] %v246
                %v248 = vld [vmem:[%s240 + $0x30] sm:$0xff]
                %249 = vst [vmem:[%s241 + $0x18] sm:$0xff] %v248
                %v250 = vld [vmem:[%s240 + $0x40] sm:$0xff]
                %251 = vst [vmem:[%s241 + $0x20] sm:$0xff] %v250
              $region86: #{tpu_custom_call.1} parent=80 // loop_footer
                %s239 = sadd.s32 1, %s235
              $region87: #{tpu_custom_call.1} parent=80 // loop_footer_branch
                %234 = sbr.rel target = $region83
              $region88: #{tpu_custom_call.1} parent=80 // loop_exit
                _
            $region81: #{tpu_custom_call.1} parent=72 // pred_fallthru
              _
          $region73: #{tpu_custom_call.1} parent=68 // pred_fallthru
            _
          %274 = vnop
        $region69: #{tpu_custom_call.1} parent=23 // pred_fallthru
          _
      $region24: #{tpu_custom_call.1} parent=5 // pred_fallthru
        _
      %p275 = scmp.le.s32.totalorder 1, %s13
      %p276 = scmp.lt.s32.totalorder %s13, 3
      %p277 = pnand %p275, %p276
      %p278 = pneg %p277
      // Predicated region
      $region104: #{tpu_custom_call.1} parent=5 // pred_check
        _
      $region105: #{tpu_custom_call.1} parent=5 // pred_check_branch
        %280 = sbr.rel (%p277) target = $region107
      $region106: #{tpu_custom_call.1} parent=5 // pred_region
        %s281 = ssub.s32 %s13, 1
        %s282 = sand.u32 %s26, 1
        %s283 = sand.u32 %s26, 1
        %s284 = smul.addr %s283, 16
        %s285 = scalar_lea.vmem [#allocation4], %s284
        // Predicated region
        $region108: #{tpu_custom_call.1} parent=106 // pred_check
          %p286 = pneg %p39
        $region109: #{tpu_custom_call.1} parent=106 // pred_check_branch
          %288 = sbr.rel (%p286) target = $region111
        $region110: #{tpu_custom_call.1} parent=106 // pred_region
          _
        $region111: #{tpu_custom_call.1} parent=106 // pred_fallthru
          _
        %s289 = sand.u32 %s52, 1
        %s290 = sand.u32 %s52, 1
        %s291 = smul.addr %s290, 40
        %s292 = scalar_lea.vmem [#allocation5], %s291
        // Predicated region
        $region112: #{tpu_custom_call.1} parent=106 // pred_check
          %p293 = pneg %p65
        $region113: #{tpu_custom_call.1} parent=106 // pred_check_branch
          %295 = sbr.rel (%p293) target = $region115
        $region114: #{tpu_custom_call.1} parent=106 // pred_region
          _
        $region115: #{tpu_custom_call.1} parent=106 // pred_fallthru
          _
        %s296 = sand.u32 %s26, 1
        %s297 = sand.u32 %s26, 1
        %s298 = smul.addr %s297, 16
        %s299 = scalar_lea.vmem [#allocation4], %s298
        %p300 = pneg %p39
        %p301 = pneg %p36
        %s302 = sand.u32 %s52, 1
        %s303 = sand.u32 %s52, 1
        %s304 = smul.addr %s303, 40
        %s305 = scalar_lea.vmem [#allocation5], %s304
        %p306 = pneg %p65
        %p307 = pneg %p62
        %p308 = pneg %p86
        %p309 = pneg %p83
        %p310 = pneg %p107
        %p311 = pneg %p104
        %p312 = pneg %p133
        %p313 = pneg %p130
        %s314 = sand.u32 %s120, 1
        %s315 = scalar_lea.sflag [#allocation7], %s314
        %s316 = sand.u32 %s120, 1
        %s317 = scalar_lea.vmem [#allocation6], %s316
        %v319 = vld [vmem:[%s2] sm:$0xf]
        %v320 = vld [vmem:[%s2 + $0x4] sm:$0xf]
        %v321 = vld [vmem:[%s2 + $0x8] sm:$0xf]
        %v322 = vld [vmem:[%s2 + $0xc] sm:$0xf]
        %v323 = vld [vmem:[%s2 + $0x10] sm:$0xf]
        %v324 = vld [vmem:[%s2 + $0x14] sm:$0xf]
        %v325 = vld [vmem:[%s2 + $0x18] sm:$0xf]
        %v326 = vld [vmem:[%s2 + $0x1c] sm:$0xf]
        %v327 = vld [vmem:[%s2 + $0x20] sm:$0xf]
        %v328 = vld [vmem:[%s2 + $0x24] sm:$0xf]
        %v329 = vld [vmem:[%s2 + $0x28] sm:$0xf]
        %v330 = vld [vmem:[%s2 + $0x2c] sm:$0xf]
        %v331 = vld [vmem:[%s2 + $0x30] sm:$0xf]
        %v332 = vld [vmem:[%s2 + $0x34] sm:$0xf]
        %v333 = vld [vmem:[%s2 + $0x38] sm:$0xf]
        %v334 = vld [vmem:[%s2 + $0x3c] sm:$0xf]
        %v335 = vld [vmem:[%s2 + $0x40] sm:$0xf]
        %v336 = vld [vmem:[%s2 + $0x44] sm:$0xf]
        %v337 = vld [vmem:[%s2 + $0x48] sm:$0xf]
        %v338 = vld [vmem:[%s2 + $0x4c] sm:$0xf]
        %v339 = vld [vmem:[%s2 + $0x50] sm:$0xf]
        %v340 = vld [vmem:[%s2 + $0x54] sm:$0xf]
        %v341 = vld [vmem:[%s2 + $0x58] sm:$0xf]
        %v342 = vld [vmem:[%s2 + $0x5c] sm:$0xf]
        %v343 = vld [vmem:[%s2 + $0x60] sm:$0xf]
        %v344 = vld [vmem:[%s285] sm:$0xf]
        %v345 = vld [vmem:[%s285 + $0x4] sm:$0xf]
        %v346 = vld [vmem:[%s285 + $0x8] sm:$0xf]
        %v347 = vld [vmem:[%s285 + $0xc] sm:$0xf]
        %v373 = vunpack.c.l.b16 %v319
        %v374 = vunpack.c.l.b16 %v320
        %v375 = vunpack.c.l.b16 %v321
        %v376 = vunpack.c.l.b16 %v322
        %v377 = vunpack.c.l.b16 %v323
        %v378 = vunpack.c.l.b16 %v324
        %v379 = vunpack.c.l.b16 %v325
        %v380 = vunpack.c.l.b16 %v326
        %v381 = vunpack.c.l.b16 %v327
        %v382 = vunpack.c.l.b16 %v328
        %v383 = vunpack.c.l.b16 %v329
        %v384 = vunpack.c.l.b16 %v330
        %v385 = vunpack.c.l.b16 %v331
        %v386 = vunpack.c.l.b16 %v332
        %v387 = vunpack.c.l.b16 %v333
        %v388 = vunpack.c.l.b16 %v334
        %v389 = vunpack.c.l.b16 %v335
        %v390 = vunpack.c.l.b16 %v336
        %v391 = vunpack.c.l.b16 %v337
        %v392 = vunpack.c.l.b16 %v338
        %v393 = vunpack.c.l.b16 %v339
        %v394 = vunpack.c.l.b16 %v340
        %v395 = vunpack.c.l.b16 %v341
        %v396 = vunpack.c.l.b16 %v342
        %v397 = vunpack.c.l.b16 %v343
        %v398 = vpack.c.b16 %v374, %v373
        %v399 = vpack.c.b16 %v376, %v375
        %v400 = vpack.c.b16 %v378, %v377
        %v401 = vpack.c.b16 %v380, %v379
        %v402 = vpack.c.b16 %v382, %v381
        %v403 = vpack.c.b16 %v384, %v383
        %v404 = vpack.c.b16 %v386, %v385
        %v405 = vpack.c.b16 %v388, %v387
        %v406 = vpack.c.b16 %v390, %v389
        %v407 = vpack.c.b16 %v392, %v391
        %v408 = vpack.c.b16 %v394, %v393
        %v409 = vpack.c.b16 %v396, %v395
        %v410 = vpack.c.b16 %v397, %v397
        %v415 = vunpack.c.l.b16 %v344
        %v416 = vunpack.c.l.b16 %v345
        %v417 = vunpack.c.l.b16 %v346
        %v418 = vunpack.c.l.b16 %v347
        %v419 = vpack.c.b16 %v416, %v415
        %v420 = vpack.c.b16 %v418, %v417
        %vm423 = vcmask 261120
        %v425 = vsel %vm423, %v398, 0
        %v428 = vsel %vm423, %v399, 0
        %v431 = vsel %vm423, %v400, 0
        %v434 = vsel %vm423, %v401, 0
        %v437 = vsel %vm423, %v402, 0
        %v440 = vsel %vm423, %v403, 0
        %v443 = vsel %vm423, %v404, 0
        %v446 = vsel %vm423, %v405, 0
        %v449 = vsel %vm423, %v406, 0
        %v452 = vsel %vm423, %v407, 0
        %v455 = vsel %vm423, %v408, 0
        %v458 = vsel %vm423, %v409, 0
        %v461 = vsel %vm423, %v410, 0
        %463 = vmatprep.subr.bf16.mxu0 0
        %464 = vmatpush1.bf16.msra.mxu0 %v419
        %465 = vmatprep.subr.bf16.mxu0 0
        %466 = vmatpush1.bf16.msra.mxu0 %v420
        %467 = vmatprep.subr.bf16.mxu0 0
        %468 = vmatpush1.bf16.msra.mxu0 0
        %469 = vmatprep.subr.bf16.mxu0 0
        %470 = vmatpush1.bf16.msra.mxu0 0
        %471 = vmatprep.subr.bf16.mxu0 0
        %472 = vmatpush1.bf16.msra.mxu0 0
        %473 = vmatprep.subr.bf16.mxu0 0
        %474 = vmatpush1.bf16.msra.mxu0 0
        %475 = vmatprep.subr.bf16.mxu0 0
        %476 = vmatpush1.bf16.msra.mxu0 0
        %477 = vmatprep.subr.bf16.mxu0 0
        %478 = vmatpush1.bf16.msra.mxu0 0
        %479 = vmatprep.subr.bf16.mxu0 0
        %480 = vmatpush1.bf16.msra.mxu0 0
        %481 = vmatprep.subr.bf16.mxu0 0
        %482 = vmatpush1.bf16.msra.mxu0 0
        %483 = vmatprep.subr.bf16.mxu0 0
        %484 = vmatpush1.bf16.msra.mxu0 0
        %485 = vmatprep.subr.bf16.mxu0 0
        %486 = vmatpush1.bf16.msra.mxu0 0
        %487 = vmatprep.subr.bf16.mxu0 0
        %488 = vmatpush1.bf16.msra.mxu0 0
        %489 = vmatprep.subr.bf16.mxu0 0
        %490 = vmatpush1.bf16.msra.mxu0 0
        %491 = vmatprep.subr.bf16.mxu0 0
        %492 = vmatpush1.bf16.msra.mxu0 0
        %493 = vmatprep.subr.bf16.mxu0 0
        %494 = vmatpush1.bf16.msra.mxu0 0
        %495 = vmatprep.mubr.bf16.mxu0 0
        %496 = vmatmul.mubr.bf16.gmra.mrb[0].mxu0 %v425
        %v497 = vpop.f32.mrb[0].mxu0
        %v498 = vadd.f32 0.0, %v497
        %v499 = vpop.f32.mrb[0].mxu0
        %v500 = vpop.f32.mrb[0].mxu0
        %v501 = vadd.f32 0.0, %v500
        %v502 = vpop.f32.mrb[0].mxu0
        %503 = vmatprep.mubr.bf16.mxu0 0
        %504 = vmatmul.mubr.bf16.gmra.mrb[0].mxu0 %v428
        %v505 = vpop.f32.mrb[0].mxu0
        %v506 = vadd.f32 0.0, %v505
        %v507 = vpop.f32.mrb[0].mxu0
        %v508 = vpop.f32.mrb[0].mxu0
        %v509 = vadd.f32 0.0, %v508
        %v510 = vpop.f32.mrb[0].mxu0
        %511 = vmatprep.mubr.bf16.mxu0 0
        %512 = vmatmul.mubr.bf16.gmra.mrb[0].mxu0 %v431
        %v513 = vpop.f32.mrb[0].mxu0
        %v514 = vadd.f32 0.0, %v513
        %v515 = vpop.f32.mrb[0].mxu0
        %v516 = vpop.f32.mrb[0].mxu0
        %v517 = vadd.f32 0.0, %v516
        %v518 = vpop.f32.mrb[0].mxu0
        %519 = vmatprep.mubr.bf16.mxu0 0
        %520 = vmatmul.mubr.bf16.gmra.mrb[0].mxu0 %v434
        %v521 = vpop.f32.mrb[0].mxu0
        %v522 = vadd.f32 0.0, %v521
        %v523 = vpop.f32.mrb[0].mxu0
        %v524 = vpop.f32.mrb[0].mxu0
        %v525 = vadd.f32 0.0, %v524
        %v526 = vpop.f32.mrb[0].mxu0
        %527 = vmatprep.mubr.bf16.mxu0 0
        %528 = vmatmul.mubr.bf16.gmra.mrb[0].mxu0 %v437
        %v529 = vpop.f32.mrb[0].mxu0
        %v530 = vadd.f32 0.0, %v529
        %v531 = vpop.f32.mrb[0].mxu0
        %v532 = vpop.f32.mrb[0].mxu0
        %v533 = vadd.f32 0.0, %v532
        %v534 = vpop.f32.mrb[0].mxu0
        %535 = vmatprep.mubr.bf16.mxu0 0
        %536 = vmatmul.mubr.bf16.gmra.mrb[0].mxu0 %v440
        %v537 = vpop.f32.mrb[0].mxu0
        %v538 = vadd.f32 0.0, %v537
        %v539 = vpop.f32.mrb[0].mxu0
        %v540 = vpop.f32.mrb[0].mxu0
        %v541 = vadd.f32 0.0, %v540
        %v542 = vpop.f32.mrb[0].mxu0
        %543 = vmatprep.mubr.bf16.mxu0 0
        %544 = vmatmul.mubr.bf16.gmra.mrb[0].mxu0 %v443
        %v545 = vpop.f32.mrb[0].mxu0
        %v546 = vadd.f32 0.0, %v545
        %v547 = vpop.f32.mrb[0].mxu0
        %v548 = vpop.f32.mrb[0].mxu0
        %v549 = vadd.f32 0.0, %v548
        %v550 = vpop.f32.mrb[0].mxu0
        %551 = vmatprep.mubr.bf16.mxu0 0
        %552 = vmatmul.mubr.bf16.gmra.mrb[0].mxu0 %v446
        %v553 = vpop.f32.mrb[0].mxu0
        %v554 = vadd.f32 0.0, %v553
        %v555 = vpop.f32.mrb[0].mxu0
        %v556 = vpop.f32.mrb[0].mxu0
        %v557 = vadd.f32 0.0, %v556
        %v558 = vpop.f32.mrb[0].mxu0
        %559 = vmatprep.mubr.bf16.mxu0 0
        %560 = vmatmul.mubr.bf16.gmra.mrb[0].mxu0 %v449
        %v561 = vpop.f32.mrb[0].mxu0
        %v562 = vadd.f32 0.0, %v561
        %v563 = vpop.f32.mrb[0].mxu0
        %v564 = vpop.f32.mrb[0].mxu0
        %v565 = vadd.f32 0.0, %v564
        %v566 = vpop.f32.mrb[0].mxu0
        %567 = vmatprep.mubr.bf16.mxu0 0
        %568 = vmatmul.mubr.bf16.gmra.mrb[0].mxu0 %v452
        %v569 = vpop.f32.mrb[0].mxu0
        %v570 = vadd.f32 0.0, %v569
        %v571 = vpop.f32.mrb[0].mxu0
        %v572 = vpop.f32.mrb[0].mxu0
        %v573 = vadd.f32 0.0, %v572
        %v574 = vpop.f32.mrb[0].mxu0
        %575 = vmatprep.mubr.bf16.mxu0 0
        %576 = vmatmul.mubr.bf16.gmra.mrb[0].mxu0 %v455
        %v577 = vpop.f32.mrb[0].mxu0
        %v578 = vadd.f32 0.0, %v577
        %v579 = vpop.f32.mrb[0].mxu0
        %v580 = vpop.f32.mrb[0].mxu0
        %v581 = vadd.f32 0.0, %v580
        %v582 = vpop.f32.mrb[0].mxu0
        %583 = vmatprep.mubr.bf16.mxu0 0
        %584 = vmatmul.mubr.bf16.gmra.mrb[0].mxu0 %v458
        %v585 = vpop.f32.mrb[0].mxu0
        %v586 = vadd.f32 0.0, %v585
        %v587 = vpop.f32.mrb[0].mxu0
        %v588 = vpop.f32.mrb[0].mxu0
        %v589 = vadd.f32 0.0, %v588
        %v590 = vpop.f32.mrb[0].mxu0
        %591 = vmatprep.mubr.bf16.mxu0 0
        %592 = vmatmul.mubr.bf16.gmra.mrb[0].mxu0 %v461
        %v593 = vpop.f32.mrb[0].mxu0
        %v594 = vadd.f32 0.0, %v593
        %v595 = vpop.f32.mrb[0].mxu0
        %v596 = vpop.f32.mrb[0].mxu0
        %v597 = vpop.f32.mrb[0].mxu0
        %598 = vdwg.mxu0
        %v599 = vmax.f32 %v498, 0.0
        %v600 = vmax.f32 %v501, 0.0
        %v601 = vmax.f32 %v506, 0.0
        %v602 = vmax.f32 %v509, 0.0
        %v603 = vmax.f32 %v514, 0.0
        %v604 = vmax.f32 %v517, 0.0
        %v605 = vmax.f32 %v522, 0.0
        %v606 = vmax.f32 %v525, 0.0
        %v607 = vmax.f32 %v530, 0.0
        %v608 = vmax.f32 %v533, 0.0
        %v609 = vmax.f32 %v538, 0.0
        %v610 = vmax.f32 %v541, 0.0
        %v611 = vmax.f32 %v546, 0.0
        %v612 = vmax.f32 %v549, 0.0
        %v613 = vmax.f32 %v554, 0.0
        %v614 = vmax.f32 %v557, 0.0
        %v615 = vmax.f32 %v562, 0.0
        %v616 = vmax.f32 %v565, 0.0
        %v617 = vmax.f32 %v570, 0.0
        %v618 = vmax.f32 %v573, 0.0
        %v619 = vmax.f32 %v578, 0.0
        %v620 = vmax.f32 %v581, 0.0
        %v621 = vmax.f32 %v586, 0.0
        %v622 = vmax.f32 %v589, 0.0
        %v623 = vmax.f32 %v594, 0.0
        %v624 = vld [vmem:[%s3] sm:$0xff]
        %v625 = vld [vmem:[%s3 + $0x8] sm:$0xff]
        %v626 = vld [vmem:[%s3 + $0x10] sm:$0xff]
        %v627 = vld [vmem:[%s3 + $0x18] sm:$0xff]
        %v628 = vld [vmem:[%s3 + $0x20] sm:$0xff]
        %v629 = vld [vmem:[%s3 + $0x28] sm:$0xff]
        %v630 = vld [vmem:[%s3 + $0x30] sm:$0xff]
        %v631 = vld [vmem:[%s3 + $0x38] sm:$0xff]
        %v632 = vld [vmem:[%s3 + $0x40] sm:$0xff]
        %v633 = vld [vmem:[%s3 + $0x48] sm:$0xff]
        %v634 = vld [vmem:[%s3 + $0x50] sm:$0xff]
        %v635 = vld [vmem:[%s3 + $0x58] sm:$0xff]
        %v636 = vld [vmem:[%s3 + $0x60] sm:$0xff]
        %v637 = vld [vmem:[%s3 + $0x68] sm:$0xff]
        %v638 = vld [vmem:[%s3 + $0x70] sm:$0xff]
        %v639 = vld [vmem:[%s3 + $0x78] sm:$0xff]
        %v640 = vld [vmem:[%s3 + $0x80] sm:$0xff]
        %v641 = vld [vmem:[%s3 + $0x88] sm:$0xff]
        %v642 = vld [vmem:[%s3 + $0x90] sm:$0xff]
        %v643 = vld [vmem:[%s3 + $0x98] sm:$0xff]
        %v644 = vld [vmem:[%s3 + $0xa0] sm:$0xff]
        %v645 = vld [vmem:[%s3 + $0xa8] sm:$0xff]
        %v646 = vld [vmem:[%s3 + $0xb0] sm:$0xff]
        %v647 = vld [vmem:[%s3 + $0xb8] sm:$0xff]
        %v648 = vld [vmem:[%s3 + $0xc0] sm:$0xff]
        %v649 = vld [vmem:[%s3 + $0xc8] sm:$0xff]
        %v650 = vld [vmem:[%s3 + $0xd0] sm:$0xff]
        %v651 = vld [vmem:[%s3 + $0xd8] sm:$0xff]
        %v652 = vld [vmem:[%s3 + $0xe0] sm:$0xff]
        %v653 = vld [vmem:[%s3 + $0xe8] sm:$0xff]
        %v654 = vld [vmem:[%s3 + $0xf0] sm:$0xff]
        %v655 = vld [vmem:[%s3 + $0xf8] sm:$0xff]
        %v656 = vld [vmem:[%s3 + $0x100] sm:$0xff]
        %v657 = vld [vmem:[%s3 + $0x108] sm:$0xff]
        %v658 = vld [vmem:[%s3 + $0x110] sm:$0xff]
        %v659 = vld [vmem:[%s3 + $0x118] sm:$0xff]
        %v660 = vld [vmem:[%s3 + $0x120] sm:$0xff]
        %v661 = vld [vmem:[%s3 + $0x128] sm:$0xff]
        %v662 = vld [vmem:[%s3 + $0x130] sm:$0xff]
        %v663 = vld [vmem:[%s3 + $0x138] sm:$0xff]
        %v664 = vld [vmem:[%s3 + $0x140] sm:$0xff]
        %v665 = vld [vmem:[%s3 + $0x148] sm:$0xff]
        %v666 = vld [vmem:[%s3 + $0x150] sm:$0xff]
        %v667 = vld [vmem:[%s3 + $0x158] sm:$0xff]
        %v668 = vld [vmem:[%s3 + $0x160] sm:$0xff]
        %v669 = vld [vmem:[%s3 + $0x168] sm:$0xff]
        %v670 = vld [vmem:[%s3 + $0x170] sm:$0xff]
        %v671 = vld [vmem:[%s3 + $0x178] sm:$0xff]
        %v672 = vld [vmem:[%s3 + $0x180] sm:$0xff]
        %v673 = vld [vmem:[%s3 + $0x188] sm:$0xff]
        %v674 = vld [vmem:[%s3 + $0x190] sm:$0xff]
        %v675 = vld [vmem:[%s3 + $0x198] sm:$0xff]
        %v676 = vld [vmem:[%s3 + $0x1a0] sm:$0xff]
        %v677 = vld [vmem:[%s3 + $0x1a8] sm:$0xff]
        %v678 = vld [vmem:[%s3 + $0x1b0] sm:$0xff]
        %v679 = vld [vmem:[%s3 + $0x1b8] sm:$0xff]
        %v680 = vld [vmem:[%s3 + $0x1c0] sm:$0xff]
        %v681 = vld [vmem:[%s3 + $0x1c8] sm:$0xff]
        %v682 = vld [vmem:[%s3 + $0x1d0] sm:$0xff]
        %v683 = vld [vmem:[%s3 + $0x1d8] sm:$0xff]
        %v684 = vld [vmem:[%s3 + $0x1e0] sm:$0xff]
        %v685 = vld [vmem:[%s3 + $0x1e8] sm:$0xff]
        %v686 = vld [vmem:[%s3 + $0x1f0] sm:$0xff]
        %v687 = vld [vmem:[%s3 + $0x1f8] sm:$0xff]
        %v688 = vld [vmem:[%s3 + $0x200] sm:$0xff]
        %v689 = vld [vmem:[%s3 + $0x208] sm:$0xff]
        %v690 = vld [vmem:[%s3 + $0x210] sm:$0xff]
        %v691 = vld [vmem:[%s3 + $0x218] sm:$0xff]
        %v692 = vld [vmem:[%s3 + $0x220] sm:$0xff]
        %v693 = vld [vmem:[%s3 + $0x228] sm:$0xff]
        %v694 = vld [vmem:[%s3 + $0x230] sm:$0xff]
        %v695 = vld [vmem:[%s3 + $0x238] sm:$0xff]
        %v696 = vld [vmem:[%s3 + $0x240] sm:$0xff]
        %v697 = vld [vmem:[%s3 + $0x248] sm:$0xff]
        %v698 = vld [vmem:[%s3 + $0x250] sm:$0xff]
        %v699 = vld [vmem:[%s3 + $0x258] sm:$0xff]
        %v700 = vld [vmem:[%s3 + $0x260] sm:$0xff]
        %v701 = vld [vmem:[%s3 + $0x268] sm:$0xff]
        %v702 = vld [vmem:[%s3 + $0x270] sm:$0xff]
        %v703 = vld [vmem:[%s3 + $0x278] sm:$0xff]
        %v704 = vld [vmem:[%s3 + $0x280] sm:$0xff]
        %v705 = vld [vmem:[%s3 + $0x288] sm:$0xff]
        %v706 = vld [vmem:[%s3 + $0x290] sm:$0xff]
        %v707 = vld [vmem:[%s3 + $0x298] sm:$0xff]
        %v708 = vld [vmem:[%s3 + $0x2a0] sm:$0xff]
        %v709 = vld [vmem:[%s3 + $0x2a8] sm:$0xff]
        %v710 = vld [vmem:[%s3 + $0x2b0] sm:$0xff]
        %v711 = vld [vmem:[%s3 + $0x2b8] sm:$0xff]
        %v712 = vld [vmem:[%s3 + $0x2c0] sm:$0xff]
        %v713 = vld [vmem:[%s3 + $0x2c8] sm:$0xff]
        %v714 = vld [vmem:[%s3 + $0x2d0] sm:$0xff]
        %v715 = vld [vmem:[%s3 + $0x2d8] sm:$0xff]
        %v716 = vld [vmem:[%s3 + $0x2e0] sm:$0xff]
        %v717 = vld [vmem:[%s3 + $0x2e8] sm:$0xff]
        %v718 = vld [vmem:[%s3 + $0x2f0] sm:$0xff]
        %v719 = vld [vmem:[%s3 + $0x2f8] sm:$0xff]
        %v720 = vld [vmem:[%s3 + $0x300] sm:$0xff]
        %v721 = vld [vmem:[%s3 + $0x308] sm:$0xff]
        %v722 = vld [vmem:[%s3 + $0x310] sm:$0xff]
        %v723 = vld [vmem:[%s3 + $0x318] sm:$0xff]
        %v724 = vld [vmem:[%s3 + $0x320] sm:$0xff]
        %v725 = vld [vmem:[%s3 + $0x328] sm:$0xff]
        %v726 = vld [vmem:[%s3 + $0x330] sm:$0xff]
        %v727 = vld [vmem:[%s3 + $0x338] sm:$0xff]
        %v728 = vld [vmem:[%s3 + $0x340] sm:$0xff]
        %v729 = vld [vmem:[%s3 + $0x348] sm:$0xff]
        %v730 = vld [vmem:[%s3 + $0x350] sm:$0xff]
        %v731 = vld [vmem:[%s3 + $0x358] sm:$0xff]
        %v732 = vld [vmem:[%s3 + $0x360] sm:$0xff]
        %v733 = vld [vmem:[%s3 + $0x368] sm:$0xff]
        %v734 = vld [vmem:[%s3 + $0x370] sm:$0xff]
        %v735 = vld [vmem:[%s3 + $0x378] sm:$0xff]
        %v736 = vld [vmem:[%s3 + $0x380] sm:$0xff]
        %v737 = vld [vmem:[%s3 + $0x388] sm:$0xff]
        %v738 = vld [vmem:[%s3 + $0x390] sm:$0xff]
        %v739 = vld [vmem:[%s3 + $0x398] sm:$0xff]
        %v740 = vld [vmem:[%s3 + $0x3a0] sm:$0xff]
        %v741 = vld [vmem:[%s3 + $0x3a8] sm:$0xff]
        %v742 = vld [vmem:[%s3 + $0x3b0] sm:$0xff]
        %v743 = vld [vmem:[%s3 + $0x3b8] sm:$0xff]
        %v744 = vld [vmem:[%s3 + $0x3c0] sm:$0xff]
        %v745 = vld [vmem:[%s3 + $0x3c8] sm:$0xff]
        %v746 = vld [vmem:[%s3 + $0x3d0] sm:$0xff]
        %v747 = vld [vmem:[%s3 + $0x3d8] sm:$0xff]
        %v748 = vld [vmem:[%s3 + $0x3e0] sm:$0xff]
        %v749 = vld [vmem:[%s3 + $0x3e8] sm:$0xff]
        %v750 = vld [vmem:[%s3 + $0x3f0] sm:$0xff]
        %v751 = vld [vmem:[%s3 + $0x3f8] sm:$0xff]
        %v752 = vld [vmem:[%s3 + $0x400] sm:$0xff]
        %v753 = vld [vmem:[%s3 + $0x408] sm:$0xff]
        %v754 = vld [vmem:[%s3 + $0x410] sm:$0xff]
        %v755 = vld [vmem:[%s3 + $0x418] sm:$0xff]
        %v756 = vld [vmem:[%s3 + $0x420] sm:$0xff]
        %v757 = vld [vmem:[%s3 + $0x428] sm:$0xff]
        %v758 = vld [vmem:[%s3 + $0x430] sm:$0xff]
        %v759 = vld [vmem:[%s3 + $0x438] sm:$0xff]
        %v760 = vld [vmem:[%s3 + $0x440] sm:$0xff]
        %v761 = vld [vmem:[%s3 + $0x448] sm:$0xff]
        %v762 = vld [vmem:[%s3 + $0x450] sm:$0xff]
        %v763 = vld [vmem:[%s3 + $0x458] sm:$0xff]
        %v764 = vld [vmem:[%s3 + $0x460] sm:$0xff]
        %v765 = vld [vmem:[%s3 + $0x468] sm:$0xff]
        %v766 = vld [vmem:[%s3 + $0x470] sm:$0xff]
        %v767 = vld [vmem:[%s3 + $0x478] sm:$0xff]
        %v768 = vld [vmem:[%s3 + $0x480] sm:$0xff]
        %v769 = vld [vmem:[%s3 + $0x488] sm:$0xff]
        %v770 = vld [vmem:[%s3 + $0x490] sm:$0xff]
        %v771 = vld [vmem:[%s3 + $0x498] sm:$0xff]
        %v772 = vld [vmem:[%s3 + $0x4a0] sm:$0xff]
        %v773 = vld [vmem:[%s3 + $0x4a8] sm:$0xff]
        %v774 = vld [vmem:[%s3 + $0x4b0] sm:$0xff]
        %v775 = vld [vmem:[%s3 + $0x4b8] sm:$0xff]
        %v776 = vld [vmem:[%s3 + $0x4c0] sm:$0xff]
        %v777 = vld [vmem:[%s3 + $0x4c8] sm:$0xff]
        %v778 = vld [vmem:[%s3 + $0x4d0] sm:$0xff]
        %v779 = vld [vmem:[%s3 + $0x4d8] sm:$0xff]
        %v780 = vld [vmem:[%s3 + $0x4e0] sm:$0xff]
        %v781 = vld [vmem:[%s3 + $0x4e8] sm:$0xff]
        %v782 = vld [vmem:[%s3 + $0x4f0] sm:$0xff]
        %v783 = vld [vmem:[%s3 + $0x4f8] sm:$0xff]
        %v784 = vld [vmem:[%s3 + $0x500] sm:$0xff]
        %v785 = vld [vmem:[%s3 + $0x508] sm:$0xff]
        %v786 = vld [vmem:[%s3 + $0x510] sm:$0xff]
        %v787 = vld [vmem:[%s3 + $0x518] sm:$0xff]
        %v788 = vld [vmem:[%s3 + $0x520] sm:$0xff]
        %v789 = vld [vmem:[%s3 + $0x528] sm:$0xff]
        %v790 = vld [vmem:[%s3 + $0x530] sm:$0xff]
        %v791 = vld [vmem:[%s3 + $0x538] sm:$0xff]
        %v792 = vld [vmem:[%s3 + $0x540] sm:$0xff]
        %v793 = vld [vmem:[%s3 + $0x548] sm:$0xff]
        %v794 = vld [vmem:[%s3 + $0x550] sm:$0xff]
        %v795 = vld [vmem:[%s3 + $0x558] sm:$0xff]
        %v796 = vld [vmem:[%s3 + $0x560] sm:$0xff]
        %v797 = vld [vmem:[%s3 + $0x568] sm:$0xff]
        %v798 = vld [vmem:[%s3 + $0x570] sm:$0xff]
        %v799 = vld [vmem:[%s3 + $0x578] sm:$0xff]
        %v800 = vld [vmem:[%s3 + $0x580] sm:$0xff]
        %v801 = vld [vmem:[%s3 + $0x588] sm:$0xff]
        %v802 = vld [vmem:[%s3 + $0x590] sm:$0xff]
        %v803 = vld [vmem:[%s3 + $0x598] sm:$0xff]
        %v804 = vld [vmem:[%s3 + $0x5a0] sm:$0xff]
        %v805 = vld [vmem:[%s3 + $0x5a8] sm:$0xff]
        %v806 = vld [vmem:[%s3 + $0x5b0] sm:$0xff]
        %v807 = vld [vmem:[%s3 + $0x5b8] sm:$0xff]
        %v808 = vld [vmem:[%s3 + $0x5c0] sm:$0xff]
        %v809 = vld [vmem:[%s3 + $0x5c8] sm:$0xff]
        %v810 = vld [vmem:[%s3 + $0x5d0] sm:$0xff]
        %v811 = vld [vmem:[%s3 + $0x5d8] sm:$0xff]
        %v812 = vld [vmem:[%s3 + $0x5e0] sm:$0xff]
        %v813 = vld [vmem:[%s3 + $0x5e8] sm:$0xff]
        %v814 = vld [vmem:[%s3 + $0x5f0] sm:$0xff]
        %v815 = vld [vmem:[%s3 + $0x5f8] sm:$0xff]
        %v816 = vld [vmem:[%s3 + $0x600] sm:$0xff]
        %v817 = vld [vmem:[%s3 + $0x608] sm:$0xff]
        %v818 = vld [vmem:[%s3 + $0x610] sm:$0xff]
        %v819 = vld [vmem:[%s3 + $0x618] sm:$0xff]
        %v820 = vld [vmem:[%s3 + $0x620] sm:$0xff]
        %v821 = vld [vmem:[%s3 + $0x628] sm:$0xff]
        %v822 = vld [vmem:[%s3 + $0x630] sm:$0xff]
        %v823 = vld [vmem:[%s3 + $0x638] sm:$0xff]
        %v824 = vld [vmem:[%s3 + $0x640] sm:$0xff]
        %v825 = vld [vmem:[%s3 + $0x648] sm:$0xff]
        %v826 = vld [vmem:[%s3 + $0x650] sm:$0xff]
        %v827 = vld [vmem:[%s3 + $0x658] sm:$0xff]
        %v828 = vld [vmem:[%s3 + $0x660] sm:$0xff]
        %v829 = vld [vmem:[%s3 + $0x668] sm:$0xff]
        %v830 = vld [vmem:[%s3 + $0x670] sm:$0xff]
        %v831 = vld [vmem:[%s3 + $0x678] sm:$0xff]
        %v832 = vld [vmem:[%s3 + $0x680] sm:$0xff]
        %v833 = vld [vmem:[%s3 + $0x688] sm:$0xff]
        %v834 = vld [vmem:[%s3 + $0x690] sm:$0xff]
        %v835 = vld [vmem:[%s3 + $0x698] sm:$0xff]
        %v836 = vld [vmem:[%s3 + $0x6a0] sm:$0xff]
        %v837 = vld [vmem:[%s3 + $0x6a8] sm:$0xff]
        %v838 = vld [vmem:[%s3 + $0x6b0] sm:$0xff]
        %v839 = vld [vmem:[%s3 + $0x6b8] sm:$0xff]
        %v840 = vld [vmem:[%s3 + $0x6c0] sm:$0xff]
        %v841 = vld [vmem:[%s3 + $0x6c8] sm:$0xff]
        %v842 = vld [vmem:[%s3 + $0x6d0] sm:$0xff]
        %v843 = vld [vmem:[%s3 + $0x6d8] sm:$0xff]
        %v844 = vld [vmem:[%s3 + $0x6e0] sm:$0xff]
        %v845 = vld [vmem:[%s3 + $0x6e8] sm:$0xff]
        %v846 = vld [vmem:[%s3 + $0x6f0] sm:$0xff]
        %v847 = vld [vmem:[%s3 + $0x6f8] sm:$0xff]
        %v848 = vld [vmem:[%s3 + $0x700] sm:$0xff]
        %v849 = vld [vmem:[%s3 + $0x708] sm:$0xff]
        %v850 = vld [vmem:[%s3 + $0x710] sm:$0xff]
        %v851 = vld [vmem:[%s3 + $0x718] sm:$0xff]
        %v852 = vld [vmem:[%s3 + $0x720] sm:$0xff]
        %v853 = vld [vmem:[%s3 + $0x728] sm:$0xff]
        %v854 = vld [vmem:[%s3 + $0x730] sm:$0xff]
        %v855 = vld [vmem:[%s3 + $0x738] sm:$0xff]
        %v856 = vld [vmem:[%s3 + $0x740] sm:$0xff]
        %v857 = vld [vmem:[%s3 + $0x748] sm:$0xff]
        %v858 = vld [vmem:[%s3 + $0x750] sm:$0xff]
        %v859 = vld [vmem:[%s3 + $0x758] sm:$0xff]
        %v860 = vld [vmem:[%s3 + $0x760] sm:$0xff]
        %v861 = vld [vmem:[%s3 + $0x768] sm:$0xff]
        %v862 = vld [vmem:[%s3 + $0x770] sm:$0xff]
        %v863 = vld [vmem:[%s3 + $0x778] sm:$0xff]
        %v864 = vld [vmem:[%s3 + $0x780] sm:$0xff]
        %v865 = vld [vmem:[%s3 + $0x788] sm:$0xff]
        %v866 = vld [vmem:[%s3 + $0x790] sm:$0xff]
        %v867 = vld [vmem:[%s3 + $0x798] sm:$0xff]
        %v868 = vld [vmem:[%s3 + $0x7a0] sm:$0xff]
        %v869 = vld [vmem:[%s3 + $0x7a8] sm:$0xff]
        %v870 = vld [vmem:[%s3 + $0x7b0] sm:$0xff]
        %v871 = vld [vmem:[%s3 + $0x7b8] sm:$0xff]
        %v872 = vld [vmem:[%s3 + $0x7c0] sm:$0xff]
        %v873 = vld [vmem:[%s3 + $0x7c8] sm:$0xff]
        %v874 = vld [vmem:[%s3 + $0x7d0] sm:$0xff]
        %v875 = vld [vmem:[%s3 + $0x7d8] sm:$0xff]
        %v876 = vld [vmem:[%s3 + $0x7e0] sm:$0xff]
        %v877 = vld [vmem:[%s3 + $0x7e8] sm:$0xff]
        %v878 = vld [vmem:[%s3 + $0x7f0] sm:$0xff]
        %v879 = vld [vmem:[%s3 + $0x7f8] sm:$0xff]
        %v880 = vld [vmem:[%s3 + $0x800] sm:$0xff]
        %v881 = vld [vmem:[%s3 + $0x808] sm:$0xff]
        %v882 = vld [vmem:[%s3 + $0x810] sm:$0xff]
        %v883 = vld [vmem:[%s3 + $0x818] sm:$0xff]
        %v884 = vld [vmem:[%s3 + $0x820] sm:$0xff]
        %v885 = vld [vmem:[%s3 + $0x828] sm:$0xff]
        %v886 = vld [vmem:[%s3 + $0x830] sm:$0xff]
        %v887 = vld [vmem:[%s3 + $0x838] sm:$0xff]
        %v888 = vld [vmem:[%s3 + $0x840] sm:$0xff]
        %v889 = vld [vmem:[%s3 + $0x848] sm:$0xff]
        %v890 = vld [vmem:[%s3 + $0x850] sm:$0xff]
        %v891 = vld [vmem:[%s3 + $0x858] sm:$0xff]
        %v892 = vld [vmem:[%s3 + $0x860] sm:$0xff]
        %v893 = vld [vmem:[%s3 + $0x868] sm:$0xff]
        %v894 = vld [vmem:[%s3 + $0x870] sm:$0xff]
        %v895 = vld [vmem:[%s3 + $0x878] sm:$0xff]
        %v896 = vld [vmem:[%s3 + $0x880] sm:$0xff]
        %v897 = vld [vmem:[%s3 + $0x888] sm:$0xff]
        %v898 = vld [vmem:[%s3 + $0x890] sm:$0xff]
        %v899 = vld [vmem:[%s3 + $0x898] sm:$0xff]
        %v900 = vld [vmem:[%s3 + $0x8a0] sm:$0xff]
        %v901 = vld [vmem:[%s3 + $0x8a8] sm:$0xff]
        %v902 = vld [vmem:[%s3 + $0x8b0] sm:$0xff]
        %v903 = vld [vmem:[%s3 + $0x8b8] sm:$0xff]
        %v904 = vld [vmem:[%s3 + $0x8c0] sm:$0xff]
        %v905 = vld [vmem:[%s3 + $0x8c8] sm:$0xff]
        %v906 = vld [vmem:[%s3 + $0x8d0] sm:$0xff]
        %v907 = vld [vmem:[%s3 + $0x8d8] sm:$0xff]
        %v908 = vld [vmem:[%s3 + $0x8e0] sm:$0xff]
        %v909 = vld [vmem:[%s3 + $0x8e8] sm:$0xff]
        %v910 = vld [vmem:[%s3 + $0x8f0] sm:$0xff]
        %v911 = vld [vmem:[%s3 + $0x8f8] sm:$0xff]
        %v912 = vld [vmem:[%s3 + $0x900] sm:$0xff]
        %v913 = vld [vmem:[%s3 + $0x908] sm:$0xff]
        %v914 = vld [vmem:[%s3 + $0x910] sm:$0xff]
        %v915 = vld [vmem:[%s3 + $0x918] sm:$0xff]
        %v916 = vld [vmem:[%s3 + $0x920] sm:$0xff]
        %v917 = vld [vmem:[%s3 + $0x928] sm:$0xff]
        %v918 = vld [vmem:[%s3 + $0x930] sm:$0xff]
        %v919 = vld [vmem:[%s3 + $0x938] sm:$0xff]
        %v920 = vld [vmem:[%s3 + $0x940] sm:$0xff]
        %v921 = vld [vmem:[%s3 + $0x948] sm:$0xff]
        %v922 = vld [vmem:[%s3 + $0x950] sm:$0xff]
        %v923 = vld [vmem:[%s3 + $0x958] sm:$0xff]
        %v924 = vld [vmem:[%s3 + $0x960] sm:$0xff]
        %v925 = vpack.c.bf16 %v600, %v599
        %v926 = vpack.c.bf16 %v602, %v601
        %v927 = vpack.c.bf16 %v604, %v603
        %v928 = vpack.c.bf16 %v606, %v605
        %v929 = vpack.c.bf16 %v608, %v607
        %v930 = vpack.c.bf16 %v610, %v609
        %v931 = vpack.c.bf16 %v612, %v611
        %v932 = vpack.c.bf16 %v614, %v613
        %v933 = vpack.c.bf16 %v616, %v615
        %v934 = vpack.c.bf16 %v618, %v617
        %v935 = vpack.c.bf16 %v620, %v619
        %v936 = vpack.c.bf16 %v622, %v621
        %v937 = vpack.c.bf16 %v623, %v623
        %v1239 = vunpack.c.l.b16 %v624
        %v1240 = vunpack.c.h.b16 %v624
        %v1241 = vunpack.c.l.b16 %v625
        %v1242 = vunpack.c.h.b16 %v625
        %v1243 = vunpack.c.l.b16 %v626
        %v1244 = vunpack.c.h.b16 %v626
        %v1245 = vunpack.c.l.b16 %v627
        %v1246 = vunpack.c.h.b16 %v627
        %v1247 = vunpack.c.l.b16 %v628
        %v1248 = vunpack.c.h.b16 %v628
        %v1249 = vunpack.c.l.b16 %v629
        %v1250 = vunpack.c.h.b16 %v629
        %v1251 = vunpack.c.l.b16 %v630
        %v1252 = vunpack.c.h.b16 %v630
        %v1253 = vunpack.c.l.b16 %v631
        %v1254 = vunpack.c.h.b16 %v631
        %v1255 = vunpack.c.l.b16 %v632
        %v1256 = vunpack.c.h.b16 %v632
        %v1257 = vunpack.c.l.b16 %v633
        %v1258 = vunpack.c.h.b16 %v633
        %v1259 = vunpack.c.l.b16 %v634
        %v1260 = vunpack.c.h.b16 %v634
        %v1261 = vunpack.c.l.b16 %v635
        %v1262 = vunpack.c.h.b16 %v635
        %v1263 = vunpack.c.l.b16 %v636
        %v1264 = vunpack.c.h.b16 %v636
        %v1265 = vunpack.c.l.b16 %v637
        %v1266 = vunpack.c.h.b16 %v637
        %v1267 = vunpack.c.l.b16 %v638
        %v1268 = vunpack.c.h.b16 %v638
        %v1269 = vunpack.c.l.b16 %v639
        %v1270 = vunpack.c.h.b16 %v639
        %v1271 = vunpack.c.l.b16 %v640
        %v1272 = vunpack.c.h.b16 %v640
        %v1273 = vunpack.c.l.b16 %v641
        %v1274 = vunpack.c.h.b16 %v641
        %v1275 = vunpack.c.l.b16 %v642
        %v1276 = vunpack.c.h.b16 %v642
        %v1277 = vunpack.c.l.b16 %v643
        %v1278 = vunpack.c.h.b16 %v643
        %v1279 = vunpack.c.l.b16 %v644
        %v1280 = vunpack.c.h.b16 %v644
        %v1281 = vunpack.c.l.b16 %v645
        %v1282 = vunpack.c.h.b16 %v645
        %v1283 = vunpack.c.l.b16 %v646
        %v1284 = vunpack.c.h.b16 %v646
        %v1285 = vunpack.c.l.b16 %v647
        %v1286 = vunpack.c.h.b16 %v647
        %v1287 = vunpack.c.l.b16 %v648
        %v1288 = vunpack.c.h.b16 %v648
        %v1289 = vunpack.c.l.b16 %v649
        %v1290 = vunpack.c.h.b16 %v649
        %v1291 = vunpack.c.l.b16 %v650
        %v1292 = vunpack.c.h.b16 %v650
        %v1293 = vunpack.c.l.b16 %v651
        %v1294 = vunpack.c.h.b16 %v651
        %v1295 = vunpack.c.l.b16 %v652
        %v1296 = vunpack.c.h.b16 %v652
        %v1297 = vunpack.c.l.b16 %v653
        %v1298 = vunpack.c.h.b16 %v653
        %v1299 = vunpack.c.l.b16 %v654
        %v1300 = vunpack.c.h.b16 %v654
        %v1301 = vunpack.c.l.b16 %v655
        %v1302 = vunpack.c.h.b16 %v655
        %v1303 = vunpack.c.l.b16 %v656
        %v1304 = vunpack.c.h.b16 %v656
        %v1305 = vunpack.c.l.b16 %v657
        %v1306 = vunpack.c.h.b16 %v657
        %v1307 = vunpack.c.l.b16 %v658
        %v1308 = vunpack.c.h.b16 %v658
        %v1309 = vunpack.c.l.b16 %v659
        %v1310 = vunpack.c.h.b16 %v659
        %v1311 = vunpack.c.l.b16 %v660
        %v1312 = vunpack.c.h.b16 %v660
        %v1313 = vunpack.c.l.b16 %v661
        %v1314 = vunpack.c.h.b16 %v661
        %v1315 = vunpack.c.l.b16 %v662
        %v1316 = vunpack.c.h.b16 %v662
        %v1317 = vunpack.c.l.b16 %v663
        %v1318 = vunpack.c.h.b16 %v663
        %v1319 = vunpack.c.l.b16 %v664
        %v1320 = vunpack.c.h.b16 %v664
        %v1321 = vunpack.c.l.b16 %v665
        %v1322 = vunpack.c.h.b16 %v665
        %v1323 = vunpack.c.l.b16 %v666
        %v1324 = vunpack.c.h.b16 %v666
        %v1325 = vunpack.c.l.b16 %v667
        %v1326 = vunpack.c.h.b16 %v667
        %v1327 = vunpack.c.l.b16 %v668
        %v1328 = vunpack.c.h.b16 %v668
        %v1329 = vunpack.c.l.b16 %v669
        %v1330 = vunpack.c.h.b16 %v669
        %v1331 = vunpack.c.l.b16 %v670
        %v1332 = vunpack.c.h.b16 %v670
        %v1333 = vunpack.c.l.b16 %v671
        %v1334 = vunpack.c.h.b16 %v671
        %v1335 = vunpack.c.l.b16 %v672
        %v1336 = vunpack.c.h.b16 %v672
        %v1337 = vunpack.c.l.b16 %v673
        %v1338 = vunpack.c.h.b16 %v673
        %v1339 = vunpack.c.l.b16 %v674
        %v1340 = vunpack.c.h.b16 %v674
        %v1341 = vunpack.c.l.b16 %v675
        %v1342 = vunpack.c.h.b16 %v675
        %v1343 = vunpack.c.l.b16 %v676
        %v1344 = vunpack.c.h.b16 %v676
        %v1345 = vunpack.c.l.b16 %v677
        %v1346 = vunpack.c.h.b16 %v677
        %v1347 = vunpack.c.l.b16 %v678
        %v1348 = vunpack.c.h.b16 %v678
        %v1349 = vunpack.c.l.b16 %v679
        %v1350 = vunpack.c.h.b16 %v679
        %v1351 = vunpack.c.l.b16 %v680
        %v1352 = vunpack.c.h.b16 %v680
        %v1353 = vunpack.c.l.b16 %v681
        %v1354 = vunpack.c.h.b16 %v681
        %v1355 = vunpack.c.l.b16 %v682
        %v1356 = vunpack.c.h.b16 %v682
        %v1357 = vunpack.c.l.b16 %v683
        %v1358 = vunpack.c.h.b16 %v683
        %v1359 = vunpack.c.l.b16 %v684
        %v1360 = vunpack.c.h.b16 %v684
        %v1361 = vunpack.c.l.b16 %v685
        %v1362 = vunpack.c.h.b16 %v685
        %v1363 = vunpack.c.l.b16 %v686
        %v1364 = vunpack.c.h.b16 %v686
        %v1365 = vunpack.c.l.b16 %v687
        %v1366 = vunpack.c.h.b16 %v687
        %v1367 = vunpack.c.l.b16 %v688
        %v1368 = vunpack.c.h.b16 %v688
        %v1369 = vunpack.c.l.b16 %v689
        %v1370 = vunpack.c.h.b16 %v689
        %v1371 = vunpack.c.l.b16 %v690
        %v1372 = vunpack.c.h.b16 %v690
        %v1373 = vunpack.c.l.b16 %v691
        %v1374 = vunpack.c.h.b16 %v691
        %v1375 = vunpack.c.l.b16 %v692
        %v1376 = vunpack.c.h.b16 %v692
        %v1377 = vunpack.c.l.b16 %v693
        %v1378 = vunpack.c.h.b16 %v693
        %v1379 = vunpack.c.l.b16 %v694
        %v1380 = vunpack.c.h.b16 %v694
        %v1381 = vunpack.c.l.b16 %v695
        %v1382 = vunpack.c.h.b16 %v695
        %v1383 = vunpack.c.l.b16 %v696
        %v1384 = vunpack.c.h.b16 %v696
        %v1385 = vunpack.c.l.b16 %v697
        %v1386 = vunpack.c.h.b16 %v697
        %v1387 = vunpack.c.l.b16 %v698
        %v1388 = vunpack.c.h.b16 %v698
        %v1389 = vunpack.c.l.b16 %v699
        %v1390 = vunpack.c.h.b16 %v699
        %v1391 = vunpack.c.l.b16 %v700
        %v1392 = vunpack.c.h.b16 %v700
        %v1393 = vunpack.c.l.b16 %v701
        %v1394 = vunpack.c.h.b16 %v701
        %v1395 = vunpack.c.l.b16 %v702
        %v1396 = vunpack.c.h.b16 %v702
        %v1397 = vunpack.c.l.b16 %v703
        %v1398 = vunpack.c.h.b16 %v703
        %v1399 = vunpack.c.l.b16 %v704
        %v1400 = vunpack.c.h.b16 %v704
        %v1401 = vunpack.c.l.b16 %v705
        %v1402 = vunpack.c.h.b16 %v705
        %v1403 = vunpack.c.l.b16 %v706
        %v1404 = vunpack.c.h.b16 %v706
        %v1405 = vunpack.c.l.b16 %v707
        %v1406 = vunpack.c.h.b16 %v707
        %v1407 = vunpack.c.l.b16 %v708
        %v1408 = vunpack.c.h.b16 %v708
        %v1409 = vunpack.c.l.b16 %v709
        %v1410 = vunpack.c.h.b16 %v709
        %v1411 = vunpack.c.l.b16 %v710
        %v1412 = vunpack.c.h.b16 %v710
        %v1413 = vunpack.c.l.b16 %v711
        %v1414 = vunpack.c.h.b16 %v711
        %v1415 = vunpack.c.l.b16 %v712
        %v1416 = vunpack.c.h.b16 %v712
        %v1417 = vunpack.c.l.b16 %v713
        %v1418 = vunpack.c.h.b16 %v713
        %v1419 = vunpack.c.l.b16 %v714
        %v1420 = vunpack.c.h.b16 %v714
        %v1421 = vunpack.c.l.b16 %v715
        %v1422 = vunpack.c.h.b16 %v715
        %v1423 = vunpack.c.l.b16 %v716
        %v1424 = vunpack.c.h.b16 %v716
        %v1425 = vunpack.c.l.b16 %v717
        %v1426 = vunpack.c.h.b16 %v717
        %v1427 = vunpack.c.l.b16 %v718
        %v1428 = vunpack.c.h.b16 %v718
        %v1429 = vunpack.c.l.b16 %v719
        %v1430 = vunpack.c.h.b16 %v719
        %v1431 = vunpack.c.l.b16 %v720
        %v1432 = vunpack.c.h.b16 %v720
        %v1433 = vunpack.c.l.b16 %v721
        %v1434 = vunpack.c.h.b16 %v721
        %v1435 = vunpack.c.l.b16 %v722
        %v1436 = vunpack.c.h.b16 %v722
        %v1437 = vunpack.c.l.b16 %v723
        %v1438 = vunpack.c.h.b16 %v723
        %v1439 = vunpack.c.l.b16 %v724
        %v1440 = vunpack.c.h.b16 %v724
        %v1441 = vunpack.c.l.b16 %v725
        %v1442 = vunpack.c.h.b16 %v725
        %v1443 = vunpack.c.l.b16 %v726
        %v1444 = vunpack.c.h.b16 %v726
        %v1445 = vunpack.c.l.b16 %v727
        %v1446 = vunpack.c.h.b16 %v727
        %v1447 = vunpack.c.l.b16 %v728
        %v1448 = vunpack.c.h.b16 %v728
        %v1449 = vunpack.c.l.b16 %v729
        %v1450 = vunpack.c.h.b16 %v729
        %v1451 = vunpack.c.l.b16 %v730
        %v1452 = vunpack.c.h.b16 %v730
        %v1453 = vunpack.c.l.b16 %v731
        %v1454 = vunpack.c.h.b16 %v731
        %v1455 = vunpack.c.l.b16 %v732
        %v1456 = vunpack.c.h.b16 %v732
        %v1457 = vunpack.c.l.b16 %v733
        %v1458 = vunpack.c.h.b16 %v733
        %v1459 = vunpack.c.l.b16 %v734
        %v1460 = vunpack.c.h.b16 %v734
        %v1461 = vunpack.c.l.b16 %v735
        %v1462 = vunpack.c.h.b16 %v735
        %v1463 = vunpack.c.l.b16 %v736
        %v1464 = vunpack.c.h.b16 %v736
        %v1465 = vunpack.c.l.b16 %v737
        %v1466 = vunpack.c.h.b16 %v737
        %v1467 = vunpack.c.l.b16 %v738
        %v1468 = vunpack.c.h.b16 %v738
        %v1469 = vunpack.c.l.b16 %v739
        %v1470 = vunpack.c.h.b16 %v739
        %v1471 = vunpack.c.l.b16 %v740
        %v1472 = vunpack.c.h.b16 %v740
        %v1473 = vunpack.c.l.b16 %v741
        %v1474 = vunpack.c.h.b16 %v741
        %v1475 = vunpack.c.l.b16 %v742
        %v1476 = vunpack.c.h.b16 %v742
        %v1477 = vunpack.c.l.b16 %v743
        %v1478 = vunpack.c.h.b16 %v743
        %v1479 = vunpack.c.l.b16 %v744
        %v1480 = vunpack.c.h.b16 %v744
        %v1481 = vunpack.c.l.b16 %v745
        %v1482 = vunpack.c.h.b16 %v745
        %v1483 = vunpack.c.l.b16 %v746
        %v1484 = vunpack.c.h.b16 %v746
        %v1485 = vunpack.c.l.b16 %v747
        %v1486 = vunpack.c.h.b16 %v747
        %v1487 = vunpack.c.l.b16 %v748
        %v1488 = vunpack.c.h.b16 %v748
        %v1489 = vunpack.c.l.b16 %v749
        %v1490 = vunpack.c.h.b16 %v749
        %v1491 = vunpack.c.l.b16 %v750
        %v1492 = vunpack.c.h.b16 %v750
        %v1493 = vunpack.c.l.b16 %v751
        %v1494 = vunpack.c.h.b16 %v751
        %v1495 = vunpack.c.l.b16 %v752
        %v1496 = vunpack.c.h.b16 %v752
        %v1497 = vunpack.c.l.b16 %v753
        %v1498 = vunpack.c.h.b16 %v753
        %v1499 = vunpack.c.l.b16 %v754
        %v1500 = vunpack.c.h.b16 %v754
        %v1501 = vunpack.c.l.b16 %v755
        %v1502 = vunpack.c.h.b16 %v755
        %v1503 = vunpack.c.l.b16 %v756
        %v1504 = vunpack.c.h.b16 %v756
        %v1505 = vunpack.c.l.b16 %v757
        %v1506 = vunpack.c.h.b16 %v757
        %v1507 = vunpack.c.l.b16 %v758
        %v1508 = vunpack.c.h.b16 %v758
        %v1509 = vunpack.c.l.b16 %v759
        %v1510 = vunpack.c.h.b16 %v759
        %v1511 = vunpack.c.l.b16 %v760
        %v1512 = vunpack.c.h.b16 %v760
        %v1513 = vunpack.c.l.b16 %v761
        %v1514 = vunpack.c.h.b16 %v761
        %v1515 = vunpack.c.l.b16 %v762
        %v1516 = vunpack.c.h.b16 %v762
        %v1517 = vunpack.c.l.b16 %v763
        %v1518 = vunpack.c.h.b16 %v763
        %v1519 = vunpack.c.l.b16 %v764
        %v1520 = vunpack.c.h.b16 %v764
        %v1521 = vunpack.c.l.b16 %v765
        %v1522 = vunpack.c.h.b16 %v765
        %v1523 = vunpack.c.l.b16 %v766
        %v1524 = vunpack.c.h.b16 %v766
        %v1525 = vunpack.c.l.b16 %v767
        %v1526 = vunpack.c.h.b16 %v767
        %v1527 = vunpack.c.l.b16 %v768
        %v1528 = vunpack.c.h.b16 %v768
        %v1529 = vunpack.c.l.b16 %v769
        %v1530 = vunpack.c.h.b16 %v769
        %v1531 = vunpack.c.l.b16 %v770
        %v1532 = vunpack.c.h.b16 %v770
        %v1533 = vunpack.c.l.b16 %v771
        %v1534 = vunpack.c.h.b16 %v771
        %v1535 = vunpack.c.l.b16 %v772
        %v1536 = vunpack.c.h.b16 %v772
        %v1537 = vunpack.c.l.b16 %v773
        %v1538 = vunpack.c.h.b16 %v773
        %v1539 = vunpack.c.l.b16 %v774
        %v1540 = vunpack.c.h.b16 %v774
        %v1541 = vunpack.c.l.b16 %v775
        %v1542 = vunpack.c.h.b16 %v775
        %v1543 = vunpack.c.l.b16 %v776
        %v1544 = vunpack.c.h.b16 %v776
        %v1545 = vunpack.c.l.b16 %v777
        %v1546 = vunpack.c.h.b16 %v777
        %v1547 = vunpack.c.l.b16 %v778
        %v1548 = vunpack.c.h.b16 %v778
        %v1549 = vunpack.c.l.b16 %v779
        %v1550 = vunpack.c.h.b16 %v779
        %v1551 = vunpack.c.l.b16 %v780
        %v1552 = vunpack.c.h.b16 %v780
        %v1553 = vunpack.c.l.b16 %v781
        %v1554 = vunpack.c.h.b16 %v781
        %v1555 = vunpack.c.l.b16 %v782
        %v1556 = vunpack.c.h.b16 %v782
        %v1557 = vunpack.c.l.b16 %v783
        %v1558 = vunpack.c.h.b16 %v783
        %v1559 = vunpack.c.l.b16 %v784
        %v1560 = vunpack.c.h.b16 %v784
        %v1561 = vunpack.c.l.b16 %v785
        %v1562 = vunpack.c.h.b16 %v785
        %v1563 = vunpack.c.l.b16 %v786
        %v1564 = vunpack.c.h.b16 %v786
        %v1565 = vunpack.c.l.b16 %v787
        %v1566 = vunpack.c.h.b16 %v787
        %v1567 = vunpack.c.l.b16 %v788
        %v1568 = vunpack.c.h.b16 %v788
        %v1569 = vunpack.c.l.b16 %v789
        %v1570 = vunpack.c.h.b16 %v789
        %v1571 = vunpack.c.l.b16 %v790
        %v1572 = vunpack.c.h.b16 %v790
        %v1573 = vunpack.c.l.b16 %v791
        %v1574 = vunpack.c.h.b16 %v791
        %v1575 = vunpack.c.l.b16 %v792
        %v1576 = vunpack.c.h.b16 %v792
        %v1577 = vunpack.c.l.b16 %v793
        %v1578 = vunpack.c.h.b16 %v793
        %v1579 = vunpack.c.l.b16 %v794
        %v1580 = vunpack.c.h.b16 %v794
        %v1581 = vunpack.c.l.b16 %v795
        %v1582 = vunpack.c.h.b16 %v795
        %v1583 = vunpack.c.l.b16 %v796
        %v1584 = vunpack.c.h.b16 %v796
        %v1585 = vunpack.c.l.b16 %v797
        %v1586 = vunpack.c.h.b16 %v797
        %v1587 = vunpack.c.l.b16 %v798
        %v1588 = vunpack.c.h.b16 %v798
        %v1589 = vunpack.c.l.b16 %v799
        %v1590 = vunpack.c.h.b16 %v799
        %v1591 = vunpack.c.l.b16 %v800
        %v1592 = vunpack.c.h.b16 %v800
        %v1593 = vunpack.c.l.b16 %v801
        %v1594 = vunpack.c.h.b16 %v801
        %v1595 = vunpack.c.l.b16 %v802
        %v1596 = vunpack.c.h.b16 %v802
        %v1597 = vunpack.c.l.b16 %v803
        %v1598 = vunpack.c.h.b16 %v803
        %v1599 = vunpack.c.l.b16 %v804
        %v1600 = vunpack.c.h.b16 %v804
        %v1601 = vunpack.c.l.b16 %v805
        %v1602 = vunpack.c.h.b16 %v805
        %v1603 = vunpack.c.l.b16 %v806
        %v1604 = vunpack.c.h.b16 %v806
        %v1605 = vunpack.c.l.b16 %v807
        %v1606 = vunpack.c.h.b16 %v807
        %v1607 = vunpack.c.l.b16 %v808
        %v1608 = vunpack.c.h.b16 %v808
        %v1609 = vunpack.c.l.b16 %v809
        %v1610 = vunpack.c.h.b16 %v809
        %v1611 = vunpack.c.l.b16 %v810
        %v1612 = vunpack.c.h.b16 %v810
        %v1613 = vunpack.c.l.b16 %v811
        %v1614 = vunpack.c.h.b16 %v811
        %v1615 = vunpack.c.l.b16 %v812
        %v1616 = vunpack.c.h.b16 %v812
        %v1617 = vunpack.c.l.b16 %v813
        %v1618 = vunpack.c.h.b16 %v813
        %v1619 = vunpack.c.l.b16 %v814
        %v1620 = vunpack.c.h.b16 %v814
        %v1621 = vunpack.c.l.b16 %v815
        %v1622 = vunpack.c.h.b16 %v815
        %v1623 = vunpack.c.l.b16 %v816
        %v1624 = vunpack.c.h.b16 %v816
        %v1625 = vunpack.c.l.b16 %v817
        %v1626 = vunpack.c.h.b16 %v817
        %v1627 = vunpack.c.l.b16 %v818
        %v1628 = vunpack.c.h.b16 %v818
        %v1629 = vunpack.c.l.b16 %v819
        %v1630 = vunpack.c.h.b16 %v819
        %v1631 = vunpack.c.l.b16 %v820
        %v1632 = vunpack.c.h.b16 %v820
        %v1633 = vunpack.c.l.b16 %v821
        %v1634 = vunpack.c.h.b16 %v821
        %v1635 = vunpack.c.l.b16 %v822
        %v1636 = vunpack.c.h.b16 %v822
        %v1637 = vunpack.c.l.b16 %v823
        %v1638 = vunpack.c.h.b16 %v823
        %v1639 = vunpack.c.l.b16 %v824
        %v1640 = vunpack.c.h.b16 %v824
        %v1641 = vunpack.c.l.b16 %v825
        %v1642 = vunpack.c.h.b16 %v825
        %v1643 = vunpack.c.l.b16 %v826
        %v1644 = vunpack.c.h.b16 %v826
        %v1645 = vunpack.c.l.b16 %v827
        %v1646 = vunpack.c.h.b16 %v827
        %v1647 = vunpack.c.l.b16 %v828
        %v1648 = vunpack.c.h.b16 %v828
        %v1649 = vunpack.c.l.b16 %v829
        %v1650 = vunpack.c.h.b16 %v829
        %v1651 = vunpack.c.l.b16 %v830
        %v1652 = vunpack.c.h.b16 %v830
        %v1653 = vunpack.c.l.b16 %v831
        %v1654 = vunpack.c.h.b16 %v831
        %v1655 = vunpack.c.l.b16 %v832
        %v1656 = vunpack.c.h.b16 %v832
        %v1657 = vunpack.c.l.b16 %v833
        %v1658 = vunpack.c.h.b16 %v833
        %v1659 = vunpack.c.l.b16 %v834
        %v1660 = vunpack.c.h.b16 %v834
        %v1661 = vunpack.c.l.b16 %v835
        %v1662 = vunpack.c.h.b16 %v835
        %v1663 = vunpack.c.l.b16 %v836
        %v1664 = vunpack.c.h.b16 %v836
        %v1665 = vunpack.c.l.b16 %v837
        %v1666 = vunpack.c.h.b16 %v837
        %v1667 = vunpack.c.l.b16 %v838
        %v1668 = vunpack.c.h.b16 %v838
        %v1669 = vunpack.c.l.b16 %v839
        %v1670 = vunpack.c.h.b16 %v839
        %v1671 = vunpack.c.l.b16 %v840
        %v1672 = vunpack.c.h.b16 %v840
        %v1673 = vunpack.c.l.b16 %v841
        %v1674 = vunpack.c.h.b16 %v841
        %v1675 = vunpack.c.l.b16 %v842
        %v1676 = vunpack.c.h.b16 %v842
        %v1677 = vunpack.c.l.b16 %v843
        %v1678 = vunpack.c.h.b16 %v843
        %v1679 = vunpack.c.l.b16 %v844
        %v1680 = vunpack.c.h.b16 %v844
        %v1681 = vunpack.c.l.b16 %v845
        %v1682 = vunpack.c.h.b16 %v845
        %v1683 = vunpack.c.l.b16 %v846
        %v1684 = vunpack.c.h.b16 %v846
        %v1685 = vunpack.c.l.b16 %v847
        %v1686 = vunpack.c.h.b16 %v847
        %v1687 = vunpack.c.l.b16 %v848
        %v1688 = vunpack.c.h.b16 %v848
        %v1689 = vunpack.c.l.b16 %v849
        %v1690 = vunpack.c.h.b16 %v849
        %v1691 = vunpack.c.l.b16 %v850
        %v1692 = vunpack.c.h.b16 %v850
        %v1693 = vunpack.c.l.b16 %v851
        %v1694 = vunpack.c.h.b16 %v851
        %v1695 = vunpack.c.l.b16 %v852
        %v1696 = vunpack.c.h.b16 %v852
        %v1697 = vunpack.c.l.b16 %v853
        %v1698 = vunpack.c.h.b16 %v853
        %v1699 = vunpack.c.l.b16 %v854
        %v1700 = vunpack.c.h.b16 %v854
        %v1701 = vunpack.c.l.b16 %v855
        %v1702 = vunpack.c.h.b16 %v855
        %v1703 = vunpack.c.l.b16 %v856
        %v1704 = vunpack.c.h.b16 %v856
        %v1705 = vunpack.c.l.b16 %v857
        %v1706 = vunpack.c.h.b16 %v857
        %v1707 = vunpack.c.l.b16 %v858
        %v1708 = vunpack.c.h.b16 %v858
        %v1709 = vunpack.c.l.b16 %v859
        %v1710 = vunpack.c.h.b16 %v859
        %v1711 = vunpack.c.l.b16 %v860
        %v1712 = vunpack.c.h.b16 %v860
        %v1713 = vunpack.c.l.b16 %v861
        %v1714 = vunpack.c.h.b16 %v861
        %v1715 = vunpack.c.l.b16 %v862
        %v1716 = vunpack.c.h.b16 %v862
        %v1717 = vunpack.c.l.b16 %v863
        %v1718 = vunpack.c.h.b16 %v863
        %v1719 = vunpack.c.l.b16 %v864
        %v1720 = vunpack.c.h.b16 %v864
        %v1721 = vunpack.c.l.b16 %v865
        %v1722 = vunpack.c.h.b16 %v865
        %v1723 = vunpack.c.l.b16 %v866
        %v1724 = vunpack.c.h.b16 %v866
        %v1725 = vunpack.c.l.b16 %v867
        %v1726 = vunpack.c.h.b16 %v867
        %v1727 = vunpack.c.l.b16 %v868
        %v1728 = vunpack.c.h.b16 %v868
        %v1729 = vunpack.c.l.b16 %v869
        %v1730 = vunpack.c.h.b16 %v869
        %v1731 = vunpack.c.l.b16 %v870
        %v1732 = vunpack.c.h.b16 %v870
        %v1733 = vunpack.c.l.b16 %v871
        %v1734 = vunpack.c.h.b16 %v871
        %v1735 = vunpack.c.l.b16 %v872
        %v1736 = vunpack.c.h.b16 %v872
        %v1737 = vunpack.c.l.b16 %v873
        %v1738 = vunpack.c.h.b16 %v873
        %v1739 = vunpack.c.l.b16 %v874
        %v1740 = vunpack.c.h.b16 %v874
        %v1741 = vunpack.c.l.b16 %v875
        %v1742 = vunpack.c.h.b16 %v875
        %v1743 = vunpack.c.l.b16 %v876
        %v1744 = vunpack.c.h.b16 %v876
        %v1745 = vunpack.c.l.b16 %v877
        %v1746 = vunpack.c.h.b16 %v877
        %v1747 = vunpack.c.l.b16 %v878
        %v1748 = vunpack.c.h.b16 %v878
        %v1749 = vunpack.c.l.b16 %v879
        %v1750 = vunpack.c.h.b16 %v879
        %v1751 = vunpack.c.l.b16 %v880
        %v1752 = vunpack.c.h.b16 %v880
        %v1753 = vunpack.c.l.b16 %v881
        %v1754 = vunpack.c.h.b16 %v881
        %v1755 = vunpack.c.l.b16 %v882
        %v1756 = vunpack.c.h.b16 %v882
        %v1757 = vunpack.c.l.b16 %v883
        %v1758 = vunpack.c.h.b16 %v883
        %v1759 = vunpack.c.l.b16 %v884
        %v1760 = vunpack.c.h.b16 %v884
        %v1761 = vunpack.c.l.b16 %v885
        %v1762 = vunpack.c.h.b16 %v885
        %v1763 = vunpack.c.l.b16 %v886
        %v1764 = vunpack.c.h.b16 %v886
        %v1765 = vunpack.c.l.b16 %v887
        %v1766 = vunpack.c.h.b16 %v887
        %v1767 = vunpack.c.l.b16 %v888
        %v1768 = vunpack.c.h.b16 %v888
        %v1769 = vunpack.c.l.b16 %v889
        %v1770 = vunpack.c.h.b16 %v889
        %v1771 = vunpack.c.l.b16 %v890
        %v1772 = vunpack.c.h.b16 %v890
        %v1773 = vunpack.c.l.b16 %v891
        %v1774 = vunpack.c.h.b16 %v891
        %v1775 = vunpack.c.l.b16 %v892
        %v1776 = vunpack.c.h.b16 %v892
        %v1777 = vunpack.c.l.b16 %v893
        %v1778 = vunpack.c.h.b16 %v893
        %v1779 = vunpack.c.l.b16 %v894
        %v1780 = vunpack.c.h.b16 %v894
        %v1781 = vunpack.c.l.b16 %v895
        %v1782 = vunpack.c.h.b16 %v895
        %v1783 = vunpack.c.l.b16 %v896
        %v1784 = vunpack.c.h.b16 %v896
        %v1785 = vunpack.c.l.b16 %v897
        %v1786 = vunpack.c.h.b16 %v897
        %v1787 = vunpack.c.l.b16 %v898
        %v1788 = vunpack.c.h.b16 %v898
        %v1789 = vunpack.c.l.b16 %v899
        %v1790 = vunpack.c.h.b16 %v899
        %v1791 = vunpack.c.l.b16 %v900
        %v1792 = vunpack.c.h.b16 %v900
        %v1793 = vunpack.c.l.b16 %v901
        %v1794 = vunpack.c.h.b16 %v901
        %v1795 = vunpack.c.l.b16 %v902
        %v1796 = vunpack.c.h.b16 %v902
        %v1797 = vunpack.c.l.b16 %v903
        %v1798 = vunpack.c.h.b16 %v903
        %v1799 = vunpack.c.l.b16 %v904
        %v1800 = vunpack.c.h.b16 %v904
        %v1801 = vunpack.c.l.b16 %v905
        %v1802 = vunpack.c.h.b16 %v905
        %v1803 = vunpack.c.l.b16 %v906
        %v1804 = vunpack.c.h.b16 %v906
        %v1805 = vunpack.c.l.b16 %v907
        %v1806 = vunpack.c.h.b16 %v907
        %v1807 = vunpack.c.l.b16 %v908
        %v1808 = vunpack.c.h.b16 %v908
        %v1809 = vunpack.c.l.b16 %v909
        %v1810 = vunpack.c.h.b16 %v909
        %v1811 = vunpack.c.l.b16 %v910
        %v1812 = vunpack.c.h.b16 %v910
        %v1813 = vunpack.c.l.b16 %v911
        %v1814 = vunpack.c.h.b16 %v911
        %v1815 = vunpack.c.l.b16 %v912
        %v1816 = vunpack.c.h.b16 %v912
        %v1817 = vunpack.c.l.b16 %v913
        %v1818 = vunpack.c.h.b16 %v913
        %v1819 = vunpack.c.l.b16 %v914
        %v1820 = vunpack.c.h.b16 %v914
        %v1821 = vunpack.c.l.b16 %v915
        %v1822 = vunpack.c.h.b16 %v915
        %v1823 = vunpack.c.l.b16 %v916
        %v1824 = vunpack.c.h.b16 %v916
        %v1825 = vunpack.c.l.b16 %v917
        %v1826 = vunpack.c.h.b16 %v917
        %v1827 = vunpack.c.l.b16 %v918
        %v1828 = vunpack.c.h.b16 %v918
        %v1829 = vunpack.c.l.b16 %v919
        %v1830 = vunpack.c.h.b16 %v919
        %v1831 = vunpack.c.l.b16 %v920
        %v1832 = vunpack.c.h.b16 %v920
        %v1833 = vunpack.c.l.b16 %v921
        %v1834 = vunpack.c.h.b16 %v921
        %v1835 = vunpack.c.l.b16 %v922
        %v1836 = vunpack.c.h.b16 %v922
        %v1837 = vunpack.c.l.b16 %v923
        %v1838 = vunpack.c.h.b16 %v923
        %v1839 = vunpack.c.l.b16 %v924
        %v1840 = vunpack.c.h.b16 %v924
        %v1841 = vpack.c.b16 %v1241, %v1239
        %v1842 = vpack.c.b16 %v1242, %v1240
        %v1843 = vpack.c.b16 %v1245, %v1243
        %v1844 = vpack.c.b16 %v1246, %v1244
        %v1845 = vpack.c.b16 %v1249, %v1247
        %v1846 = vpack.c.b16 %v1250, %v1248
        %v1847 = vpack.c.b16 %v1253, %v1251
        %v1848 = vpack.c.b16 %v1254, %v1252
        %v1849 = vpack.c.b16 %v1257, %v1255
        %v1850 = vpack.c.b16 %v1258, %v1256
        %v1851 = vpack.c.b16 %v1261, %v1259
        %v1852 = vpack.c.b16 %v1262, %v1260
        %v1853 = vpack.c.b16 %v1265, %v1263
        %v1854 = vpack.c.b16 %v1266, %v1264
        %v1855 = vpack.c.b16 %v1269, %v1267
        %v1856 = vpack.c.b16 %v1270, %v1268
        %v1857 = vpack.c.b16 %v1273, %v1271
        %v1858 = vpack.c.b16 %v1274, %v1272
        %v1859 = vpack.c.b16 %v1277, %v1275
        %v1860 = vpack.c.b16 %v1278, %v1276
        %v1861 = vpack.c.b16 %v1281, %v1279
        %v1862 = vpack.c.b16 %v1282, %v1280
        %v1863 = vpack.c.b16 %v1285, %v1283
        %v1864 = vpack.c.b16 %v1286, %v1284
        %v1865 = vpack.c.b16 %v1289, %v1287
        %v1866 = vpack.c.b16 %v1290, %v1288
        %v1867 = vpack.c.b16 %v1293, %v1291
        %v1868 = vpack.c.b16 %v1294, %v1292
        %v1869 = vpack.c.b16 %v1297, %v1295
        %v1870 = vpack.c.b16 %v1298, %v1296
        %v1871 = vpack.c.b16 %v1301, %v1299
        %v1872 = vpack.c.b16 %v1302, %v1300
        %v1873 = vpack.c.b16 %v1305, %v1303
        %v1874 = vpack.c.b16 %v1306, %v1304
        %v1875 = vpack.c.b16 %v1309, %v1307
        %v1876 = vpack.c.b16 %v1310, %v1308
        %v1877 = vpack.c.b16 %v1313, %v1311
        %v1878 = vpack.c.b16 %v1314, %v1312
        %v1879 = vpack.c.b16 %v1317, %v1315
        %v1880 = vpack.c.b16 %v1318, %v1316
        %v1881 = vpack.c.b16 %v1321, %v1319
        %v1882 = vpack.c.b16 %v1322, %v1320
        %v1883 = vpack.c.b16 %v1325, %v1323
        %v1884 = vpack.c.b16 %v1326, %v1324
        %v1885 = vpack.c.b16 %v1329, %v1327
        %v1886 = vpack.c.b16 %v1330, %v1328
        %v1887 = vpack.c.b16 %v1333, %v1331
        %v1888 = vpack.c.b16 %v1334, %v1332
        %v1889 = vpack.c.b16 %v1337, %v1335
        %v1890 = vpack.c.b16 %v1338, %v1336
        %v1891 = vpack.c.b16 %v1341, %v1339
        %v1892 = vpack.c.b16 %v1342, %v1340
        %v1893 = vpack.c.b16 %v1345, %v1343
        %v1894 = vpack.c.b16 %v1346, %v1344
        %v1895 = vpack.c.b16 %v1349, %v1347
        %v1896 = vpack.c.b16 %v1350, %v1348
        %v1897 = vpack.c.b16 %v1353, %v1351
        %v1898 = vpack.c.b16 %v1354, %v1352
        %v1899 = vpack.c.b16 %v1357, %v1355
        %v1900 = vpack.c.b16 %v1358, %v1356
        %v1901 = vpack.c.b16 %v1361, %v1359
        %v1902 = vpack.c.b16 %v1362, %v1360
        %v1903 = vpack.c.b16 %v1365, %v1363
        %v1904 = vpack.c.b16 %v1366, %v1364
        %v1905 = vpack.c.b16 %v1369, %v1367
        %v1906 = vpack.c.b16 %v1370, %v1368
        %v1907 = vpack.c.b16 %v1373, %v1371
        %v1908 = vpack.c.b16 %v1374, %v1372
        %v1909 = vpack.c.b16 %v1377, %v1375
        %v1910 = vpack.c.b16 %v1378, %v1376
        %v1911 = vpack.c.b16 %v1381, %v1379
        %v1912 = vpack.c.b16 %v1382, %v1380
        %v1913 = vpack.c.b16 %v1385, %v1383
        %v1914 = vpack.c.b16 %v1386, %v1384
        %v1915 = vpack.c.b16 %v1389, %v1387
        %v1916 = vpack.c.b16 %v1390, %v1388
        %v1917 = vpack.c.b16 %v1393, %v1391
        %v1918 = vpack.c.b16 %v1394, %v1392
        %v1919 = vpack.c.b16 %v1397, %v1395
        %v1920 = vpack.c.b16 %v1398, %v1396
        %v1921 = vpack.c.b16 %v1401, %v1399
        %v1922 = vpack.c.b16 %v1402, %v1400
        %v1923 = vpack.c.b16 %v1405, %v1403
        %v1924 = vpack.c.b16 %v1406, %v1404
        %v1925 = vpack.c.b16 %v1409, %v1407
        %v1926 = vpack.c.b16 %v1410, %v1408
        %v1927 = vpack.c.b16 %v1413, %v1411
        %v1928 = vpack.c.b16 %v1414, %v1412
        %v1929 = vpack.c.b16 %v1417, %v1415
        %v1930 = vpack.c.b16 %v1418, %v1416
        %v1931 = vpack.c.b16 %v1421, %v1419
        %v1932 = vpack.c.b16 %v1422, %v1420
        %v1933 = vpack.c.b16 %v1425, %v1423
        %v1934 = vpack.c.b16 %v1426, %v1424
        %v1935 = vpack.c.b16 %v1429, %v1427
        %v1936 = vpack.c.b16 %v1430, %v1428
        %v1937 = vpack.c.b16 %v1433, %v1431
        %v1938 = vpack.c.b16 %v1434, %v1432
        %v1939 = vpack.c.b16 %v1437, %v1435
        %v1940 = vpack.c.b16 %v1438, %v1436
        %v1941 = vpack.c.b16 %v1441, %v1439
        %v1942 = vpack.c.b16 %v1442, %v1440
        %v1943 = vpack.c.b16 %v1445, %v1443
        %v1944 = vpack.c.b16 %v1446, %v1444
        %v1945 = vpack.c.b16 %v1449, %v1447
        %v1946 = vpack.c.b16 %v1450, %v1448
        %v1947 = vpack.c.b16 %v1453, %v1451
        %v1948 = vpack.c.b16 %v1454, %v1452
        %v1949 = vpack.c.b16 %v1457, %v1455
        %v1950 = vpack.c.b16 %v1458, %v1456
        %v1951 = vpack.c.b16 %v1461, %v1459
        %v1952 = vpack.c.b16 %v1462, %v1460
        %v1953 = vpack.c.b16 %v1465, %v1463
        %v1954 = vpack.c.b16 %v1466, %v1464
        %v1955 = vpack.c.b16 %v1469, %v1467
        %v1956 = vpack.c.b16 %v1470, %v1468
        %v1957 = vpack.c.b16 %v1473, %v1471
        %v1958 = vpack.c.b16 %v1474, %v1472
        %v1959 = vpack.c.b16 %v1477, %v1475
        %v1960 = vpack.c.b16 %v1478, %v1476
        %v1961 = vpack.c.b16 %v1481, %v1479
        %v1962 = vpack.c.b16 %v1482, %v1480
        %v1963 = vpack.c.b16 %v1485, %v1483
        %v1964 = vpack.c.b16 %v1486, %v1484
        %v1965 = vpack.c.b16 %v1489, %v1487
        %v1966 = vpack.c.b16 %v1490, %v1488
        %v1967 = vpack.c.b16 %v1493, %v1491
        %v1968 = vpack.c.b16 %v1494, %v1492
        %v1969 = vpack.c.b16 %v1497, %v1495
        %v1970 = vpack.c.b16 %v1498, %v1496
        %v1971 = vpack.c.b16 %v1501, %v1499
        %v1972 = vpack.c.b16 %v1502, %v1500
        %v1973 = vpack.c.b16 %v1505, %v1503
        %v1974 = vpack.c.b16 %v1506, %v1504
        %v1975 = vpack.c.b16 %v1509, %v1507
        %v1976 = vpack.c.b16 %v1510, %v1508
        %v1977 = vpack.c.b16 %v1513, %v1511
        %v1978 = vpack.c.b16 %v1514, %v1512
        %v1979 = vpack.c.b16 %v1517, %v1515
        %v1980 = vpack.c.b16 %v1518, %v1516
        %v1981 = vpack.c.b16 %v1521, %v1519
        %v1982 = vpack.c.b16 %v1522, %v1520
        %v1983 = vpack.c.b16 %v1525, %v1523
        %v1984 = vpack.c.b16 %v1526, %v1524
        %v1985 = vpack.c.b16 %v1529, %v1527
        %v1986 = vpack.c.b16 %v1530, %v1528
        %v1987 = vpack.c.b16 %v1533, %v1531
        %v1988 = vpack.c.b16 %v1534, %v1532
        %v1989 = vpack.c.b16 %v1537, %v1535
        %v1990 = vpack.c.b16 %v1538, %v1536
        %v1991 = vpack.c.b16 %v1541, %v1539
        %v1992 = vpack.c.b16 %v1542, %v1540
        %v1993 = vpack.c.b16 %v1545, %v1543
        %v1994 = vpack.c.b16 %v1546, %v1544
        %v1995 = vpack.c.b16 %v1549, %v1547
        %v1996 = vpack.c.b16 %v1550, %v1548
        %v1997 = vpack.c.b16 %v1553, %v1551
        %v1998 = vpack.c.b16 %v1554, %v1552
        %v1999 = vpack.c.b16 %v1557, %v1555
        %v2000 = vpack.c.b16 %v1558, %v1556
        %v2001 = vpack.c.b16 %v1561, %v1559
        %v2002 = vpack.c.b16 %v1562, %v1560
        %v2003 = vpack.c.b16 %v1565, %v1563
        %v2004 = vpack.c.b16 %v1566, %v1564
        %v2005 = vpack.c.b16 %v1569, %v1567
        %v2006 = vpack.c.b16 %v1570, %v1568
        %v2007 = vpack.c.b16 %v1573, %v1571
        %v2008 = vpack.c.b16 %v1574, %v1572
        %v2009 = vpack.c.b16 %v1577, %v1575
        %v2010 = vpack.c.b16 %v1578, %v1576
        %v2011 = vpack.c.b16 %v1581, %v1579
        %v2012 = vpack.c.b16 %v1582, %v1580
        %v2013 = vpack.c.b16 %v1585, %v1583
        %v2014 = vpack.c.b16 %v1586, %v1584
        %v2015 = vpack.c.b16 %v1589, %v1587
        %v2016 = vpack.c.b16 %v1590, %v1588
        %v2017 = vpack.c.b16 %v1593, %v1591
        %v2018 = vpack.c.b16 %v1594, %v1592
        %v2019 = vpack.c.b16 %v1597, %v1595
        %v2020 = vpack.c.b16 %v1598, %v1596
        %v2021 = vpack.c.b16 %v1601, %v1599
        %v2022 = vpack.c.b16 %v1602, %v1600
        %v2023 = vpack.c.b16 %v1605, %v1603
        %v2024 = vpack.c.b16 %v1606, %v1604
        %v2025 = vpack.c.b16 %v1609, %v1607
        %v2026 = vpack.c.b16 %v1610, %v1608
        %v2027 = vpack.c.b16 %v1613, %v1611
        %v2028 = vpack.c.b16 %v1614, %v1612
        %v2029 = vpack.c.b16 %v1617, %v1615
        %v2030 = vpack.c.b16 %v1618, %v1616
        %v2031 = vpack.c.b16 %v1621, %v1619
        %v2032 = vpack.c.b16 %v1622, %v1620
        %v2033 = vpack.c.b16 %v1625, %v1623
        %v2034 = vpack.c.b16 %v1626, %v1624
        %v2035 = vpack.c.b16 %v1629, %v1627
        %v2036 = vpack.c.b16 %v1630, %v1628
        %v2037 = vpack.c.b16 %v1633, %v1631
        %v2038 = vpack.c.b16 %v1634, %v1632
        %v2039 = vpack.c.b16 %v1637, %v1635
        %v2040 = vpack.c.b16 %v1638, %v1636
        %v2041 = vpack.c.b16 %v1641, %v1639
        %v2042 = vpack.c.b16 %v1642, %v1640
        %v2043 = vpack.c.b16 %v1645, %v1643
        %v2044 = vpack.c.b16 %v1646, %v1644
        %v2045 = vpack.c.b16 %v1649, %v1647
        %v2046 = vpack.c.b16 %v1650, %v1648
        %v2047 = vpack.c.b16 %v1653, %v1651
        %v2048 = vpack.c.b16 %v1654, %v1652
        %v2049 = vpack.c.b16 %v1657, %v1655
        %v2050 = vpack.c.b16 %v1658, %v1656
        %v2051 = vpack.c.b16 %v1661, %v1659
        %v2052 = vpack.c.b16 %v1662, %v1660
        %v2053 = vpack.c.b16 %v1665, %v1663
        %v2054 = vpack.c.b16 %v1666, %v1664
        %v2055 = vpack.c.b16 %v1669, %v1667
        %v2056 = vpack.c.b16 %v1670, %v1668
        %v2057 = vpack.c.b16 %v1673, %v1671
        %v2058 = vpack.c.b16 %v1674, %v1672
        %v2059 = vpack.c.b16 %v1677, %v1675
        %v2060 = vpack.c.b16 %v1678, %v1676
        %v2061 = vpack.c.b16 %v1681, %v1679
        %v2062 = vpack.c.b16 %v1682, %v1680
        %v2063 = vpack.c.b16 %v1685, %v1683
        %v2064 = vpack.c.b16 %v1686, %v1684
        %v2065 = vpack.c.b16 %v1689, %v1687
        %v2066 = vpack.c.b16 %v1690, %v1688
        %v2067 = vpack.c.b16 %v1693, %v1691
        %v2068 = vpack.c.b16 %v1694, %v1692
        %v2069 = vpack.c.b16 %v1697, %v1695
        %v2070 = vpack.c.b16 %v1698, %v1696
        %v2071 = vpack.c.b16 %v1701, %v1699
        %v2072 = vpack.c.b16 %v1702, %v1700
        %v2073 = vpack.c.b16 %v1705, %v1703
        %v2074 = vpack.c.b16 %v1706, %v1704
        %v2075 = vpack.c.b16 %v1709, %v1707
        %v2076 = vpack.c.b16 %v1710, %v1708
        %v2077 = vpack.c.b16 %v1713, %v1711
        %v2078 = vpack.c.b16 %v1714, %v1712
        %v2079 = vpack.c.b16 %v1717, %v1715
        %v2080 = vpack.c.b16 %v1718, %v1716
        %v2081 = vpack.c.b16 %v1721, %v1719
        %v2082 = vpack.c.b16 %v1722, %v1720
        %v2083 = vpack.c.b16 %v1725, %v1723
        %v2084 = vpack.c.b16 %v1726, %v1724
        %v2085 = vpack.c.b16 %v1729, %v1727
        %v2086 = vpack.c.b16 %v1730, %v1728
        %v2087 = vpack.c.b16 %v1733, %v1731
        %v2088 = vpack.c.b16 %v1734, %v1732
        %v2089 = vpack.c.b16 %v1737, %v1735
        %v2090 = vpack.c.b16 %v1738, %v1736
        %v2091 = vpack.c.b16 %v1741, %v1739
        %v2092 = vpack.c.b16 %v1742, %v1740
        %v2093 = vpack.c.b16 %v1745, %v1743
        %v2094 = vpack.c.b16 %v1746, %v1744
        %v2095 = vpack.c.b16 %v1749, %v1747
        %v2096 = vpack.c.b16 %v1750, %v1748
        %v2097 = vpack.c.b16 %v1753, %v1751
        %v2098 = vpack.c.b16 %v1754, %v1752
        %v2099 = vpack.c.b16 %v1757, %v1755
        %v2100 = vpack.c.b16 %v1758, %v1756
        %v2101 = vpack.c.b16 %v1761, %v1759
        %v2102 = vpack.c.b16 %v1762, %v1760
        %v2103 = vpack.c.b16 %v1765, %v1763
        %v2104 = vpack.c.b16 %v1766, %v1764
        %v2105 = vpack.c.b16 %v1769, %v1767
        %v2106 = vpack.c.b16 %v1770, %v1768
        %v2107 = vpack.c.b16 %v1773, %v1771
        %v2108 = vpack.c.b16 %v1774, %v1772
        %v2109 = vpack.c.b16 %v1777, %v1775
        %v2110 = vpack.c.b16 %v1778, %v1776
        %v2111 = vpack.c.b16 %v1781, %v1779
        %v2112 = vpack.c.b16 %v1782, %v1780
        %v2113 = vpack.c.b16 %v1785, %v1783
        %v2114 = vpack.c.b16 %v1786, %v1784
        %v2115 = vpack.c.b16 %v1789, %v1787
        %v2116 = vpack.c.b16 %v1790, %v1788
        %v2117 = vpack.c.b16 %v1793, %v1791
        %v2118 = vpack.c.b16 %v1794, %v1792
        %v2119 = vpack.c.b16 %v1797, %v1795
        %v2120 = vpack.c.b16 %v1798, %v1796
        %v2121 = vpack.c.b16 %v1801, %v1799
        %v2122 = vpack.c.b16 %v1802, %v1800
        %v2123 = vpack.c.b16 %v1805, %v1803
        %v2124 = vpack.c.b16 %v1806, %v1804
        %v2125 = vpack.c.b16 %v1809, %v1807
        %v2126 = vpack.c.b16 %v1810, %v1808
        %v2127 = vpack.c.b16 %v1813, %v1811
        %v2128 = vpack.c.b16 %v1814, %v1812
        %v2129 = vpack.c.b16 %v1817, %v1815
        %v2130 = vpack.c.b16 %v1818, %v1816
        %v2131 = vpack.c.b16 %v1821, %v1819
        %v2132 = vpack.c.b16 %v1822, %v1820
        %v2133 = vpack.c.b16 %v1825, %v1823
        %v2134 = vpack.c.b16 %v1826, %v1824
        %v2135 = vpack.c.b16 %v1829, %v1827
        %v2136 = vpack.c.b16 %v1830, %v1828
        %v2137 = vpack.c.b16 %v1833, %v1831
        %v2138 = vpack.c.b16 %v1834, %v1832
        %v2139 = vpack.c.b16 %v1837, %v1835
        %v2140 = vpack.c.b16 %v1838, %v1836
        %v2141 = vpack.c.b16 %v1839, %v1839
        %v2142 = vpack.c.b16 %v1840, %v1840
        %vm2294 = vcmask 588800
        %v2296 = vsel %vm2294, %v1842, 0
        %v2299 = vsel %vm2294, %v1844, 0
        %v2302 = vsel %vm2294, %v1846, 0
        %v2305 = vsel %vm2294, %v1848, 0
        %v2308 = vsel %vm2294, %v1850, 0
        %v2311 = vsel %vm2294, %v1852, 0
        %v2314 = vsel %vm2294, %v1854, 0
        %v2317 = vsel %vm2294, %v1856, 0
        %v2320 = vsel %vm2294, %v1858, 0
        %v2323 = vsel %vm2294, %v1860, 0
        %v2326 = vsel %vm2294, %v1862, 0
        %v2329 = vsel %vm2294, %v1864, 0
        %v2332 = vsel %vm2294, %v1866, 0
        %v2335 = vsel %vm2294, %v1868, 0
        %v2338 = vsel %vm2294, %v1870, 0
        %v2341 = vsel %vm2294, %v1872, 0
        %v2344 = vsel %vm2294, %v1874, 0
        %v2347 = vsel %vm2294, %v1876, 0
        %v2350 = vsel %vm2294, %v1878, 0
        %v2353 = vsel %vm2294, %v1880, 0
        %v2356 = vsel %vm2294, %v1882, 0
        %v2359 = vsel %vm2294, %v1884, 0
        %v2362 = vsel %vm2294, %v1886, 0
        %v2365 = vsel %vm2294, %v1888, 0
        %v2368 = vsel %vm2294, %v1890, 0
        %v2371 = vsel %vm2294, %v1892, 0
        %v2374 = vsel %vm2294, %v1894, 0
        %v2377 = vsel %vm2294, %v1896, 0
        %v2380 = vsel %vm2294, %v1898, 0
        %v2383 = vsel %vm2294, %v1900, 0
        %v2386 = vsel %vm2294, %v1902, 0
        %v2389 = vsel %vm2294, %v1904, 0
        %v2392 = vsel %vm2294, %v1906, 0
        %v2395 = vsel %vm2294, %v1908, 0
        %v2398 = vsel %vm2294, %v1910, 0
        %v2401 = vsel %vm2294, %v1912, 0
        %v2404 = vsel %vm2294, %v1914, 0
        %v2407 = vsel %vm2294, %v1916, 0
        %v2410 = vsel %vm2294, %v1918, 0
        %v2413 = vsel %vm2294, %v1920, 0
        %v2416 = vsel %vm2294, %v1922, 0
        %v2419 = vsel %vm2294, %v1924, 0
        %v2422 = vsel %vm2294, %v1926, 0
        %v2425 = vsel %vm2294, %v1928, 0
        %v2428 = vsel %vm2294, %v1930, 0
        %v2431 = vsel %vm2294, %v1932, 0
        %v2434 = vsel %vm2294, %v1934, 0
        %v2437 = vsel %vm2294, %v1936, 0
        %v2440 = vsel %vm2294, %v1938, 0
        %v2443 = vsel %vm2294, %v1940, 0
        %v2446 = vsel %vm2294, %v1942, 0
        %v2449 = vsel %vm2294, %v1944, 0
        %v2452 = vsel %vm2294, %v1946, 0
        %v2455 = vsel %vm2294, %v1948, 0
        %v2458 = vsel %vm2294, %v1950, 0
        %v2461 = vsel %vm2294, %v1952, 0
        %v2464 = vsel %vm2294, %v1954, 0
        %v2467 = vsel %vm2294, %v1956, 0
        %v2470 = vsel %vm2294, %v1958, 0
        %v2473 = vsel %vm2294, %v1960, 0
        %v2476 = vsel %vm2294, %v1962, 0
        %v2479 = vsel %vm2294, %v1964, 0
        %v2482 = vsel %vm2294, %v1966, 0
        %v2485 = vsel %vm2294, %v1968, 0
        %v2488 = vsel %vm2294, %v1970, 0
        %v2491 = vsel %vm2294, %v1972, 0
        %v2494 = vsel %vm2294, %v1974, 0
        %v2497 = vsel %vm2294, %v1976, 0
        %v2500 = vsel %vm2294, %v1978, 0
        %v2503 = vsel %vm2294, %v1980, 0
        %v2506 = vsel %vm2294, %v1982, 0
        %v2509 = vsel %vm2294, %v1984, 0
        %v2512 = vsel %vm2294, %v1986, 0
        %v2515 = vsel %vm2294, %v1988, 0
        %v2518 = vsel %vm2294, %v1990, 0
        %v2521 = vsel %vm2294, %v1992, 0
        %v2524 = vsel %vm2294, %v1994, 0
        %v2527 = vsel %vm2294, %v1996, 0
        %v2530 = vsel %vm2294, %v1998, 0
        %v2533 = vsel %vm2294, %v2000, 0
        %v2536 = vsel %vm2294, %v2002, 0
        %v2539 = vsel %vm2294, %v2004, 0
        %v2542 = vsel %vm2294, %v2006, 0
        %v2545 = vsel %vm2294, %v2008, 0
        %v2548 = vsel %vm2294, %v2010, 0
        %v2551 = vsel %vm2294, %v2012, 0
        %v2554 = vsel %vm2294, %v2014, 0
        %v2557 = vsel %vm2294, %v2016, 0
        %v2560 = vsel %vm2294, %v2018, 0
        %v2563 = vsel %vm2294, %v2020, 0
        %v2566 = vsel %vm2294, %v2022, 0
        %v2569 = vsel %vm2294, %v2024, 0
        %v2572 = vsel %vm2294, %v2026, 0
        %v2575 = vsel %vm2294, %v2028, 0
        %v2578 = vsel %vm2294, %v2030, 0
        %v2581 = vsel %vm2294, %v2032, 0
        %v2584 = vsel %vm2294, %v2034, 0
        %v2587 = vsel %vm2294, %v2036, 0
        %v2590 = vsel %vm2294, %v2038, 0
        %v2593 = vsel %vm2294, %v2040, 0
        %v2596 = vsel %vm2294, %v2042, 0
        %v2599 = vsel %vm2294, %v2044, 0
        %v2602 = vsel %vm2294, %v2046, 0
        %v2605 = vsel %vm2294, %v2048, 0
        %v2608 = vsel %vm2294, %v2050, 0
        %v2611 = vsel %vm2294, %v2052, 0
        %v2614 = vsel %vm2294, %v2054, 0
        %v2617 = vsel %vm2294, %v2056, 0
        %v2620 = vsel %vm2294, %v2058, 0
        %v2623 = vsel %vm2294, %v2060, 0
        %v2626 = vsel %vm2294, %v2062, 0
        %v2629 = vsel %vm2294, %v2064, 0
        %v2632 = vsel %vm2294, %v2066, 0
        %v2635 = vsel %vm2294, %v2068, 0
        %v2638 = vsel %vm2294, %v2070, 0
        %v2641 = vsel %vm2294, %v2072, 0
        %v2644 = vsel %vm2294, %v2074, 0
        %v2647 = vsel %vm2294, %v2076, 0
        %v2650 = vsel %vm2294, %v2078, 0
        %v2653 = vsel %vm2294, %v2080, 0
        %v2656 = vsel %vm2294, %v2082, 0
        %v2659 = vsel %vm2294, %v2084, 0
        %v2662 = vsel %vm2294, %v2086, 0
        %v2665 = vsel %vm2294, %v2088, 0
        %v2668 = vsel %vm2294, %v2090, 0
        %v2671 = vsel %vm2294, %v2092, 0
        %v2674 = vsel %vm2294, %v2094, 0
        %v2677 = vsel %vm2294, %v2096, 0
        %v2680 = vsel %vm2294, %v2098, 0
        %v2683 = vsel %vm2294, %v2100, 0
        %v2686 = vsel %vm2294, %v2102, 0
        %v2689 = vsel %vm2294, %v2104, 0
        %v2692 = vsel %vm2294, %v2106, 0
        %v2695 = vsel %vm2294, %v2108, 0
        %v2698 = vsel %vm2294, %v2110, 0
        %v2701 = vsel %vm2294, %v2112, 0
        %v2704 = vsel %vm2294, %v2114, 0
        %v2707 = vsel %vm2294, %v2116, 0
        %v2710 = vsel %vm2294, %v2118, 0
        %v2713 = vsel %vm2294, %v2120, 0
        %v2716 = vsel %vm2294, %v2122, 0
        %v2719 = vsel %vm2294, %v2124, 0
        %v2722 = vsel %vm2294, %v2126, 0
        %v2725 = vsel %vm2294, %v2128, 0
        %v2728 = vsel %vm2294, %v2130, 0
        %v2731 = vsel %vm2294, %v2132, 0
        %v2734 = vsel %vm2294, %v2134, 0
        %v2737 = vsel %vm2294, %v2136, 0
        %v2740 = vsel %vm2294, %v2138, 0
        %v2743 = vsel %vm2294, %v2140, 0
        %v2746 = vsel %vm2294, %v2142, 0
        %vm2748 = vcmask 1043456
        %v2750 = vsel %vm2748, %v937, 0
        %2752 = vmatprep.subr.bf16.mxu0 0
        %2753 = vmatpush1.bf16.msra.mxu0 %v925
        %2754 = vmatprep.subr.bf16.mxu0 0
        %2755 = vmatpush1.bf16.msra.mxu0 %v926
        %2756 = vmatprep.subr.bf16.mxu0 0
        %2757 = vmatpush1.bf16.msra.mxu0 %v927
        %2758 = vmatprep.subr.bf16.mxu0 0
        %2759 = vmatpush1.bf16.msra.mxu0 %v928
        %2760 = vmatprep.subr.bf16.mxu0 0
        %2761 = vmatpush1.bf16.msra.mxu0 %v929
        %2762 = vmatprep.subr.bf16.mxu0 0
        %2763 = vmatpush1.bf16.msra.mxu0 %v930
        %2764 = vmatprep.subr.bf16.mxu0 0
        %2765 = vmatpush1.bf16.msra.mxu0 %v931
        %2766 = vmatprep.subr.bf16.mxu0 0
        %2767 = vmatpush1.bf16.msra.mxu0 %v932
        %2768 = vmatprep.subr.bf16.mxu0 0
        %2769 = vmatpush1.bf16.msra.mxu0 %v933
        %2770 = vmatprep.subr.bf16.mxu0 0
        %2771 = vmatpush1.bf16.msra.mxu0 %v934
        %2772 = vmatprep.subr.bf16.mxu0 0
        %2773 = vmatpush1.bf16.msra.mxu0 %v935
        %2774 = vmatprep.subr.bf16.mxu0 0
        %2775 = vmatpush1.bf16.msra.mxu0 %v936
        %2776 = vmatprep.subr.bf16.mxu0 0
        %2777 = vmatpush1.bf16.msra.mxu0 %v2750
        %2778 = vmatprep.subr.bf16.mxu0 0
        %2779 = vmatpush1.bf16.msra.mxu0 0
        %2780 = vmatprep.subr.bf16.mxu0 0
        %2781 = vmatpush1.bf16.msra.mxu0 0
        %2782 = vmatprep.subr.bf16.mxu0 0
        %2783 = vmatpush1.bf16.msra.mxu0 0
        %2784 = vmatprep.mubr.bf16.mxu0 %v2296
        %2785 = vmatmul.mubr.bf16.gmra.mrb[0].mxu0 %v1841
        %v2786 = vpop.f32.mrb[0].mxu0
        %v2787 = vadd.f32 0.0, %v2786
        %v2788 = vpop.f32.mrb[0].mxu0
        %v2789 = vpop.f32.mrb[0].mxu0
        %v2790 = vadd.f32 0.0, %v2789
        %v2791 = vpop.f32.mrb[0].mxu0
        %2792 = vmatprep.mubr.bf16.mxu0 %v2299
        %2793 = vmatmul.mubr.bf16.gmra.mrb[0].mxu0 %v1843
        %v2794 = vpop.f32.mrb[0].mxu0
        %v2795 = vadd.f32 0.0, %v2794
        %v2796 = vpop.f32.mrb[0].mxu0
        %v2797 = vpop.f32.mrb[0].mxu0
        %v2798 = vadd.f32 0.0, %v2797
        %v2799 = vpop.f32.mrb[0].mxu0
        %2800 = vmatprep.mubr.bf16.mxu0 %v2302
        %2801 = vmatmul.mubr.bf16.gmra.mrb[0].mxu0 %v1845
        %v2802 = vpop.f32.mrb[0].mxu0
        %v2803 = vadd.f32 0.0, %v2802
        %v2804 = vpop.f32.mrb[0].mxu0
        %v2805 = vpop.f32.mrb[0].mxu0
        %v2806 = vadd.f32 0.0, %v2805
        %v2807 = vpop.f32.mrb[0].mxu0
        %2808 = vmatprep.mubr.bf16.mxu0 %v2305
        %2809 = vmatmul.mubr.bf16.gmra.mrb[0].mxu0 %v1847
        %v2810 = vpop.f32.mrb[0].mxu0
        %v2811 = vadd.f32 0.0, %v2810
        %v2812 = vpop.f32.mrb[0].mxu0
        %v2813 = vpop.f32.mrb[0].mxu0
        %v2814 = vadd.f32 0.0, %v2813
        %v2815 = vpop.f32.mrb[0].mxu0
        %2816 = vmatprep.mubr.bf16.mxu0 %v2308
        %2817 = vmatmul.mubr.bf16.gmra.mrb[0].mxu0 %v1849
        %v2818 = vpop.f32.mrb[0].mxu0
        %v2819 = vadd.f32 0.0, %v2818
        %v2820 = vpop.f32.mrb[0].mxu0
        %v2821 = vpop.f32.mrb[0].mxu0
        %v2822 = vadd.f32 0.0, %v2821
        %v2823 = vpop.f32.mrb[0].mxu0
        %2824 = vmatprep.mubr.bf16.mxu0 %v2311
        %2825 = vmatmul.mubr.bf16.gmra.mrb[0].mxu0 %v1851
        %v2826 = vpop.f32.mrb[0].mxu0
        %v2827 = vadd.f32 0.0, %v2826
        %v2828 = vpop.f32.mrb[0].mxu0
        %v2829 = vpop.f32.mrb[0].mxu0
        %v2830 = vadd.f32 0.0, %v2829
        %v2831 = vpop.f32.mrb[0].mxu0
        %2832 = vmatprep.mubr.bf16.mxu0 %v2314
        %2833 = vmatmul.mubr.bf16.gmra.mrb[0].mxu0 %v1853
        %v2834 = vpop.f32.mrb[0].mxu0
        %v2835 = vadd.f32 0.0, %v2834
        %v2836 = vpop.f32.mrb[0].mxu0
        %v2837 = vpop.f32.mrb[0].mxu0
        %v2838 = vadd.f32 0.0, %v2837
        %v2839 = vpop.f32.mrb[0].mxu0
        %2840 = vmatprep.mubr.bf16.mxu0 %v2317
        %2841 = vmatmul.mubr.bf16.gmra.mrb[0].mxu0 %v1855
        %v2842 = vpop.f32.mrb[0].mxu0
        %v2843 = vadd.f32 0.0, %v2842
        %v2844 = vpop.f32.mrb[0].mxu0
        %v2845 = vpop.f32.mrb[0].mxu0
        %v2846 = vadd.f32 0.0, %v2845
        %v2847 = vpop.f32.mrb[0].mxu0
        %2848 = vmatprep.mubr.bf16.mxu0 %v2320
        %2849 = vmatmul.mubr.bf16.gmra.mrb[0].mxu0 %v1857
        %v2850 = vpop.f32.mrb[0].mxu0
        %v2851 = vadd.f32 0.0, %v2850
        %v2852 = vpop.f32.mrb[0].mxu0
        %v2853 = vpop.f32.mrb[0].mxu0
        %v2854 = vadd.f32 0.0, %v2853
        %v2855 = vpop.f32.mrb[0].mxu0
        %2856 = vmatprep.mubr.bf16.mxu0 %v2323
        %2857 = vmatmul.mubr.bf16.gmra.mrb[0].mxu0 %v1859
        %v2858 = vpop.f32.mrb[0].mxu0
        %v2859 = vadd.f32 0.0, %v2858
        %v2860 = vpop.f32.mrb[0].mxu0
        %v2861 = vpop.f32.mrb[0].mxu0
        %v2862 = vadd.f32 0.0, %v2861
        %v2863 = vpop.f32.mrb[0].mxu0
        %2864 = vmatprep.mubr.bf16.mxu0 %v2326
        %2865 = vmatmul.mubr.bf16.gmra.mrb[0].mxu0 %v1861
        %v2866 = vpop.f32.mrb[0].mxu0
        %v2867 = vadd.f32 0.0, %v2866
        %v2868 = vpop.f32.mrb[0].mxu0
        %v2869 = vpop.f32.mrb[0].mxu0
        %v2870 = vadd.f32 0.0, %v2869
        %v2871 = vpop.f32.mrb[0].mxu0
        %2872 = vmatprep.mubr.bf16.mxu0 %v2329
        %2873 = vmatmul.mubr.bf16.gmra.mrb[0].mxu0 %v1863
        %v2874 = vpop.f32.mrb[0].mxu0
        %v2875 = vadd.f32 0.0, %v2874
        %v2876 = vpop.f32.mrb[0].mxu0
        %v2877 = vpop.f32.mrb[0].mxu0
        %v2878 = vadd.f32 0.0, %v2877
        %v2879 = vpop.f32.mrb[0].mxu0
        %2880 = vmatprep.mubr.bf16.mxu0 %v2332
        %2881 = vmatmul.mubr.bf16.gmra.mrb[0].mxu0 %v1865
        %v2882 = vpop.f32.mrb[0].mxu0
        %v2883 = vadd.f32 0.0, %v2882
        %v2884 = vpop.f32.mrb[0].mxu0
        %v2885 = vpop.f32.mrb[0].mxu0
        %v2886 = vadd.f32 0.0, %v2885
        %v2887 = vpop.f32.mrb[0].mxu0
        %2888 = vmatprep.mubr.bf16.mxu0 %v2335
        %2889 = vmatmul.mubr.bf16.gmra.mrb[0].mxu0 %v1867
        %v2890 = vpop.f32.mrb[0].mxu0
        %v2891 = vadd.f32 0.0, %v2890
        %v2892 = vpop.f32.mrb[0].mxu0
        %v2893 = vpop.f32.mrb[0].mxu0
        %v2894 = vadd.f32 0.0, %v2893
        %v2895 = vpop.f32.mrb[0].mxu0
        %2896 = vmatprep.mubr.bf16.mxu0 %v2338
        %2897 = vmatmul.mubr.bf16.gmra.mrb[0].mxu0 %v1869
        %v2898 = vpop.f32.mrb[0].mxu0
        %v2899 = vadd.f32 0.0, %v2898
        %v2900 = vpop.f32.mrb[0].mxu0
        %v2901 = vpop.f32.mrb[0].mxu0
        %v2902 = vadd.f32 0.0, %v2901
        %v2903 = vpop.f32.mrb[0].mxu0
        %2904 = vmatprep.mubr.bf16.mxu0 %v2341
        %2905 = vmatmul.mubr.bf16.gmra.mrb[0].mxu0 %v1871
        %v2906 = vpop.f32.mrb[0].mxu0
        %v2907 = vadd.f32 0.0, %v2906
        %v2908 = vpop.f32.mrb[0].mxu0
        %v2909 = vpop.f32.mrb[0].mxu0
        %v2910 = vadd.f32 0.0, %v2909
        %v2911 = vpop.f32.mrb[0].mxu0
        %2912 = vmatprep.mubr.bf16.mxu0 %v2344
        %2913 = vmatmul.mubr.bf16.gmra.mrb[0].mxu0 %v1873
        %v2914 = vpop.f32.mrb[0].mxu0
        %v2915 = vadd.f32 0.0, %v2914
        %v2916 = vpop.f32.mrb[0].mxu0
        %v2917 = vpop.f32.mrb[0].mxu0
        %v2918 = vadd.f32 0.0, %v2917
        %v2919 = vpop.f32.mrb[0].mxu0
        %2920 = vmatprep.mubr.bf16.mxu0 %v2347
        %2921 = vmatmul.mubr.bf16.gmra.mrb[0].mxu0 %v1875
        %v2922 = vpop.f32.mrb[0].mxu0
        %v2923 = vadd.f32 0.0, %v2922
        %v2924 = vpop.f32.mrb[0].mxu0
        %v2925 = vpop.f32.mrb[0].mxu0
        %v2926 = vadd.f32 0.0, %v2925
        %v2927 = vpop.f32.mrb[0].mxu0
        %2928 = vmatprep.mubr.bf16.mxu0 %v2350
        %2929 = vmatmul.mubr.bf16.gmra.mrb[0].mxu0 %v1877
        %v2930 = vpop.f32.mrb[0].mxu0
        %v2931 = vadd.f32 0.0, %v2930
        %v2932 = vpop.f32.mrb[0].mxu0
        %v2933 = vpop.f32.mrb[0].mxu0
        %v2934 = vadd.f32 0.0, %v2933
        %v2935 = vpop.f32.mrb[0].mxu0
        %2936 = vmatprep.mubr.bf16.mxu0 %v2353
        %2937 = vmatmul.mubr.bf16.gmra.mrb[0].mxu0 %v1879
        %v2938 = vpop.f32.mrb[0].mxu0
        %v2939 = vadd.f32 0.0, %v2938
        %v2940 = vpop.f32.mrb[0].mxu0
        %v2941 = vpop.f32.mrb[0].mxu0
        %v2942 = vadd.f32 0.0, %v2941
        %v2943 = vpop.f32.mrb[0].mxu0
        %2944 = vmatprep.mubr.bf16.mxu0 %v2356
        %2945 = vmatmul.mubr.bf16.gmra.mrb[0].mxu0 %v1881
        %v2946 = vpop.f32.mrb[0].mxu0
        %v2947 = vadd.f32 0.0, %v2946
        %v2948 = vpop.f32.mrb[0].mxu0
        %v2949 = vpop.f32.mrb[0].mxu0
        %v2950 = vadd.f32 0.0, %v2949
        %v2951 = vpop.f32.mrb[0].mxu0
        %2952 = vmatprep.mubr.bf16.mxu0 %v2359
        %2953 = vmatmul.mubr.bf16.gmra.mrb[0].mxu0 %v1883
        %v2954 = vpop.f32.mrb[0].mxu0
        %v2955 = vadd.f32 0.0, %v2954
        %v2956 = vpop.f32.mrb[0].mxu0
        %v2957 = vpop.f32.mrb[0].mxu0
        %v2958 = vadd.f32 0.0, %v2957
        %v2959 = vpop.f32.mrb[0].mxu0
        %2960 = vmatprep.mubr.bf16.mxu0 %v2362
        %2961 = vmatmul.mubr.bf16.gmra.mrb[0].mxu0 %v1885
        %v2962 = vpop.f32.mrb[0].mxu0
        %v2963 = vadd.f32 0.0, %v2962
        %v2964 = vpop.f32.mrb[0].mxu0
        %v2965 = vpop.f32.mrb[0].mxu0
        %v2966 = vadd.f32 0.0, %v2965
        %v2967 = vpop.f32.mrb[0].mxu0
        %2968 = vmatprep.mubr.bf16.mxu0 %v2365
        %2969 = vmatmul.mubr.bf16.gmra.mrb[0].mxu0 %v1887
        %v2970 = vpop.f32.mrb[0].mxu0
        %v2971 = vadd.f32 0.0, %v2970
        %v2972 = vpop.f32.mrb[0].mxu0
        %v2973 = vpop.f32.mrb[0].mxu0
        %v2974 = vadd.f32 0.0, %v2973
        %v2975 = vpop.f32.mrb[0].mxu0
        %2976 = vmatprep.mubr.bf16.mxu0 %v2368
        %2977 = vmatmul.mubr.bf16.gmra.mrb[0].mxu0 %v1889
        %v2978 = vpop.f32.mrb[0].mxu0
        %v2979 = vadd.f32 0.0, %v2978
        %v2980 = vpop.f32.mrb[0].mxu0
        %v2981 = vpop.f32.mrb[0].mxu0
        %v2982 = vadd.f32 0.0, %v2981
        %v2983 = vpop.f32.mrb[0].mxu0
        %2984 = vmatprep.mubr.bf16.mxu0 %v2371
        %2985 = vmatmul.mubr.bf16.gmra.mrb[0].mxu0 %v1891
        %v2986 = vpop.f32.mrb[0].mxu0
        %v2987 = vadd.f32 0.0, %v2986
        %v2988 = vpop.f32.mrb[0].mxu0
        %v2989 = vpop.f32.mrb[0].mxu0
        %v2990 = vadd.f32 0.0, %v2989
        %v2991 = vpop.f32.mrb[0].mxu0
        %2992 = vmatprep.mubr.bf16.mxu0 %v2374
        %2993 = vmatmul.mubr.bf16.gmra.mrb[0].mxu0 %v1893
        %v2994 = vpop.f32.mrb[0].mxu0
        %v2995 = vadd.f32 0.0, %v2994
        %v2996 = vpop.f32.mrb[0].mxu0
        %v2997 = vpop.f32.mrb[0].mxu0
        %v2998 = vadd.f32 0.0, %v2997
        %v2999 = vpop.f32.mrb[0].mxu0
        %3000 = vmatprep.mubr.bf16.mxu0 %v2377
        %3001 = vmatmul.mubr.bf16.gmra.mrb[0].mxu0 %v1895
        %v3002 = vpop.f32.mrb[0].mxu0
        %v3003 = vadd.f32 0.0, %v3002
        %v3004 = vpop.f32.mrb[0].mxu0
        %v3005 = vpop.f32.mrb[0].mxu0
        %v3006 = vadd.f32 0.0, %v3005
        %v3007 = vpop.f32.mrb[0].mxu0
        %3008 = vmatprep.mubr.bf16.mxu0 %v2380
        %3009 = vmatmul.mubr.bf16.gmra.mrb[0].mxu0 %v1897
        %v3010 = vpop.f32.mrb[0].mxu0
        %v3011 = vadd.f32 0.0, %v3010
        %v3012 = vpop.f32.mrb[0].mxu0
        %v3013 = vpop.f32.mrb[0].mxu0
        %v3014 = vadd.f32 0.0, %v3013
        %v3015 = vpop.f32.mrb[0].mxu0
        %3016 = vmatprep.mubr.bf16.mxu0 %v2383
        %3017 = vmatmul.mubr.bf16.gmra.mrb[0].mxu0 %v1899
        %v3018 = vpop.f32.mrb[0].mxu0
        %v3019 = vadd.f32 0.0, %v3018
        %v3020 = vpop.f32.mrb[0].mxu0
        %v3021 = vpop.f32.mrb[0].mxu0
        %v3022 = vadd.f32 0.0, %v3021
        %v3023 = vpop.f32.mrb[0].mxu0
        %3024 = vmatprep.mubr.bf16.mxu0 %v2386
        %3025 = vmatmul.mubr.bf16.gmra.mrb[0].mxu0 %v1901
        %v3026 = vpop.f32.mrb[0].mxu0
        %v3027 = vadd.f32 0.0, %v3026
        %v3028 = vpop.f32.mrb[0].mxu0
        %v3029 = vpop.f32.mrb[0].mxu0
        %v3030 = vadd.f32 0.0, %v3029
        %v3031 = vpop.f32.mrb[0].mxu0
        %3032 = vmatprep.mubr.bf16.mxu0 %v2389
        %3033 = vmatmul.mubr.bf16.gmra.mrb[0].mxu0 %v1903
        %v3034 = vpop.f32.mrb[0].mxu0
        %v3035 = vadd.f32 0.0, %v3034
        %v3036 = vpop.f32.mrb[0].mxu0
        %v3037 = vpop.f32.mrb[0].mxu0
        %v3038 = vadd.f32 0.0, %v3037
        %v3039 = vpop.f32.mrb[0].mxu0
        %3040 = vmatprep.mubr.bf16.mxu0 %v2392
        %3041 = vmatmul.mubr.bf16.gmra.mrb[0].mxu0 %v1905
        %v3042 = vpop.f32.mrb[0].mxu0
        %v3043 = vadd.f32 0.0, %v3042
        %v3044 = vpop.f32.mrb[0].mxu0
        %v3045 = vpop.f32.mrb[0].mxu0
        %v3046 = vadd.f32 0.0, %v3045
        %v3047 = vpop.f32.mrb[0].mxu0
        %3048 = vmatprep.mubr.bf16.mxu0 %v2395
        %3049 = vmatmul.mubr.bf16.gmra.mrb[0].mxu0 %v1907
        %v3050 = vpop.f32.mrb[0].mxu0
        %v3051 = vadd.f32 0.0, %v3050
        %v3052 = vpop.f32.mrb[0].mxu0
        %v3053 = vpop.f32.mrb[0].mxu0
        %v3054 = vadd.f32 0.0, %v3053
        %v3055 = vpop.f32.mrb[0].mxu0
        %3056 = vmatprep.mubr.bf16.mxu0 %v2398
        %3057 = vmatmul.mubr.bf16.gmra.mrb[0].mxu0 %v1909
        %v3058 = vpop.f32.mrb[0].mxu0
        %v3059 = vadd.f32 0.0, %v3058
        %v3060 = vpop.f32.mrb[0].mxu0
        %v3061 = vpop.f32.mrb[0].mxu0
        %v3062 = vadd.f32 0.0, %v3061
        %v3063 = vpop.f32.mrb[0].mxu0
        %3064 = vmatprep.mubr.bf16.mxu0 %v2401
        %3065 = vmatmul.mubr.bf16.gmra.mrb[0].mxu0 %v1911
        %v3066 = vpop.f32.mrb[0].mxu0
        %v3067 = vadd.f32 0.0, %v3066
        %v3068 = vpop.f32.mrb[0].mxu0
        %v3069 = vpop.f32.mrb[0].mxu0
        %v3070 = vadd.f32 0.0, %v3069
        %v3071 = vpop.f32.mrb[0].mxu0
        %3072 = vmatprep.mubr.bf16.mxu0 %v2404
        %3073 = vmatmul.mubr.bf16.gmra.mrb[0].mxu0 %v1913
        %v3074 = vpop.f32.mrb[0].mxu0
        %v3075 = vadd.f32 0.0, %v3074
        %v3076 = vpop.f32.mrb[0].mxu0
        %v3077 = vpop.f32.mrb[0].mxu0
        %v3078 = vadd.f32 0.0, %v3077
        %v3079 = vpop.f32.mrb[0].mxu0
        %3080 = vmatprep.mubr.bf16.mxu0 %v2407
        %3081 = vmatmul.mubr.bf16.gmra.mrb[0].mxu0 %v1915
        %v3082 = vpop.f32.mrb[0].mxu0
        %v3083 = vadd.f32 0.0, %v3082
        %v3084 = vpop.f32.mrb[0].mxu0
        %v3085 = vpop.f32.mrb[0].mxu0
        %v3086 = vadd.f32 0.0, %v3085
        %v3087 = vpop.f32.mrb[0].mxu0
        %3088 = vmatprep.mubr.bf16.mxu0 %v2410
        %3089 = vmatmul.mubr.bf16.gmra.mrb[0].mxu0 %v1917
        %v3090 = vpop.f32.mrb[0].mxu0
        %v3091 = vadd.f32 0.0, %v3090
        %v3092 = vpop.f32.mrb[0].mxu0
        %v3093 = vpop.f32.mrb[0].mxu0
        %v3094 = vadd.f32 0.0, %v3093
        %v3095 = vpop.f32.mrb[0].mxu0
        %3096 = vmatprep.mubr.bf16.mxu0 %v2413
        %3097 = vmatmul.mubr.bf16.gmra.mrb[0].mxu0 %v1919
        %v3098 = vpop.f32.mrb[0].mxu0
        %v3099 = vadd.f32 0.0, %v3098
        %v3100 = vpop.f32.mrb[0].mxu0
        %v3101 = vpop.f32.mrb[0].mxu0
        %v3102 = vadd.f32 0.0, %v3101
        %v3103 = vpop.f32.mrb[0].mxu0
        %3104 = vmatprep.mubr.bf16.mxu0 %v2416
        %3105 = vmatmul.mubr.bf16.gmra.mrb[0].mxu0 %v1921
        %v3106 = vpop.f32.mrb[0].mxu0
        %v3107 = vadd.f32 0.0, %v3106
        %v3108 = vpop.f32.mrb[0].mxu0
        %v3109 = vpop.f32.mrb[0].mxu0
        %v3110 = vadd.f32 0.0, %v3109
        %v3111 = vpop.f32.mrb[0].mxu0
        %3112 = vmatprep.mubr.bf16.mxu0 %v2419
        %3113 = vmatmul.mubr.bf16.gmra.mrb[0].mxu0 %v1923
        %v3114 = vpop.f32.mrb[0].mxu0
        %v3115 = vadd.f32 0.0, %v3114
        %v3116 = vpop.f32.mrb[0].mxu0
        %v3117 = vpop.f32.mrb[0].mxu0
        %v3118 = vadd.f32 0.0, %v3117
        %v3119 = vpop.f32.mrb[0].mxu0
        %3120 = vmatprep.mubr.bf16.mxu0 %v2422
        %3121 = vmatmul.mubr.bf16.gmra.mrb[0].mxu0 %v1925
        %v3122 = vpop.f32.mrb[0].mxu0
        %v3123 = vadd.f32 0.0, %v3122
        %v3124 = vpop.f32.mrb[0].mxu0
        %v3125 = vpop.f32.mrb[0].mxu0
        %v3126 = vadd.f32 0.0, %v3125
        %v3127 = vpop.f32.mrb[0].mxu0
        %3128 = vmatprep.mubr.bf16.mxu0 %v2425
        %3129 = vmatmul.mubr.bf16.gmra.mrb[0].mxu0 %v1927
        %v3130 = vpop.f32.mrb[0].mxu0
        %v3131 = vadd.f32 0.0, %v3130
        %v3132 = vpop.f32.mrb[0].mxu0
        %v3133 = vpop.f32.mrb[0].mxu0
        %v3134 = vadd.f32 0.0, %v3133
        %v3135 = vpop.f32.mrb[0].mxu0
        %3136 = vmatprep.mubr.bf16.mxu0 %v2428
        %3137 = vmatmul.mubr.bf16.gmra.mrb[0].mxu0 %v1929
        %v3138 = vpop.f32.mrb[0].mxu0
        %v3139 = vadd.f32 0.0, %v3138
        %v3140 = vpop.f32.mrb[0].mxu0
        %v3141 = vpop.f32.mrb[0].mxu0
        %v3142 = vadd.f32 0.0, %v3141
        %v3143 = vpop.f32.mrb[0].mxu0
        %3144 = vmatprep.mubr.bf16.mxu0 %v2431
        %3145 = vmatmul.mubr.bf16.gmra.mrb[0].mxu0 %v1931
        %v3146 = vpop.f32.mrb[0].mxu0
        %v3147 = vadd.f32 0.0, %v3146
        %v3148 = vpop.f32.mrb[0].mxu0
        %v3149 = vpop.f32.mrb[0].mxu0
        %v3150 = vadd.f32 0.0, %v3149
        %v3151 = vpop.f32.mrb[0].mxu0
        %3152 = vmatprep.mubr.bf16.mxu0 %v2434
        %3153 = vmatmul.mubr.bf16.gmra.mrb[0].mxu0 %v1933
        %v3154 = vpop.f32.mrb[0].mxu0
        %v3155 = vadd.f32 0.0, %v3154
        %v3156 = vpop.f32.mrb[0].mxu0
        %v3157 = vpop.f32.mrb[0].mxu0
        %v3158 = vadd.f32 0.0, %v3157
        %v3159 = vpop.f32.mrb[0].mxu0
        %3160 = vmatprep.mubr.bf16.mxu0 %v2437
        %3161 = vmatmul.mubr.bf16.gmra.mrb[0].mxu0 %v1935
        %v3162 = vpop.f32.mrb[0].mxu0
        %v3163 = vadd.f32 0.0, %v3162
        %v3164 = vpop.f32.mrb[0].mxu0
        %v3165 = vpop.f32.mrb[0].mxu0
        %v3166 = vadd.f32 0.0, %v3165
        %v3167 = vpop.f32.mrb[0].mxu0
        %3168 = vmatprep.mubr.bf16.mxu0 %v2440
        %3169 = vmatmul.mubr.bf16.gmra.mrb[0].mxu0 %v1937
        %v3170 = vpop.f32.mrb[0].mxu0
        %v3171 = vadd.f32 0.0, %v3170
        %v3172 = vpop.f32.mrb[0].mxu0
        %v3173 = vpop.f32.mrb[0].mxu0
        %v3174 = vadd.f32 0.0, %v3173
        %v3175 = vpop.f32.mrb[0].mxu0
        %3176 = vmatprep.mubr.bf16.mxu0 %v2443
        %3177 = vmatmul.mubr.bf16.gmra.mrb[0].mxu0 %v1939
        %v3178 = vpop.f32.mrb[0].mxu0
        %v3179 = vadd.f32 0.0, %v3178
        %v3180 = vpop.f32.mrb[0].mxu0
        %v3181 = vpop.f32.mrb[0].mxu0
        %v3182 = vadd.f32 0.0, %v3181
        %v3183 = vpop.f32.mrb[0].mxu0
        %3184 = vmatprep.mubr.bf16.mxu0 %v2446
        %3185 = vmatmul.mubr.bf16.gmra.mrb[0].mxu0 %v1941
        %v3186 = vpop.f32.mrb[0].mxu0
        %v3187 = vadd.f32 0.0, %v3186
        %v3188 = vpop.f32.mrb[0].mxu0
        %v3189 = vpop.f32.mrb[0].mxu0
        %v3190 = vadd.f32 0.0, %v3189
        %v3191 = vpop.f32.mrb[0].mxu0
        %3192 = vmatprep.mubr.bf16.mxu0 %v2449
        %3193 = vmatmul.mubr.bf16.gmra.mrb[0].mxu0 %v1943
        %v3194 = vpop.f32.mrb[0].mxu0
        %v3195 = vadd.f32 0.0, %v3194
        %v3196 = vpop.f32.mrb[0].mxu0
        %v3197 = vpop.f32.mrb[0].mxu0
        %v3198 = vadd.f32 0.0, %v3197
        %v3199 = vpop.f32.mrb[0].mxu0
        %3200 = vmatprep.mubr.bf16.mxu0 %v2452
        %3201 = vmatmul.mubr.bf16.gmra.mrb[0].mxu0 %v1945
        %v3202 = vpop.f32.mrb[0].mxu0
        %v3203 = vadd.f32 0.0, %v3202
        %v3204 = vpop.f32.mrb[0].mxu0
        %v3205 = vpop.f32.mrb[0].mxu0
        %v3206 = vadd.f32 0.0, %v3205
        %v3207 = vpop.f32.mrb[0].mxu0
        %3208 = vmatprep.mubr.bf16.mxu0 %v2455
        %3209 = vmatmul.mubr.bf16.gmra.mrb[0].mxu0 %v1947
        %v3210 = vpop.f32.mrb[0].mxu0
        %v3211 = vadd.f32 0.0, %v3210
        %v3212 = vpop.f32.mrb[0].mxu0
        %v3213 = vpop.f32.mrb[0].mxu0
        %v3214 = vadd.f32 0.0, %v3213
        %v3215 = vpop.f32.mrb[0].mxu0
        %3216 = vmatprep.mubr.bf16.mxu0 %v2458
        %3217 = vmatmul.mubr.bf16.gmra.mrb[0].mxu0 %v1949
        %v3218 = vpop.f32.mrb[0].mxu0
        %v3219 = vadd.f32 0.0, %v3218
        %v3220 = vpop.f32.mrb[0].mxu0
        %v3221 = vpop.f32.mrb[0].mxu0
        %v3222 = vadd.f32 0.0, %v3221
        %v3223 = vpop.f32.mrb[0].mxu0
        %3224 = vmatprep.mubr.bf16.mxu0 %v2461
        %3225 = vmatmul.mubr.bf16.gmra.mrb[0].mxu0 %v1951
        %v3226 = vpop.f32.mrb[0].mxu0
        %v3227 = vadd.f32 0.0, %v3226
        %v3228 = vpop.f32.mrb[0].mxu0
        %v3229 = vpop.f32.mrb[0].mxu0
        %v3230 = vadd.f32 0.0, %v3229
        %v3231 = vpop.f32.mrb[0].mxu0
        %3232 = vmatprep.mubr.bf16.mxu0 %v2464
        %3233 = vmatmul.mubr.bf16.gmra.mrb[0].mxu0 %v1953
        %v3234 = vpop.f32.mrb[0].mxu0
        %v3235 = vadd.f32 0.0, %v3234
        %v3236 = vpop.f32.mrb[0].mxu0
        %v3237 = vpop.f32.mrb[0].mxu0
        %v3238 = vadd.f32 0.0, %v3237
        %v3239 = vpop.f32.mrb[0].mxu0
        %3240 = vmatprep.mubr.bf16.mxu0 %v2467
        %3241 = vmatmul.mubr.bf16.gmra.mrb[0].mxu0 %v1955
        %v3242 = vpop.f32.mrb[0].mxu0
        %v3243 = vadd.f32 0.0, %v3242
        %v3244 = vpop.f32.mrb[0].mxu0
        %v3245 = vpop.f32.mrb[0].mxu0
        %v3246 = vadd.f32 0.0, %v3245
        %v3247 = vpop.f32.mrb[0].mxu0
        %3248 = vmatprep.mubr.bf16.mxu0 %v2470
        %3249 = vmatmul.mubr.bf16.gmra.mrb[0].mxu0 %v1957
        %v3250 = vpop.f32.mrb[0].mxu0
        %v3251 = vadd.f32 0.0, %v3250
        %v3252 = vpop.f32.mrb[0].mxu0
        %v3253 = vpop.f32.mrb[0].mxu0
        %v3254 = vadd.f32 0.0, %v3253
        %v3255 = vpop.f32.mrb[0].mxu0
        %3256 = vmatprep.mubr.bf16.mxu0 %v2473
        %3257 = vmatmul.mubr.bf16.gmra.mrb[0].mxu0 %v1959
        %v3258 = vpop.f32.mrb[0].mxu0
        %v3259 = vadd.f32 0.0, %v3258
        %v3260 = vpop.f32.mrb[0].mxu0
        %v3261 = vpop.f32.mrb[0].mxu0
        %v3262 = vadd.f32 0.0, %v3261
        %v3263 = vpop.f32.mrb[0].mxu0
        %3264 = vmatprep.mubr.bf16.mxu0 %v2476
        %3265 = vmatmul.mubr.bf16.gmra.mrb[0].mxu0 %v1961
        %v3266 = vpop.f32.mrb[0].mxu0
        %v3267 = vadd.f32 0.0, %v3266
        %v3268 = vpop.f32.mrb[0].mxu0
        %v3269 = vpop.f32.mrb[0].mxu0
        %v3270 = vadd.f32 0.0, %v3269
        %v3271 = vpop.f32.mrb[0].mxu0
        %3272 = vmatprep.mubr.bf16.mxu0 %v2479
        %3273 = vmatmul.mubr.bf16.gmra.mrb[0].mxu0 %v1963
        %v3274 = vpop.f32.mrb[0].mxu0
        %v3275 = vadd.f32 0.0, %v3274
        %v3276 = vpop.f32.mrb[0].mxu0
        %v3277 = vpop.f32.mrb[0].mxu0
        %v3278 = vadd.f32 0.0, %v3277
        %v3279 = vpop.f32.mrb[0].mxu0
        %3280 = vmatprep.mubr.bf16.mxu0 %v2482
        %3281 = vmatmul.mubr.bf16.gmra.mrb[0].mxu0 %v1965
        %v3282 = vpop.f32.mrb[0].mxu0
        %v3283 = vadd.f32 0.0, %v3282
        %v3284 = vpop.f32.mrb[0].mxu0
        %v3285 = vpop.f32.mrb[0].mxu0
        %v3286 = vadd.f32 0.0, %v3285
        %v3287 = vpop.f32.mrb[0].mxu0
        %3288 = vmatprep.mubr.bf16.mxu0 %v2485
        %3289 = vmatmul.mubr.bf16.gmra.mrb[0].mxu0 %v1967
        %v3290 = vpop.f32.mrb[0].mxu0
        %v3291 = vadd.f32 0.0, %v3290
        %v3292 = vpop.f32.mrb[0].mxu0
        %v3293 = vpop.f32.mrb[0].mxu0
        %v3294 = vadd.f32 0.0, %v3293
        %v3295 = vpop.f32.mrb[0].mxu0
        %3296 = vmatprep.mubr.bf16.mxu0 %v2488
        %3297 = vmatmul.mubr.bf16.gmra.mrb[0].mxu0 %v1969
        %v3298 = vpop.f32.mrb[0].mxu0
        %v3299 = vadd.f32 0.0, %v3298
        %v3300 = vpop.f32.mrb[0].mxu0
        %v3301 = vpop.f32.mrb[0].mxu0
        %v3302 = vadd.f32 0.0, %v3301
        %v3303 = vpop.f32.mrb[0].mxu0
        %3304 = vmatprep.mubr.bf16.mxu0 %v2491
        %3305 = vmatmul.mubr.bf16.gmra.mrb[0].mxu0 %v1971
        %v3306 = vpop.f32.mrb[0].mxu0
        %v3307 = vadd.f32 0.0, %v3306
        %v3308 = vpop.f32.mrb[0].mxu0
        %v3309 = vpop.f32.mrb[0].mxu0
        %v3310 = vadd.f32 0.0, %v3309
        %v3311 = vpop.f32.mrb[0].mxu0
        %3312 = vmatprep.mubr.bf16.mxu0 %v2494
        %3313 = vmatmul.mubr.bf16.gmra.mrb[0].mxu0 %v1973
        %v3314 = vpop.f32.mrb[0].mxu0
        %v3315 = vadd.f32 0.0, %v3314
        %v3316 = vpop.f32.mrb[0].mxu0
        %v3317 = vpop.f32.mrb[0].mxu0
        %v3318 = vadd.f32 0.0, %v3317
        %v3319 = vpop.f32.mrb[0].mxu0
        %3320 = vmatprep.mubr.bf16.mxu0 %v2497
        %3321 = vmatmul.mubr.bf16.gmra.mrb[0].mxu0 %v1975
        %v3322 = vpop.f32.mrb[0].mxu0
        %v3323 = vadd.f32 0.0, %v3322
        %v3324 = vpop.f32.mrb[0].mxu0
        %v3325 = vpop.f32.mrb[0].mxu0
        %v3326 = vadd.f32 0.0, %v3325
        %v3327 = vpop.f32.mrb[0].mxu0
        %3328 = vmatprep.mubr.bf16.mxu0 %v2500
        %3329 = vmatmul.mubr.bf16.gmra.mrb[0].mxu0 %v1977
        %v3330 = vpop.f32.mrb[0].mxu0
        %v3331 = vadd.f32 0.0, %v3330
        %v3332 = vpop.f32.mrb[0].mxu0
        %v3333 = vpop.f32.mrb[0].mxu0
        %v3334 = vadd.f32 0.0, %v3333
        %v3335 = vpop.f32.mrb[0].mxu0
        %3336 = vmatprep.mubr.bf16.mxu0 %v2503
        %3337 = vmatmul.mubr.bf16.gmra.mrb[0].mxu0 %v1979
        %v3338 = vpop.f32.mrb[0].mxu0
        %v3339 = vadd.f32 0.0, %v3338
        %v3340 = vpop.f32.mrb[0].mxu0
        %v3341 = vpop.f32.mrb[0].mxu0
        %v3342 = vadd.f32 0.0, %v3341
        %v3343 = vpop.f32.mrb[0].mxu0
        %3344 = vmatprep.mubr.bf16.mxu0 %v2506
        %3345 = vmatmul.mubr.bf16.gmra.mrb[0].mxu0 %v1981
        %v3346 = vpop.f32.mrb[0].mxu0
        %v3347 = vadd.f32 0.0, %v3346
        %v3348 = vpop.f32.mrb[0].mxu0
        %v3349 = vpop.f32.mrb[0].mxu0
        %v3350 = vadd.f32 0.0, %v3349
        %v3351 = vpop.f32.mrb[0].mxu0
        %3352 = vmatprep.mubr.bf16.mxu0 %v2509
        %3353 = vmatmul.mubr.bf16.gmra.mrb[0].mxu0 %v1983
        %v3354 = vpop.f32.mrb[0].mxu0
        %v3355 = vadd.f32 0.0, %v3354
        %v3356 = vpop.f32.mrb[0].mxu0
        %v3357 = vpop.f32.mrb[0].mxu0
        %v3358 = vadd.f32 0.0, %v3357
        %v3359 = vpop.f32.mrb[0].mxu0
        %3360 = vmatprep.mubr.bf16.mxu0 %v2512
        %3361 = vmatmul.mubr.bf16.gmra.mrb[0].mxu0 %v1985
        %v3362 = vpop.f32.mrb[0].mxu0
        %v3363 = vadd.f32 0.0, %v3362
        %v3364 = vpop.f32.mrb[0].mxu0
        %v3365 = vpop.f32.mrb[0].mxu0
        %v3366 = vadd.f32 0.0, %v3365
        %v3367 = vpop.f32.mrb[0].mxu0
        %3368 = vmatprep.mubr.bf16.mxu0 %v2515
        %3369 = vmatmul.mubr.bf16.gmra.mrb[0].mxu0 %v1987
        %v3370 = vpop.f32.mrb[0].mxu0
        %v3371 = vadd.f32 0.0, %v3370
        %v3372 = vpop.f32.mrb[0].mxu0
        %v3373 = vpop.f32.mrb[0].mxu0
        %v3374 = vadd.f32 0.0, %v3373
        %v3375 = vpop.f32.mrb[0].mxu0
        %3376 = vmatprep.mubr.bf16.mxu0 %v2518
        %3377 = vmatmul.mubr.bf16.gmra.mrb[0].mxu0 %v1989
        %v3378 = vpop.f32.mrb[0].mxu0
        %v3379 = vadd.f32 0.0, %v3378
        %v3380 = vpop.f32.mrb[0].mxu0
        %v3381 = vpop.f32.mrb[0].mxu0
        %v3382 = vadd.f32 0.0, %v3381
        %v3383 = vpop.f32.mrb[0].mxu0
        %3384 = vmatprep.mubr.bf16.mxu0 %v2521
        %3385 = vmatmul.mubr.bf16.gmra.mrb[0].mxu0 %v1991
        %v3386 = vpop.f32.mrb[0].mxu0
        %v3387 = vadd.f32 0.0, %v3386
        %v3388 = vpop.f32.mrb[0].mxu0
        %v3389 = vpop.f32.mrb[0].mxu0
        %v3390 = vadd.f32 0.0, %v3389
        %v3391 = vpop.f32.mrb[0].mxu0
        %3392 = vmatprep.mubr.bf16.mxu0 %v2524
        %3393 = vmatmul.mubr.bf16.gmra.mrb[0].mxu0 %v1993
        %v3394 = vpop.f32.mrb[0].mxu0
        %v3395 = vadd.f32 0.0, %v3394
        %v3396 = vpop.f32.mrb[0].mxu0
        %v3397 = vpop.f32.mrb[0].mxu0
        %v3398 = vadd.f32 0.0, %v3397
        %v3399 = vpop.f32.mrb[0].mxu0
        %3400 = vmatprep.mubr.bf16.mxu0 %v2527
        %3401 = vmatmul.mubr.bf16.gmra.mrb[0].mxu0 %v1995
        %v3402 = vpop.f32.mrb[0].mxu0
        %v3403 = vadd.f32 0.0, %v3402
        %v3404 = vpop.f32.mrb[0].mxu0
        %v3405 = vpop.f32.mrb[0].mxu0
        %v3406 = vadd.f32 0.0, %v3405
        %v3407 = vpop.f32.mrb[0].mxu0
        %3408 = vmatprep.mubr.bf16.mxu0 %v2530
        %3409 = vmatmul.mubr.bf16.gmra.mrb[0].mxu0 %v1997
        %v3410 = vpop.f32.mrb[0].mxu0
        %v3411 = vadd.f32 0.0, %v3410
        %v3412 = vpop.f32.mrb[0].mxu0
        %v3413 = vpop.f32.mrb[0].mxu0
        %v3414 = vadd.f32 0.0, %v3413
        %v3415 = vpop.f32.mrb[0].mxu0
        %3416 = vmatprep.mubr.bf16.mxu0 %v2533
        %3417 = vmatmul.mubr.bf16.gmra.mrb[0].mxu0 %v1999
        %v3418 = vpop.f32.mrb[0].mxu0
        %v3419 = vadd.f32 0.0, %v3418
        %v3420 = vpop.f32.mrb[0].mxu0
        %v3421 = vpop.f32.mrb[0].mxu0
        %v3422 = vadd.f32 0.0, %v3421
        %v3423 = vpop.f32.mrb[0].mxu0
        %3424 = vmatprep.mubr.bf16.mxu0 %v2536
        %3425 = vmatmul.mubr.bf16.gmra.mrb[0].mxu0 %v2001
        %v3426 = vpop.f32.mrb[0].mxu0
        %v3427 = vadd.f32 0.0, %v3426
        %v3428 = vpop.f32.mrb[0].mxu0
        %v3429 = vpop.f32.mrb[0].mxu0
        %v3430 = vadd.f32 0.0, %v3429
        %v3431 = vpop.f32.mrb[0].mxu0
        %3432 = vmatprep.mubr.bf16.mxu0 %v2539
        %3433 = vmatmul.mubr.bf16.gmra.mrb[0].mxu0 %v2003
        %v3434 = vpop.f32.mrb[0].mxu0
        %v3435 = vadd.f32 0.0, %v3434
        %v3436 = vpop.f32.mrb[0].mxu0
        %v3437 = vpop.f32.mrb[0].mxu0
        %v3438 = vadd.f32 0.0, %v3437
        %v3439 = vpop.f32.mrb[0].mxu0
        %3440 = vmatprep.mubr.bf16.mxu0 %v2542
        %3441 = vmatmul.mubr.bf16.gmra.mrb[0].mxu0 %v2005
        %v3442 = vpop.f32.mrb[0].mxu0
        %v3443 = vadd.f32 0.0, %v3442
        %v3444 = vpop.f32.mrb[0].mxu0
        %v3445 = vpop.f32.mrb[0].mxu0
        %v3446 = vadd.f32 0.0, %v3445
        %v3447 = vpop.f32.mrb[0].mxu0
        %3448 = vmatprep.mubr.bf16.mxu0 %v2545
        %3449 = vmatmul.mubr.bf16.gmra.mrb[0].mxu0 %v2007
        %v3450 = vpop.f32.mrb[0].mxu0
        %v3451 = vadd.f32 0.0, %v3450
        %v3452 = vpop.f32.mrb[0].mxu0
        %v3453 = vpop.f32.mrb[0].mxu0
        %v3454 = vadd.f32 0.0, %v3453
        %v3455 = vpop.f32.mrb[0].mxu0
        %3456 = vmatprep.mubr.bf16.mxu0 %v2548
        %3457 = vmatmul.mubr.bf16.gmra.mrb[0].mxu0 %v2009
        %v3458 = vpop.f32.mrb[0].mxu0
        %v3459 = vadd.f32 0.0, %v3458
        %v3460 = vpop.f32.mrb[0].mxu0
        %v3461 = vpop.f32.mrb[0].mxu0
        %v3462 = vadd.f32 0.0, %v3461
        %v3463 = vpop.f32.mrb[0].mxu0
        %3464 = vmatprep.mubr.bf16.mxu0 %v2551
        %3465 = vmatmul.mubr.bf16.gmra.mrb[0].mxu0 %v2011
        %v3466 = vpop.f32.mrb[0].mxu0
        %v3467 = vadd.f32 0.0, %v3466
        %v3468 = vpop.f32.mrb[0].mxu0
        %v3469 = vpop.f32.mrb[0].mxu0
        %v3470 = vadd.f32 0.0, %v3469
        %v3471 = vpop.f32.mrb[0].mxu0
        %3472 = vmatprep.mubr.bf16.mxu0 %v2554
        %3473 = vmatmul.mubr.bf16.gmra.mrb[0].mxu0 %v2013
        %v3474 = vpop.f32.mrb[0].mxu0
        %v3475 = vadd.f32 0.0, %v3474
        %v3476 = vpop.f32.mrb[0].mxu0
        %v3477 = vpop.f32.mrb[0].mxu0
        %v3478 = vadd.f32 0.0, %v3477
        %v3479 = vpop.f32.mrb[0].mxu0
        %3480 = vmatprep.mubr.bf16.mxu0 %v2557
        %3481 = vmatmul.mubr.bf16.gmra.mrb[0].mxu0 %v2015
        %v3482 = vpop.f32.mrb[0].mxu0
        %v3483 = vadd.f32 0.0, %v3482
        %v3484 = vpop.f32.mrb[0].mxu0
        %v3485 = vpop.f32.mrb[0].mxu0
        %v3486 = vadd.f32 0.0, %v3485
        %v3487 = vpop.f32.mrb[0].mxu0
        %3488 = vmatprep.mubr.bf16.mxu0 %v2560
        %3489 = vmatmul.mubr.bf16.gmra.mrb[0].mxu0 %v2017
        %v3490 = vpop.f32.mrb[0].mxu0
        %v3491 = vadd.f32 0.0, %v3490
        %v3492 = vpop.f32.mrb[0].mxu0
        %v3493 = vpop.f32.mrb[0].mxu0
        %v3494 = vadd.f32 0.0, %v3493
        %v3495 = vpop.f32.mrb[0].mxu0
        %3496 = vmatprep.mubr.bf16.mxu0 %v2563
        %3497 = vmatmul.mubr.bf16.gmra.mrb[0].mxu0 %v2019
        %v3498 = vpop.f32.mrb[0].mxu0
        %v3499 = vadd.f32 0.0, %v3498
        %v3500 = vpop.f32.mrb[0].mxu0
        %v3501 = vpop.f32.mrb[0].mxu0
        %v3502 = vadd.f32 0.0, %v3501
        %v3503 = vpop.f32.mrb[0].mxu0
        %3504 = vmatprep.mubr.bf16.mxu0 %v2566
        %3505 = vmatmul.mubr.bf16.gmra.mrb[0].mxu0 %v2021
        %v3506 = vpop.f32.mrb[0].mxu0
        %v3507 = vadd.f32 0.0, %v3506
        %v3508 = vpop.f32.mrb[0].mxu0
        %v3509 = vpop.f32.mrb[0].mxu0
        %v3510 = vadd.f32 0.0, %v3509
        %v3511 = vpop.f32.mrb[0].mxu0
        %3512 = vmatprep.mubr.bf16.mxu0 %v2569
        %3513 = vmatmul.mubr.bf16.gmra.mrb[0].mxu0 %v2023
        %v3514 = vpop.f32.mrb[0].mxu0
        %v3515 = vadd.f32 0.0, %v3514
        %v3516 = vpop.f32.mrb[0].mxu0
        %v3517 = vpop.f32.mrb[0].mxu0
        %v3518 = vadd.f32 0.0, %v3517
        %v3519 = vpop.f32.mrb[0].mxu0
        %3520 = vmatprep.mubr.bf16.mxu0 %v2572
        %3521 = vmatmul.mubr.bf16.gmra.mrb[0].mxu0 %v2025
        %v3522 = vpop.f32.mrb[0].mxu0
        %v3523 = vadd.f32 0.0, %v3522
        %v3524 = vpop.f32.mrb[0].mxu0
        %v3525 = vpop.f32.mrb[0].mxu0
        %v3526 = vadd.f32 0.0, %v3525
        %v3527 = vpop.f32.mrb[0].mxu0
        %3528 = vmatprep.mubr.bf16.mxu0 %v2575
        %3529 = vmatmul.mubr.bf16.gmra.mrb[0].mxu0 %v2027
        %v3530 = vpop.f32.mrb[0].mxu0
        %v3531 = vadd.f32 0.0, %v3530
        %v3532 = vpop.f32.mrb[0].mxu0
        %v3533 = vpop.f32.mrb[0].mxu0
        %v3534 = vadd.f32 0.0, %v3533
        %v3535 = vpop.f32.mrb[0].mxu0
        %3536 = vmatprep.mubr.bf16.mxu0 %v2578
        %3537 = vmatmul.mubr.bf16.gmra.mrb[0].mxu0 %v2029
        %v3538 = vpop.f32.mrb[0].mxu0
        %v3539 = vadd.f32 0.0, %v3538
        %v3540 = vpop.f32.mrb[0].mxu0
        %v3541 = vpop.f32.mrb[0].mxu0
        %v3542 = vadd.f32 0.0, %v3541
        %v3543 = vpop.f32.mrb[0].mxu0
        %3544 = vmatprep.mubr.bf16.mxu0 %v2581
        %3545 = vmatmul.mubr.bf16.gmra.mrb[0].mxu0 %v2031
        %v3546 = vpop.f32.mrb[0].mxu0
        %v3547 = vadd.f32 0.0, %v3546
        %v3548 = vpop.f32.mrb[0].mxu0
        %v3549 = vpop.f32.mrb[0].mxu0
        %v3550 = vadd.f32 0.0, %v3549
        %v3551 = vpop.f32.mrb[0].mxu0
        %3552 = vmatprep.mubr.bf16.mxu0 %v2584
        %3553 = vmatmul.mubr.bf16.gmra.mrb[0].mxu0 %v2033
        %v3554 = vpop.f32.mrb[0].mxu0
        %v3555 = vadd.f32 0.0, %v3554
        %v3556 = vpop.f32.mrb[0].mxu0
        %v3557 = vpop.f32.mrb[0].mxu0
        %v3558 = vadd.f32 0.0, %v3557
        %v3559 = vpop.f32.mrb[0].mxu0
        %3560 = vmatprep.mubr.bf16.mxu0 %v2587
        %3561 = vmatmul.mubr.bf16.gmra.mrb[0].mxu0 %v2035
        %v3562 = vpop.f32.mrb[0].mxu0
        %v3563 = vadd.f32 0.0, %v3562
        %v3564 = vpop.f32.mrb[0].mxu0
        %v3565 = vpop.f32.mrb[0].mxu0
        %v3566 = vadd.f32 0.0, %v3565
        %v3567 = vpop.f32.mrb[0].mxu0
        %3568 = vmatprep.mubr.bf16.mxu0 %v2590
        %3569 = vmatmul.mubr.bf16.gmra.mrb[0].mxu0 %v2037
        %v3570 = vpop.f32.mrb[0].mxu0
        %v3571 = vadd.f32 0.0, %v3570
        %v3572 = vpop.f32.mrb[0].mxu0
        %v3573 = vpop.f32.mrb[0].mxu0
        %v3574 = vadd.f32 0.0, %v3573
        %v3575 = vpop.f32.mrb[0].mxu0
        %3576 = vmatprep.mubr.bf16.mxu0 %v2593
        %3577 = vmatmul.mubr.bf16.gmra.mrb[0].mxu0 %v2039
        %v3578 = vpop.f32.mrb[0].mxu0
        %v3579 = vadd.f32 0.0, %v3578
        %v3580 = vpop.f32.mrb[0].mxu0
        %v3581 = vpop.f32.mrb[0].mxu0
        %v3582 = vadd.f32 0.0, %v3581
        %v3583 = vpop.f32.mrb[0].mxu0
        %3584 = vmatprep.mubr.bf16.mxu0 %v2596
        %3585 = vmatmul.mubr.bf16.gmra.mrb[0].mxu0 %v2041
        %v3586 = vpop.f32.mrb[0].mxu0
        %v3587 = vadd.f32 0.0, %v3586
        %v3588 = vpop.f32.mrb[0].mxu0
        %v3589 = vpop.f32.mrb[0].mxu0
        %v3590 = vadd.f32 0.0, %v3589
        %v3591 = vpop.f32.mrb[0].mxu0
        %3592 = vmatprep.mubr.bf16.mxu0 %v2599
        %3593 = vmatmul.mubr.bf16.gmra.mrb[0].mxu0 %v2043
        %v3594 = vpop.f32.mrb[0].mxu0
        %v3595 = vadd.f32 0.0, %v3594
        %v3596 = vpop.f32.mrb[0].mxu0
        %v3597 = vpop.f32.mrb[0].mxu0
        %v3598 = vadd.f32 0.0, %v3597
        %v3599 = vpop.f32.mrb[0].mxu0
        %3600 = vmatprep.mubr.bf16.mxu0 %v2602
        %3601 = vmatmul.mubr.bf16.gmra.mrb[0].mxu0 %v2045
        %v3602 = vpop.f32.mrb[0].mxu0
        %v3603 = vadd.f32 0.0, %v3602
        %v3604 = vpop.f32.mrb[0].mxu0
        %v3605 = vpop.f32.mrb[0].mxu0
        %v3606 = vadd.f32 0.0, %v3605
        %v3607 = vpop.f32.mrb[0].mxu0
        %3608 = vmatprep.mubr.bf16.mxu0 %v2605
        %3609 = vmatmul.mubr.bf16.gmra.mrb[0].mxu0 %v2047
        %v3610 = vpop.f32.mrb[0].mxu0
        %v3611 = vadd.f32 0.0, %v3610
        %v3612 = vpop.f32.mrb[0].mxu0
        %v3613 = vpop.f32.mrb[0].mxu0
        %v3614 = vadd.f32 0.0, %v3613
        %v3615 = vpop.f32.mrb[0].mxu0
        %3616 = vmatprep.mubr.bf16.mxu0 %v2608
        %3617 = vmatmul.mubr.bf16.gmra.mrb[0].mxu0 %v2049
        %v3618 = vpop.f32.mrb[0].mxu0
        %v3619 = vadd.f32 0.0, %v3618
        %v3620 = vpop.f32.mrb[0].mxu0
        %v3621 = vpop.f32.mrb[0].mxu0
        %v3622 = vadd.f32 0.0, %v3621
        %v3623 = vpop.f32.mrb[0].mxu0
        %3624 = vmatprep.mubr.bf16.mxu0 %v2611
        %3625 = vmatmul.mubr.bf16.gmra.mrb[0].mxu0 %v2051
        %v3626 = vpop.f32.mrb[0].mxu0
        %v3627 = vadd.f32 0.0, %v3626
        %v3628 = vpop.f32.mrb[0].mxu0
        %v3629 = vpop.f32.mrb[0].mxu0
        %v3630 = vadd.f32 0.0, %v3629
        %v3631 = vpop.f32.mrb[0].mxu0
        %3632 = vmatprep.mubr.bf16.mxu0 %v2614
        %3633 = vmatmul.mubr.bf16.gmra.mrb[0].mxu0 %v2053
        %v3634 = vpop.f32.mrb[0].mxu0
        %v3635 = vadd.f32 0.0, %v3634
        %v3636 = vpop.f32.mrb[0].mxu0
        %v3637 = vpop.f32.mrb[0].mxu0
        %v3638 = vadd.f32 0.0, %v3637
        %v3639 = vpop.f32.mrb[0].mxu0
        %3640 = vmatprep.mubr.bf16.mxu0 %v2617
        %3641 = vmatmul.mubr.bf16.gmra.mrb[0].mxu0 %v2055
        %v3642 = vpop.f32.mrb[0].mxu0
        %v3643 = vadd.f32 0.0, %v3642
        %v3644 = vpop.f32.mrb[0].mxu0
        %v3645 = vpop.f32.mrb[0].mxu0
        %v3646 = vadd.f32 0.0, %v3645
        %v3647 = vpop.f32.mrb[0].mxu0
        %3648 = vmatprep.mubr.bf16.mxu0 %v2620
        %3649 = vmatmul.mubr.bf16.gmra.mrb[0].mxu0 %v2057
        %v3650 = vpop.f32.mrb[0].mxu0
        %v3651 = vadd.f32 0.0, %v3650
        %v3652 = vpop.f32.mrb[0].mxu0
        %v3653 = vpop.f32.mrb[0].mxu0
        %v3654 = vadd.f32 0.0, %v3653
        %v3655 = vpop.f32.mrb[0].mxu0
        %3656 = vmatprep.mubr.bf16.mxu0 %v2623
        %3657 = vmatmul.mubr.bf16.gmra.mrb[0].mxu0 %v2059
        %v3658 = vpop.f32.mrb[0].mxu0
        %v3659 = vadd.f32 0.0, %v3658
        %v3660 = vpop.f32.mrb[0].mxu0
        %v3661 = vpop.f32.mrb[0].mxu0
        %v3662 = vadd.f32 0.0, %v3661
        %v3663 = vpop.f32.mrb[0].mxu0
        %3664 = vmatprep.mubr.bf16.mxu0 %v2626
        %3665 = vmatmul.mubr.bf16.gmra.mrb[0].mxu0 %v2061
        %v3666 = vpop.f32.mrb[0].mxu0
        %v3667 = vadd.f32 0.0, %v3666
        %v3668 = vpop.f32.mrb[0].mxu0
        %v3669 = vpop.f32.mrb[0].mxu0
        %v3670 = vadd.f32 0.0, %v3669
        %v3671 = vpop.f32.mrb[0].mxu0
        %3672 = vmatprep.mubr.bf16.mxu0 %v2629
        %3673 = vmatmul.mubr.bf16.gmra.mrb[0].mxu0 %v2063
        %v3674 = vpop.f32.mrb[0].mxu0
        %v3675 = vadd.f32 0.0, %v3674
        %v3676 = vpop.f32.mrb[0].mxu0
        %v3677 = vpop.f32.mrb[0].mxu0
        %v3678 = vadd.f32 0.0, %v3677
        %v3679 = vpop.f32.mrb[0].mxu0
        %3680 = vmatprep.mubr.bf16.mxu0 %v2632
        %3681 = vmatmul.mubr.bf16.gmra.mrb[0].mxu0 %v2065
        %v3682 = vpop.f32.mrb[0].mxu0
        %v3683 = vadd.f32 0.0, %v3682
        %v3684 = vpop.f32.mrb[0].mxu0
        %v3685 = vpop.f32.mrb[0].mxu0
        %v3686 = vadd.f32 0.0, %v3685
        %v3687 = vpop.f32.mrb[0].mxu0
        %3688 = vmatprep.mubr.bf16.mxu0 %v2635
        %3689 = vmatmul.mubr.bf16.gmra.mrb[0].mxu0 %v2067
        %v3690 = vpop.f32.mrb[0].mxu0
        %v3691 = vadd.f32 0.0, %v3690
        %v3692 = vpop.f32.mrb[0].mxu0
        %v3693 = vpop.f32.mrb[0].mxu0
        %v3694 = vadd.f32 0.0, %v3693
        %v3695 = vpop.f32.mrb[0].mxu0
        %3696 = vmatprep.mubr.bf16.mxu0 %v2638
        %3697 = vmatmul.mubr.bf16.gmra.mrb[0].mxu0 %v2069
        %v3698 = vpop.f32.mrb[0].mxu0
        %v3699 = vadd.f32 0.0, %v3698
        %v3700 = vpop.f32.mrb[0].mxu0
        %v3701 = vpop.f32.mrb[0].mxu0
        %v3702 = vadd.f32 0.0, %v3701
        %v3703 = vpop.f32.mrb[0].mxu0
        %3704 = vmatprep.mubr.bf16.mxu0 %v2641
        %3705 = vmatmul.mubr.bf16.gmra.mrb[0].mxu0 %v2071
        %v3706 = vpop.f32.mrb[0].mxu0
        %v3707 = vadd.f32 0.0, %v3706
        %v3708 = vpop.f32.mrb[0].mxu0
        %v3709 = vpop.f32.mrb[0].mxu0
        %v3710 = vadd.f32 0.0, %v3709
        %v3711 = vpop.f32.mrb[0].mxu0
        %3712 = vmatprep.mubr.bf16.mxu0 %v2644
        %3713 = vmatmul.mubr.bf16.gmra.mrb[0].mxu0 %v2073
        %v3714 = vpop.f32.mrb[0].mxu0
        %v3715 = vadd.f32 0.0, %v3714
        %v3716 = vpop.f32.mrb[0].mxu0
        %v3717 = vpop.f32.mrb[0].mxu0
        %v3718 = vadd.f32 0.0, %v3717
        %v3719 = vpop.f32.mrb[0].mxu0
        %3720 = vmatprep.mubr.bf16.mxu0 %v2647
        %3721 = vmatmul.mubr.bf16.gmra.mrb[0].mxu0 %v2075
        %v3722 = vpop.f32.mrb[0].mxu0
        %v3723 = vadd.f32 0.0, %v3722
        %v3724 = vpop.f32.mrb[0].mxu0
        %v3725 = vpop.f32.mrb[0].mxu0
        %v3726 = vadd.f32 0.0, %v3725
        %v3727 = vpop.f32.mrb[0].mxu0
        %3728 = vmatprep.mubr.bf16.mxu0 %v2650
        %3729 = vmatmul.mubr.bf16.gmra.mrb[0].mxu0 %v2077
        %v3730 = vpop.f32.mrb[0].mxu0
        %v3731 = vadd.f32 0.0, %v3730
        %v3732 = vpop.f32.mrb[0].mxu0
        %v3733 = vpop.f32.mrb[0].mxu0
        %v3734 = vadd.f32 0.0, %v3733
        %v3735 = vpop.f32.mrb[0].mxu0
        %3736 = vmatprep.mubr.bf16.mxu0 %v2653
        %3737 = vmatmul.mubr.bf16.gmra.mrb[0].mxu0 %v2079
        %v3738 = vpop.f32.mrb[0].mxu0
        %v3739 = vadd.f32 0.0, %v3738
        %v3740 = vpop.f32.mrb[0].mxu0
        %v3741 = vpop.f32.mrb[0].mxu0
        %v3742 = vadd.f32 0.0, %v3741
        %v3743 = vpop.f32.mrb[0].mxu0
        %3744 = vmatprep.mubr.bf16.mxu0 %v2656
        %3745 = vmatmul.mubr.bf16.gmra.mrb[0].mxu0 %v2081
        %v3746 = vpop.f32.mrb[0].mxu0
        %v3747 = vadd.f32 0.0, %v3746
        %v3748 = vpop.f32.mrb[0].mxu0
        %v3749 = vpop.f32.mrb[0].mxu0
        %v3750 = vadd.f32 0.0, %v3749
        %v3751 = vpop.f32.mrb[0].mxu0
        %3752 = vmatprep.mubr.bf16.mxu0 %v2659
        %3753 = vmatmul.mubr.bf16.gmra.mrb[0].mxu0 %v2083
        %v3754 = vpop.f32.mrb[0].mxu0
        %v3755 = vadd.f32 0.0, %v3754
        %v3756 = vpop.f32.mrb[0].mxu0
        %v3757 = vpop.f32.mrb[0].mxu0
        %v3758 = vadd.f32 0.0, %v3757
        %v3759 = vpop.f32.mrb[0].mxu0
        %3760 = vmatprep.mubr.bf16.mxu0 %v2662
        %3761 = vmatmul.mubr.bf16.gmra.mrb[0].mxu0 %v2085
        %v3762 = vpop.f32.mrb[0].mxu0
        %v3763 = vadd.f32 0.0, %v3762
        %v3764 = vpop.f32.mrb[0].mxu0
        %v3765 = vpop.f32.mrb[0].mxu0
        %v3766 = vadd.f32 0.0, %v3765
        %v3767 = vpop.f32.mrb[0].mxu0
        %3768 = vmatprep.mubr.bf16.mxu0 %v2665
        %3769 = vmatmul.mubr.bf16.gmra.mrb[0].mxu0 %v2087
        %v3770 = vpop.f32.mrb[0].mxu0
        %v3771 = vadd.f32 0.0, %v3770
        %v3772 = vpop.f32.mrb[0].mxu0
        %v3773 = vpop.f32.mrb[0].mxu0
        %v3774 = vadd.f32 0.0, %v3773
        %v3775 = vpop.f32.mrb[0].mxu0
        %3776 = vmatprep.mubr.bf16.mxu0 %v2668
        %3777 = vmatmul.mubr.bf16.gmra.mrb[0].mxu0 %v2089
        %v3778 = vpop.f32.mrb[0].mxu0
        %v3779 = vadd.f32 0.0, %v3778
        %v3780 = vpop.f32.mrb[0].mxu0
        %v3781 = vpop.f32.mrb[0].mxu0
        %v3782 = vadd.f32 0.0, %v3781
        %v3783 = vpop.f32.mrb[0].mxu0
        %3784 = vmatprep.mubr.bf16.mxu0 %v2671
        %3785 = vmatmul.mubr.bf16.gmra.mrb[0].mxu0 %v2091
        %v3786 = vpop.f32.mrb[0].mxu0
        %v3787 = vadd.f32 0.0, %v3786
        %v3788 = vpop.f32.mrb[0].mxu0
        %v3789 = vpop.f32.mrb[0].mxu0
        %v3790 = vadd.f32 0.0, %v3789
        %v3791 = vpop.f32.mrb[0].mxu0
        %3792 = vmatprep.mubr.bf16.mxu0 %v2674
        %3793 = vmatmul.mubr.bf16.gmra.mrb[0].mxu0 %v2093
        %v3794 = vpop.f32.mrb[0].mxu0
        %v3795 = vadd.f32 0.0, %v3794
        %v3796 = vpop.f32.mrb[0].mxu0
        %v3797 = vpop.f32.mrb[0].mxu0
        %v3798 = vadd.f32 0.0, %v3797
        %v3799 = vpop.f32.mrb[0].mxu0
        %3800 = vmatprep.mubr.bf16.mxu0 %v2677
        %3801 = vmatmul.mubr.bf16.gmra.mrb[0].mxu0 %v2095
        %v3802 = vpop.f32.mrb[0].mxu0
        %v3803 = vadd.f32 0.0, %v3802
        %v3804 = vpop.f32.mrb[0].mxu0
        %v3805 = vpop.f32.mrb[0].mxu0
        %v3806 = vadd.f32 0.0, %v3805
        %v3807 = vpop.f32.mrb[0].mxu0
        %3808 = vmatprep.mubr.bf16.mxu0 %v2680
        %3809 = vmatmul.mubr.bf16.gmra.mrb[0].mxu0 %v2097
        %v3810 = vpop.f32.mrb[0].mxu0
        %v3811 = vadd.f32 0.0, %v3810
        %v3812 = vpop.f32.mrb[0].mxu0
        %v3813 = vpop.f32.mrb[0].mxu0
        %v3814 = vadd.f32 0.0, %v3813
        %v3815 = vpop.f32.mrb[0].mxu0
        %3816 = vmatprep.mubr.bf16.mxu0 %v2683
        %3817 = vmatmul.mubr.bf16.gmra.mrb[0].mxu0 %v2099
        %v3818 = vpop.f32.mrb[0].mxu0
        %v3819 = vadd.f32 0.0, %v3818
        %v3820 = vpop.f32.mrb[0].mxu0
        %v3821 = vpop.f32.mrb[0].mxu0
        %v3822 = vadd.f32 0.0, %v3821
        %v3823 = vpop.f32.mrb[0].mxu0
        %3824 = vmatprep.mubr.bf16.mxu0 %v2686
        %3825 = vmatmul.mubr.bf16.gmra.mrb[0].mxu0 %v2101
        %v3826 = vpop.f32.mrb[0].mxu0
        %v3827 = vadd.f32 0.0, %v3826
        %v3828 = vpop.f32.mrb[0].mxu0
        %v3829 = vpop.f32.mrb[0].mxu0
        %v3830 = vadd.f32 0.0, %v3829
        %v3831 = vpop.f32.mrb[0].mxu0
        %3832 = vmatprep.mubr.bf16.mxu0 %v2689
        %3833 = vmatmul.mubr.bf16.gmra.mrb[0].mxu0 %v2103
        %v3834 = vpop.f32.mrb[0].mxu0
        %v3835 = vadd.f32 0.0, %v3834
        %v3836 = vpop.f32.mrb[0].mxu0
        %v3837 = vpop.f32.mrb[0].mxu0
        %v3838 = vadd.f32 0.0, %v3837
        %v3839 = vpop.f32.mrb[0].mxu0
        %3840 = vmatprep.mubr.bf16.mxu0 %v2692
        %3841 = vmatmul.mubr.bf16.gmra.mrb[0].mxu0 %v2105
        %v3842 = vpop.f32.mrb[0].mxu0
        %v3843 = vadd.f32 0.0, %v3842
        %v3844 = vpop.f32.mrb[0].mxu0
        %v3845 = vpop.f32.mrb[0].mxu0
        %v3846 = vadd.f32 0.0, %v3845
        %v3847 = vpop.f32.mrb[0].mxu0
        %3848 = vmatprep.mubr.bf16.mxu0 %v2695
        %3849 = vmatmul.mubr.bf16.gmra.mrb[0].mxu0 %v2107
        %v3850 = vpop.f32.mrb[0].mxu0
        %v3851 = vadd.f32 0.0, %v3850
        %v3852 = vpop.f32.mrb[0].mxu0
        %v3853 = vpop.f32.mrb[0].mxu0
        %v3854 = vadd.f32 0.0, %v3853
        %v3855 = vpop.f32.mrb[0].mxu0
        %3856 = vmatprep.mubr.bf16.mxu0 %v2698
        %3857 = vmatmul.mubr.bf16.gmra.mrb[0].mxu0 %v2109
        %v3858 = vpop.f32.mrb[0].mxu0
        %v3859 = vadd.f32 0.0, %v3858
        %v3860 = vpop.f32.mrb[0].mxu0
        %v3861 = vpop.f32.mrb[0].mxu0
        %v3862 = vadd.f32 0.0, %v3861
        %v3863 = vpop.f32.mrb[0].mxu0
        %3864 = vmatprep.mubr.bf16.mxu0 %v2701
        %3865 = vmatmul.mubr.bf16.gmra.mrb[0].mxu0 %v2111
        %v3866 = vpop.f32.mrb[0].mxu0
        %v3867 = vadd.f32 0.0, %v3866
        %v3868 = vpop.f32.mrb[0].mxu0
        %v3869 = vpop.f32.mrb[0].mxu0
        %v3870 = vadd.f32 0.0, %v3869
        %v3871 = vpop.f32.mrb[0].mxu0
        %3872 = vmatprep.mubr.bf16.mxu0 %v2704
        %3873 = vmatmul.mubr.bf16.gmra.mrb[0].mxu0 %v2113
        %v3874 = vpop.f32.mrb[0].mxu0
        %v3875 = vadd.f32 0.0, %v3874
        %v3876 = vpop.f32.mrb[0].mxu0
        %v3877 = vpop.f32.mrb[0].mxu0
        %v3878 = vadd.f32 0.0, %v3877
        %v3879 = vpop.f32.mrb[0].mxu0
        %3880 = vmatprep.mubr.bf16.mxu0 %v2707
        %3881 = vmatmul.mubr.bf16.gmra.mrb[0].mxu0 %v2115
        %v3882 = vpop.f32.mrb[0].mxu0
        %v3883 = vadd.f32 0.0, %v3882
        %v3884 = vpop.f32.mrb[0].mxu0
        %v3885 = vpop.f32.mrb[0].mxu0
        %v3886 = vadd.f32 0.0, %v3885
        %v3887 = vpop.f32.mrb[0].mxu0
        %3888 = vmatprep.mubr.bf16.mxu0 %v2710
        %3889 = vmatmul.mubr.bf16.gmra.mrb[0].mxu0 %v2117
        %v3890 = vpop.f32.mrb[0].mxu0
        %v3891 = vadd.f32 0.0, %v3890
        %v3892 = vpop.f32.mrb[0].mxu0
        %v3893 = vpop.f32.mrb[0].mxu0
        %v3894 = vadd.f32 0.0, %v3893
        %v3895 = vpop.f32.mrb[0].mxu0
        %3896 = vmatprep.mubr.bf16.mxu0 %v2713
        %3897 = vmatmul.mubr.bf16.gmra.mrb[0].mxu0 %v2119
        %v3898 = vpop.f32.mrb[0].mxu0
        %v3899 = vadd.f32 0.0, %v3898
        %v3900 = vpop.f32.mrb[0].mxu0
        %v3901 = vpop.f32.mrb[0].mxu0
        %v3902 = vadd.f32 0.0, %v3901
        %v3903 = vpop.f32.mrb[0].mxu0
        %3904 = vmatprep.mubr.bf16.mxu0 %v2716
        %3905 = vmatmul.mubr.bf16.gmra.mrb[0].mxu0 %v2121
        %v3906 = vpop.f32.mrb[0].mxu0
        %v3907 = vadd.f32 0.0, %v3906
        %v3908 = vpop.f32.mrb[0].mxu0
        %v3909 = vpop.f32.mrb[0].mxu0
        %v3910 = vadd.f32 0.0, %v3909
        %v3911 = vpop.f32.mrb[0].mxu0
        %3912 = vmatprep.mubr.bf16.mxu0 %v2719
        %3913 = vmatmul.mubr.bf16.gmra.mrb[0].mxu0 %v2123
        %v3914 = vpop.f32.mrb[0].mxu0
        %v3915 = vadd.f32 0.0, %v3914
        %v3916 = vpop.f32.mrb[0].mxu0
        %v3917 = vpop.f32.mrb[0].mxu0
        %v3918 = vadd.f32 0.0, %v3917
        %v3919 = vpop.f32.mrb[0].mxu0
        %3920 = vmatprep.mubr.bf16.mxu0 %v2722
        %3921 = vmatmul.mubr.bf16.gmra.mrb[0].mxu0 %v2125
        %v3922 = vpop.f32.mrb[0].mxu0
        %v3923 = vadd.f32 0.0, %v3922
        %v3924 = vpop.f32.mrb[0].mxu0
        %v3925 = vpop.f32.mrb[0].mxu0
        %v3926 = vadd.f32 0.0, %v3925
        %v3927 = vpop.f32.mrb[0].mxu0
        %3928 = vmatprep.mubr.bf16.mxu0 %v2725
        %3929 = vmatmul.mubr.bf16.gmra.mrb[0].mxu0 %v2127
        %v3930 = vpop.f32.mrb[0].mxu0
        %v3931 = vadd.f32 0.0, %v3930
        %v3932 = vpop.f32.mrb[0].mxu0
        %v3933 = vpop.f32.mrb[0].mxu0
        %v3934 = vadd.f32 0.0, %v3933
        %v3935 = vpop.f32.mrb[0].mxu0
        %3936 = vmatprep.mubr.bf16.mxu0 %v2728
        %3937 = vmatmul.mubr.bf16.gmra.mrb[0].mxu0 %v2129
        %v3938 = vpop.f32.mrb[0].mxu0
        %v3939 = vadd.f32 0.0, %v3938
        %v3940 = vpop.f32.mrb[0].mxu0
        %v3941 = vpop.f32.mrb[0].mxu0
        %v3942 = vadd.f32 0.0, %v3941
        %v3943 = vpop.f32.mrb[0].mxu0
        %3944 = vmatprep.mubr.bf16.mxu0 %v2731
        %3945 = vmatmul.mubr.bf16.gmra.mrb[0].mxu0 %v2131
        %v3946 = vpop.f32.mrb[0].mxu0
        %v3947 = vadd.f32 0.0, %v3946
        %v3948 = vpop.f32.mrb[0].mxu0
        %v3949 = vpop.f32.mrb[0].mxu0
        %v3950 = vadd.f32 0.0, %v3949
        %v3951 = vpop.f32.mrb[0].mxu0
        %3952 = vmatprep.mubr.bf16.mxu0 %v2734
        %3953 = vmatmul.mubr.bf16.gmra.mrb[0].mxu0 %v2133
        %v3954 = vpop.f32.mrb[0].mxu0
        %v3955 = vadd.f32 0.0, %v3954
        %v3956 = vpop.f32.mrb[0].mxu0
        %v3957 = vpop.f32.mrb[0].mxu0
        %v3958 = vadd.f32 0.0, %v3957
        %v3959 = vpop.f32.mrb[0].mxu0
        %3960 = vmatprep.mubr.bf16.mxu0 %v2737
        %3961 = vmatmul.mubr.bf16.gmra.mrb[0].mxu0 %v2135
        %v3962 = vpop.f32.mrb[0].mxu0
        %v3963 = vadd.f32 0.0, %v3962
        %v3964 = vpop.f32.mrb[0].mxu0
        %v3965 = vpop.f32.mrb[0].mxu0
        %v3966 = vadd.f32 0.0, %v3965
        %v3967 = vpop.f32.mrb[0].mxu0
        %3968 = vmatprep.mubr.bf16.mxu0 %v2740
        %3969 = vmatmul.mubr.bf16.gmra.mrb[0].mxu0 %v2137
        %v3970 = vpop.f32.mrb[0].mxu0
        %v3971 = vadd.f32 0.0, %v3970
        %v3972 = vpop.f32.mrb[0].mxu0
        %v3973 = vpop.f32.mrb[0].mxu0
        %v3974 = vadd.f32 0.0, %v3973
        %v3975 = vpop.f32.mrb[0].mxu0
        %3976 = vmatprep.mubr.bf16.mxu0 %v2743
        %3977 = vmatmul.mubr.bf16.gmra.mrb[0].mxu0 %v2139
        %v3978 = vpop.f32.mrb[0].mxu0
        %v3979 = vadd.f32 0.0, %v3978
        %v3980 = vpop.f32.mrb[0].mxu0
        %v3981 = vpop.f32.mrb[0].mxu0
        %v3982 = vadd.f32 0.0, %v3981
        %v3983 = vpop.f32.mrb[0].mxu0
        %3984 = vmatprep.mubr.bf16.mxu0 %v2746
        %3985 = vmatmul.mubr.bf16.gmra.mrb[0].mxu0 %v2141
        %v3986 = vpop.f32.mrb[0].mxu0
        %v3987 = vadd.f32 0.0, %v3986
        %v3988 = vpop.f32.mrb[0].mxu0
        %v3989 = vpop.f32.mrb[0].mxu0
        %v3990 = vpop.f32.mrb[0].mxu0
        %3991 = vdwg.mxu0
        %3992 = vst [vmem:[#allocation2] sm:$0xff] %v2787
        %3993 = vst [vmem:[#allocation2 + $0x8] sm:$0xff] %v2790
        %3994 = vst [vmem:[#allocation2 + $0x10] sm:$0xff] %v2795
        %3995 = vst [vmem:[#allocation2 + $0x18] sm:$0xff] %v2798
        %3996 = vst [vmem:[#allocation2 + $0x20] sm:$0xff] %v2803
        %3997 = vst [vmem:[#allocation2 + $0x28] sm:$0xff] %v2806
        %3998 = vst [vmem:[#allocation2 + $0x30] sm:$0xff] %v2811
        %3999 = vst [vmem:[#allocation2 + $0x38] sm:$0xff] %v2814
        %4000 = vst [vmem:[#allocation2 + $0x40] sm:$0xff] %v2819
        %4001 = vst [vmem:[#allocation2 + $0x48] sm:$0xff] %v2822
        %4002 = vst [vmem:[#allocation2 + $0x50] sm:$0xff] %v2827
        %4003 = vst [vmem:[#allocation2 + $0x58] sm:$0xff] %v2830
        %4004 = vst [vmem:[#allocation2 + $0x60] sm:$0xff] %v2835
        %4005 = vst [vmem:[#allocation2 + $0x68] sm:$0xff] %v2838
        %4006 = vst [vmem:[#allocation2 + $0x70] sm:$0xff] %v2843
        %4007 = vst [vmem:[#allocation2 + $0x78] sm:$0xff] %v2846
        %4008 = vst [vmem:[#allocation2 + $0x80] sm:$0xff] %v2851
        %4009 = vst [vmem:[#allocation2 + $0x88] sm:$0xff] %v2854
        %4010 = vst [vmem:[#allocation2 + $0x90] sm:$0xff] %v2859
        %4011 = vst [vmem:[#allocation2 + $0x98] sm:$0xff] %v2862
        %4012 = vst [vmem:[#allocation2 + $0xa0] sm:$0xff] %v2867
        %4013 = vst [vmem:[#allocation2 + $0xa8] sm:$0xff] %v2870
        %4014 = vst [vmem:[#allocation2 + $0xb0] sm:$0xff] %v2875
        %4015 = vst [vmem:[#allocation2 + $0xb8] sm:$0xff] %v2878
        %4016 = vst [vmem:[#allocation2 + $0xc0] sm:$0xff] %v2883
        %4017 = vst [vmem:[#allocation2 + $0xc8] sm:$0xff] %v2886
        %4018 = vst [vmem:[#allocation2 + $0xd0] sm:$0xff] %v2891
        %4019 = vst [vmem:[#allocation2 + $0xd8] sm:$0xff] %v2894
        %4020 = vst [vmem:[#allocation2 + $0xe0] sm:$0xff] %v2899
        %4021 = vst [vmem:[#allocation2 + $0xe8] sm:$0xff] %v2902
        %4022 = vst [vmem:[#allocation2 + $0xf0] sm:$0xff] %v2907
        %4023 = vst [vmem:[#allocation2 + $0xf8] sm:$0xff] %v2910
        %4024 = vst [vmem:[#allocation2 + $0x100] sm:$0xff] %v2915
        %4025 = vst [vmem:[#allocation2 + $0x108] sm:$0xff] %v2918
        %4026 = vst [vmem:[#allocation2 + $0x110] sm:$0xff] %v2923
        %4027 = vst [vmem:[#allocation2 + $0x118] sm:$0xff] %v2926
        %4028 = vst [vmem:[#allocation2 + $0x120] sm:$0xff] %v2931
        %4029 = vst [vmem:[#allocation2 + $0x128] sm:$0xff] %v2934
        %4030 = vst [vmem:[#allocation2 + $0x130] sm:$0xff] %v2939
        %4031 = vst [vmem:[#allocation2 + $0x138] sm:$0xff] %v2942
        %4032 = vst [vmem:[#allocation2 + $0x140] sm:$0xff] %v2947
        %4033 = vst [vmem:[#allocation2 + $0x148] sm:$0xff] %v2950
        %4034 = vst [vmem:[#allocation2 + $0x150] sm:$0xff] %v2955
        %4035 = vst [vmem:[#allocation2 + $0x158] sm:$0xff] %v2958
        %4036 = vst [vmem:[#allocation2 + $0x160] sm:$0xff] %v2963
        %4037 = vst [vmem:[#allocation2 + $0x168] sm:$0xff] %v2966
        %4038 = vst [vmem:[#allocation2 + $0x170] sm:$0xff] %v2971
        %4039 = vst [vmem:[#allocation2 + $0x178] sm:$0xff] %v2974
        %4040 = vst [vmem:[#allocation2 + $0x180] sm:$0xff] %v2979
        %4041 = vst [vmem:[#allocation2 + $0x188] sm:$0xff] %v2982
        %4042 = vst [vmem:[#allocation2 + $0x190] sm:$0xff] %v2987
        %4043 = vst [vmem:[#allocation2 + $0x198] sm:$0xff] %v2990
        %4044 = vst [vmem:[#allocation2 + $0x1a0] sm:$0xff] %v2995
        %4045 = vst [vmem:[#allocation2 + $0x1a8] sm:$0xff] %v2998
        %4046 = vst [vmem:[#allocation2 + $0x1b0] sm:$0xff] %v3003
        %4047 = vst [vmem:[#allocation2 + $0x1b8] sm:$0xff] %v3006
        %4048 = vst [vmem:[#allocation2 + $0x1c0] sm:$0xff] %v3011
        %4049 = vst [vmem:[#allocation2 + $0x1c8] sm:$0xff] %v3014
        %4050 = vst [vmem:[#allocation2 + $0x1d0] sm:$0xff] %v3019
        %4051 = vst [vmem:[#allocation2 + $0x1d8] sm:$0xff] %v3022
        %4052 = vst [vmem:[#allocation2 + $0x1e0] sm:$0xff] %v3027
        %4053 = vst [vmem:[#allocation2 + $0x1e8] sm:$0xff] %v3030
        %4054 = vst [vmem:[#allocation2 + $0x1f0] sm:$0xff] %v3035
        %4055 = vst [vmem:[#allocation2 + $0x1f8] sm:$0xff] %v3038
        %4056 = vst [vmem:[#allocation2 + $0x200] sm:$0xff] %v3043
        %4057 = vst [vmem:[#allocation2 + $0x208] sm:$0xff] %v3046
        %4058 = vst [vmem:[#allocation2 + $0x210] sm:$0xff] %v3051
        %4059 = vst [vmem:[#allocation2 + $0x218] sm:$0xff] %v3054
        %4060 = vst [vmem:[#allocation2 + $0x220] sm:$0xff] %v3059
        %4061 = vst [vmem:[#allocation2 + $0x228] sm:$0xff] %v3062
        %4062 = vst [vmem:[#allocation2 + $0x230] sm:$0xff] %v3067
        %4063 = vst [vmem:[#allocation2 + $0x238] sm:$0xff] %v3070
        %4064 = vst [vmem:[#allocation2 + $0x240] sm:$0xff] %v3075
        %4065 = vst [vmem:[#allocation2 + $0x248] sm:$0xff] %v3078
        %4066 = vst [vmem:[#allocation2 + $0x250] sm:$0xff] %v3083
        %4067 = vst [vmem:[#allocation2 + $0x258] sm:$0xff] %v3086
        %4068 = vst [vmem:[#allocation2 + $0x260] sm:$0xff] %v3091
        %4069 = vst [vmem:[#allocation2 + $0x268] sm:$0xff] %v3094
        %4070 = vst [vmem:[#allocation2 + $0x270] sm:$0xff] %v3099
        %4071 = vst [vmem:[#allocation2 + $0x278] sm:$0xff] %v3102
        %4072 = vst [vmem:[#allocation2 + $0x280] sm:$0xff] %v3107
        %4073 = vst [vmem:[#allocation2 + $0x288] sm:$0xff] %v3110
        %4074 = vst [vmem:[#allocation2 + $0x290] sm:$0xff] %v3115
        %4075 = vst [vmem:[#allocation2 + $0x298] sm:$0xff] %v3118
        %4076 = vst [vmem:[#allocation2 + $0x2a0] sm:$0xff] %v3123
        %4077 = vst [vmem:[#allocation2 + $0x2a8] sm:$0xff] %v3126
        %4078 = vst [vmem:[#allocation2 + $0x2b0] sm:$0xff] %v3131
        %4079 = vst [vmem:[#allocation2 + $0x2b8] sm:$0xff] %v3134
        %4080 = vst [vmem:[#allocation2 + $0x2c0] sm:$0xff] %v3139
        %4081 = vst [vmem:[#allocation2 + $0x2c8] sm:$0xff] %v3142
        %4082 = vst [vmem:[#allocation2 + $0x2d0] sm:$0xff] %v3147
        %4083 = vst [vmem:[#allocation2 + $0x2d8] sm:$0xff] %v3150
        %4084 = vst [vmem:[#allocation2 + $0x2e0] sm:$0xff] %v3155
        %4085 = vst [vmem:[#allocation2 + $0x2e8] sm:$0xff] %v3158
        %4086 = vst [vmem:[#allocation2 + $0x2f0] sm:$0xff] %v3163
        %4087 = vst [vmem:[#allocation2 + $0x2f8] sm:$0xff] %v3166
        %4088 = vst [vmem:[#allocation2 + $0x300] sm:$0xff] %v3171
        %4089 = vst [vmem:[#allocation2 + $0x308] sm:$0xff] %v3174
        %4090 = vst [vmem:[#allocation2 + $0x310] sm:$0xff] %v3179
        %4091 = vst [vmem:[#allocation2 + $0x318] sm:$0xff] %v3182
        %4092 = vst [vmem:[#allocation2 + $0x320] sm:$0xff] %v3187
        %4093 = vst [vmem:[#allocation2 + $0x328] sm:$0xff] %v3190
        %4094 = vst [vmem:[#allocation2 + $0x330] sm:$0xff] %v3195
        %4095 = vst [vmem:[#allocation2 + $0x338] sm:$0xff] %v3198
        %4096 = vst [vmem:[#allocation2 + $0x340] sm:$0xff] %v3203
        %4097 = vst [vmem:[#allocation2 + $0x348] sm:$0xff] %v3206
        %4098 = vst [vmem:[#allocation2 + $0x350] sm:$0xff] %v3211
        %4099 = vst [vmem:[#allocation2 + $0x358] sm:$0xff] %v3214
        %4100 = vst [vmem:[#allocation2 + $0x360] sm:$0xff] %v3219
        %4101 = vst [vmem:[#allocation2 + $0x368] sm:$0xff] %v3222
        %4102 = vst [vmem:[#allocation2 + $0x370] sm:$0xff] %v3227
        %4103 = vst [vmem:[#allocation2 + $0x378] sm:$0xff] %v3230
        %4104 = vst [vmem:[#allocation2 + $0x380] sm:$0xff] %v3235
        %4105 = vst [vmem:[#allocation2 + $0x388] sm:$0xff] %v3238
        %4106 = vst [vmem:[#allocation2 + $0x390] sm:$0xff] %v3243
        %4107 = vst [vmem:[#allocation2 + $0x398] sm:$0xff] %v3246
        %4108 = vst [vmem:[#allocation2 + $0x3a0] sm:$0xff] %v3251
        %4109 = vst [vmem:[#allocation2 + $0x3a8] sm:$0xff] %v3254
        %4110 = vst [vmem:[#allocation2 + $0x3b0] sm:$0xff] %v3259
        %4111 = vst [vmem:[#allocation2 + $0x3b8] sm:$0xff] %v3262
        %4112 = vst [vmem:[#allocation2 + $0x3c0] sm:$0xff] %v3267
        %4113 = vst [vmem:[#allocation2 + $0x3c8] sm:$0xff] %v3270
        %4114 = vst [vmem:[#allocation2 + $0x3d0] sm:$0xff] %v3275
        %4115 = vst [vmem:[#allocation2 + $0x3d8] sm:$0xff] %v3278
        %4116 = vst [vmem:[#allocation2 + $0x3e0] sm:$0xff] %v3283
        %4117 = vst [vmem:[#allocation2 + $0x3e8] sm:$0xff] %v3286
        %4118 = vst [vmem:[#allocation2 + $0x3f0] sm:$0xff] %v3291
        %4119 = vst [vmem:[#allocation2 + $0x3f8] sm:$0xff] %v3294
        %4120 = vst [vmem:[#allocation2 + $0x400] sm:$0xff] %v3299
        %4121 = vst [vmem:[#allocation2 + $0x408] sm:$0xff] %v3302
        %4122 = vst [vmem:[#allocation2 + $0x410] sm:$0xff] %v3307
        %4123 = vst [vmem:[#allocation2 + $0x418] sm:$0xff] %v3310
        %4124 = vst [vmem:[#allocation2 + $0x420] sm:$0xff] %v3315
        %4125 = vst [vmem:[#allocation2 + $0x428] sm:$0xff] %v3318
        %4126 = vst [vmem:[#allocation2 + $0x430] sm:$0xff] %v3323
        %4127 = vst [vmem:[#allocation2 + $0x438] sm:$0xff] %v3326
        %4128 = vst [vmem:[#allocation2 + $0x440] sm:$0xff] %v3331
        %4129 = vst [vmem:[#allocation2 + $0x448] sm:$0xff] %v3334
        %4130 = vst [vmem:[#allocation2 + $0x450] sm:$0xff] %v3339
        %4131 = vst [vmem:[#allocation2 + $0x458] sm:$0xff] %v3342
        %4132 = vst [vmem:[#allocation2 + $0x460] sm:$0xff] %v3347
        %4133 = vst [vmem:[#allocation2 + $0x468] sm:$0xff] %v3350
        %4134 = vst [vmem:[#allocation2 + $0x470] sm:$0xff] %v3355
        %4135 = vst [vmem:[#allocation2 + $0x478] sm:$0xff] %v3358
        %4136 = vst [vmem:[#allocation2 + $0x480] sm:$0xff] %v3363
        %4137 = vst [vmem:[#allocation2 + $0x488] sm:$0xff] %v3366
        %4138 = vst [vmem:[#allocation2 + $0x490] sm:$0xff] %v3371
        %4139 = vst [vmem:[#allocation2 + $0x498] sm:$0xff] %v3374
        %4140 = vst [vmem:[#allocation2 + $0x4a0] sm:$0xff] %v3379
        %4141 = vst [vmem:[#allocation2 + $0x4a8] sm:$0xff] %v3382
        %4142 = vst [vmem:[#allocation2 + $0x4b0] sm:$0xff] %v3387
        %4143 = vst [vmem:[#allocation2 + $0x4b8] sm:$0xff] %v3390
        %4144 = vst [vmem:[#allocation2 + $0x4c0] sm:$0xff] %v3395
        %4145 = vst [vmem:[#allocation2 + $0x4c8] sm:$0xff] %v3398
        %4146 = vst [vmem:[#allocation2 + $0x4d0] sm:$0xff] %v3403
        %4147 = vst [vmem:[#allocation2 + $0x4d8] sm:$0xff] %v3406
        %4148 = vst [vmem:[#allocation2 + $0x4e0] sm:$0xff] %v3411
        %4149 = vst [vmem:[#allocation2 + $0x4e8] sm:$0xff] %v3414
        %4150 = vst [vmem:[#allocation2 + $0x4f0] sm:$0xff] %v3419
        %4151 = vst [vmem:[#allocation2 + $0x4f8] sm:$0xff] %v3422
        %4152 = vst [vmem:[#allocation2 + $0x500] sm:$0xff] %v3427
        %4153 = vst [vmem:[#allocation2 + $0x508] sm:$0xff] %v3430
        %4154 = vst [vmem:[#allocation2 + $0x510] sm:$0xff] %v3435
        %4155 = vst [vmem:[#allocation2 + $0x518] sm:$0xff] %v3438
        %4156 = vst [vmem:[#allocation2 + $0x520] sm:$0xff] %v3443
        %4157 = vst [vmem:[#allocation2 + $0x528] sm:$0xff] %v3446
        %4158 = vst [vmem:[#allocation2 + $0x530] sm:$0xff] %v3451
        %4159 = vst [vmem:[#allocation2 + $0x538] sm:$0xff] %v3454
        %4160 = vst [vmem:[#allocation2 + $0x540] sm:$0xff] %v3459
        %4161 = vst [vmem:[#allocation2 + $0x548] sm:$0xff] %v3462
        %4162 = vst [vmem:[#allocation2 + $0x550] sm:$0xff] %v3467
        %4163 = vst [vmem:[#allocation2 + $0x558] sm:$0xff] %v3470
        %4164 = vst [vmem:[#allocation2 + $0x560] sm:$0xff] %v3475
        %4165 = vst [vmem:[#allocation2 + $0x568] sm:$0xff] %v3478
        %4166 = vst [vmem:[#allocation2 + $0x570] sm:$0xff] %v3483
        %4167 = vst [vmem:[#allocation2 + $0x578] sm:$0xff] %v3486
        %4168 = vst [vmem:[#allocation2 + $0x580] sm:$0xff] %v3491
        %4169 = vst [vmem:[#allocation2 + $0x588] sm:$0xff] %v3494
        %4170 = vst [vmem:[#allocation2 + $0x590] sm:$0xff] %v3499
        %4171 = vst [vmem:[#allocation2 + $0x598] sm:$0xff] %v3502
        %4172 = vst [vmem:[#allocation2 + $0x5a0] sm:$0xff] %v3507
        %4173 = vst [vmem:[#allocation2 + $0x5a8] sm:$0xff] %v3510
        %4174 = vst [vmem:[#allocation2 + $0x5b0] sm:$0xff] %v3515
        %4175 = vst [vmem:[#allocation2 + $0x5b8] sm:$0xff] %v3518
        %4176 = vst [vmem:[#allocation2 + $0x5c0] sm:$0xff] %v3523
        %4177 = vst [vmem:[#allocation2 + $0x5c8] sm:$0xff] %v3526
        %4178 = vst [vmem:[#allocation2 + $0x5d0] sm:$0xff] %v3531
        %4179 = vst [vmem:[#allocation2 + $0x5d8] sm:$0xff] %v3534
        %4180 = vst [vmem:[#allocation2 + $0x5e0] sm:$0xff] %v3539
        %4181 = vst [vmem:[#allocation2 + $0x5e8] sm:$0xff] %v3542
        %4182 = vst [vmem:[#allocation2 + $0x5f0] sm:$0xff] %v3547
        %4183 = vst [vmem:[#allocation2 + $0x5f8] sm:$0xff] %v3550
        %4184 = vst [vmem:[#allocation2 + $0x600] sm:$0xff] %v3555
        %4185 = vst [vmem:[#allocation2 + $0x608] sm:$0xff] %v3558
        %4186 = vst [vmem:[#allocation2 + $0x610] sm:$0xff] %v3563
        %4187 = vst [vmem:[#allocation2 + $0x618] sm:$0xff] %v3566
        %4188 = vst [vmem:[#allocation2 + $0x620] sm:$0xff] %v3571
        %4189 = vst [vmem:[#allocation2 + $0x628] sm:$0xff] %v3574
        %4190 = vst [vmem:[#allocation2 + $0x630] sm:$0xff] %v3579
        %4191 = vst [vmem:[#allocation2 + $0x638] sm:$0xff] %v3582
        %4192 = vst [vmem:[#allocation2 + $0x640] sm:$0xff] %v3587
        %4193 = vst [vmem:[#allocation2 + $0x648] sm:$0xff] %v3590
        %4194 = vst [vmem:[#allocation2 + $0x650] sm:$0xff] %v3595
        %4195 = vst [vmem:[#allocation2 + $0x658] sm:$0xff] %v3598
        %4196 = vst [vmem:[#allocation2 + $0x660] sm:$0xff] %v3603
        %4197 = vst [vmem:[#allocation2 + $0x668] sm:$0xff] %v3606
        %4198 = vst [vmem:[#allocation2 + $0x670] sm:$0xff] %v3611
        %4199 = vst [vmem:[#allocation2 + $0x678] sm:$0xff] %v3614
        %4200 = vst [vmem:[#allocation2 + $0x680] sm:$0xff] %v3619
        %4201 = vst [vmem:[#allocation2 + $0x688] sm:$0xff] %v3622
        %4202 = vst [vmem:[#allocation2 + $0x690] sm:$0xff] %v3627
        %4203 = vst [vmem:[#allocation2 + $0x698] sm:$0xff] %v3630
        %4204 = vst [vmem:[#allocation2 + $0x6a0] sm:$0xff] %v3635
        %4205 = vst [vmem:[#allocation2 + $0x6a8] sm:$0xff] %v3638
        %4206 = vst [vmem:[#allocation2 + $0x6b0] sm:$0xff] %v3643
        %4207 = vst [vmem:[#allocation2 + $0x6b8] sm:$0xff] %v3646
        %4208 = vst [vmem:[#allocation2 + $0x6c0] sm:$0xff] %v3651
        %4209 = vst [vmem:[#allocation2 + $0x6c8] sm:$0xff] %v3654
        %4210 = vst [vmem:[#allocation2 + $0x6d0] sm:$0xff] %v3659
        %4211 = vst [vmem:[#allocation2 + $0x6d8] sm:$0xff] %v3662
        %4212 = vst [vmem:[#allocation2 + $0x6e0] sm:$0xff] %v3667
        %4213 = vst [vmem:[#allocation2 + $0x6e8] sm:$0xff] %v3670
        %4214 = vst [vmem:[#allocation2 + $0x6f0] sm:$0xff] %v3675
        %4215 = vst [vmem:[#allocation2 + $0x6f8] sm:$0xff] %v3678
        %4216 = vst [vmem:[#allocation2 + $0x700] sm:$0xff] %v3683
        %4217 = vst [vmem:[#allocation2 + $0x708] sm:$0xff] %v3686
        %4218 = vst [vmem:[#allocation2 + $0x710] sm:$0xff] %v3691
        %4219 = vst [vmem:[#allocation2 + $0x718] sm:$0xff] %v3694
        %4220 = vst [vmem:[#allocation2 + $0x720] sm:$0xff] %v3699
        %4221 = vst [vmem:[#allocation2 + $0x728] sm:$0xff] %v3702
        %4222 = vst [vmem:[#allocation2 + $0x730] sm:$0xff] %v3707
        %4223 = vst [vmem:[#allocation2 + $0x738] sm:$0xff] %v3710
        %4224 = vst [vmem:[#allocation2 + $0x740] sm:$0xff] %v3715
        %4225 = vst [vmem:[#allocation2 + $0x748] sm:$0xff] %v3718
        %4226 = vst [vmem:[#allocation2 + $0x750] sm:$0xff] %v3723
        %4227 = vst [vmem:[#allocation2 + $0x758] sm:$0xff] %v3726
        %4228 = vst [vmem:[#allocation2 + $0x760] sm:$0xff] %v3731
        %4229 = vst [vmem:[#allocation2 + $0x768] sm:$0xff] %v3734
        %4230 = vst [vmem:[#allocation2 + $0x770] sm:$0xff] %v3739
        %4231 = vst [vmem:[#allocation2 + $0x778] sm:$0xff] %v3742
        %4232 = vst [vmem:[#allocation2 + $0x780] sm:$0xff] %v3747
        %4233 = vst [vmem:[#allocation2 + $0x788] sm:$0xff] %v3750
        %4234 = vst [vmem:[#allocation2 + $0x790] sm:$0xff] %v3755
        %4235 = vst [vmem:[#allocation2 + $0x798] sm:$0xff] %v3758
        %4236 = vst [vmem:[#allocation2 + $0x7a0] sm:$0xff] %v3763
        %4237 = vst [vmem:[#allocation2 + $0x7a8] sm:$0xff] %v3766
        %4238 = vst [vmem:[#allocation2 + $0x7b0] sm:$0xff] %v3771
        %4239 = vst [vmem:[#allocation2 + $0x7b8] sm:$0xff] %v3774
        %4240 = vst [vmem:[#allocation2 + $0x7c0] sm:$0xff] %v3779
        %4241 = vst [vmem:[#allocation2 + $0x7c8] sm:$0xff] %v3782
        %4242 = vst [vmem:[#allocation2 + $0x7d0] sm:$0xff] %v3787
        %4243 = vst [vmem:[#allocation2 + $0x7d8] sm:$0xff] %v3790
        %4244 = vst [vmem:[#allocation2 + $0x7e0] sm:$0xff] %v3795
        %4245 = vst [vmem:[#allocation2 + $0x7e8] sm:$0xff] %v3798
        %4246 = vst [vmem:[#allocation2 + $0x7f0] sm:$0xff] %v3803
        %4247 = vst [vmem:[#allocation2 + $0x7f8] sm:$0xff] %v3806
        %4248 = vst [vmem:[#allocation2 + $0x800] sm:$0xff] %v3811
        %4249 = vst [vmem:[#allocation2 + $0x808] sm:$0xff] %v3814
        %4250 = vst [vmem:[#allocation2 + $0x810] sm:$0xff] %v3819
        %4251 = vst [vmem:[#allocation2 + $0x818] sm:$0xff] %v3822
        %4252 = vst [vmem:[#allocation2 + $0x820] sm:$0xff] %v3827
        %4253 = vst [vmem:[#allocation2 + $0x828] sm:$0xff] %v3830
        %4254 = vst [vmem:[#allocation2 + $0x830] sm:$0xff] %v3835
        %4255 = vst [vmem:[#allocation2 + $0x838] sm:$0xff] %v3838
        %4256 = vst [vmem:[#allocation2 + $0x840] sm:$0xff] %v3843
        %4257 = vst [vmem:[#allocation2 + $0x848] sm:$0xff] %v3846
        %4258 = vst [vmem:[#allocation2 + $0x850] sm:$0xff] %v3851
        %4259 = vst [vmem:[#allocation2 + $0x858] sm:$0xff] %v3854
        %4260 = vst [vmem:[#allocation2 + $0x860] sm:$0xff] %v3859
        %4261 = vst [vmem:[#allocation2 + $0x868] sm:$0xff] %v3862
        %4262 = vst [vmem:[#allocation2 + $0x870] sm:$0xff] %v3867
        %4263 = vst [vmem:[#allocation2 + $0x878] sm:$0xff] %v3870
        %4264 = vst [vmem:[#allocation2 + $0x880] sm:$0xff] %v3875
        %4265 = vst [vmem:[#allocation2 + $0x888] sm:$0xff] %v3878
        %4266 = vst [vmem:[#allocation2 + $0x890] sm:$0xff] %v3883
        %4267 = vst [vmem:[#allocation2 + $0x898] sm:$0xff] %v3886
        %4268 = vst [vmem:[#allocation2 + $0x8a0] sm:$0xff] %v3891
        %4269 = vst [vmem:[#allocation2 + $0x8a8] sm:$0xff] %v3894
        %4270 = vst [vmem:[#allocation2 + $0x8b0] sm:$0xff] %v3899
        %4271 = vst [vmem:[#allocation2 + $0x8b8] sm:$0xff] %v3902
        %4272 = vst [vmem:[#allocation2 + $0x8c0] sm:$0xff] %v3907
        %4273 = vst [vmem:[#allocation2 + $0x8c8] sm:$0xff] %v3910
        %4274 = vst [vmem:[#allocation2 + $0x8d0] sm:$0xff] %v3915
        %4275 = vst [vmem:[#allocation2 + $0x8d8] sm:$0xff] %v3918
        %4276 = vst [vmem:[#allocation2 + $0x8e0] sm:$0xff] %v3923
        %4277 = vst [vmem:[#allocation2 + $0x8e8] sm:$0xff] %v3926
        %4278 = vst [vmem:[#allocation2 + $0x8f0] sm:$0xff] %v3931
        %4279 = vst [vmem:[#allocation2 + $0x8f8] sm:$0xff] %v3934
        %4280 = vst [vmem:[#allocation2 + $0x900] sm:$0xff] %v3939
        %4281 = vst [vmem:[#allocation2 + $0x908] sm:$0xff] %v3942
        %4282 = vst [vmem:[#allocation2 + $0x910] sm:$0xff] %v3947
        %4283 = vst [vmem:[#allocation2 + $0x918] sm:$0xff] %v3950
        %4284 = vst [vmem:[#allocation2 + $0x920] sm:$0xff] %v3955
        %4285 = vst [vmem:[#allocation2 + $0x928] sm:$0xff] %v3958
        %4286 = vst [vmem:[#allocation2 + $0x930] sm:$0xff] %v3963
        %4287 = vst [vmem:[#allocation2 + $0x938] sm:$0xff] %v3966
        %4288 = vst [vmem:[#allocation2 + $0x940] sm:$0xff] %v3971
        %4289 = vst [vmem:[#allocation2 + $0x948] sm:$0xff] %v3974
        %4290 = vst [vmem:[#allocation2 + $0x950] sm:$0xff] %v3979
        %4291 = vst [vmem:[#allocation2 + $0x958] sm:$0xff] %v3982
        %4292 = vst [vmem:[#allocation2 + $0x960] sm:$0xff] %v3987
        %v4293 = vld [vmem:[#allocation2 + $0x500] sm:$0xff]
        %v4294 = vld [vmem:[#allocation2 + $0x508] sm:$0xff]
        %v4295 = vld [vmem:[#allocation2 + $0x510] sm:$0xff]
        %v4296 = vld [vmem:[#allocation2 + $0x518] sm:$0xff]
        %v4297 = vld [vmem:[#allocation2] sm:$0xff]
        %v4298 = vld [vmem:[#allocation2 + $0x8] sm:$0xff]
        %v4299 = vld [vmem:[#allocation2 + $0x10] sm:$0xff]
        %v4300 = vld [vmem:[#allocation2 + $0x18] sm:$0xff]
        %v4301 = vld [vmem:[%s292] sm:$0x1]
        %v4302 = vlaneseq
        %v4303 = vshrl.u32 %v4302, 7
        %v4304 = vsub.s32 0, %v4303
        %v4305 = vrot.slane %v4301, %v4304
        %v4306 = vmul.f32 %v4305, %v4297
        %v4307 = vmul.f32 %v4305, %v4298
        %v4308 = vmul.f32 %v4305, %v4299
        %v4309 = vmul.f32 %v4305, %v4300
        %v4310 = vadd.f32 %v4293, %v4306
        %v4311 = vadd.f32 %v4294, %v4307
        %v4312 = vadd.f32 %v4295, %v4308
        %v4313 = vadd.f32 %v4296, %v4309
        %v4314 = vld [vmem:[#allocation2 + $0x20] sm:$0xff]
        %v4315 = vld [vmem:[#allocation2 + $0x28] sm:$0xff]
        %v4316 = vld [vmem:[#allocation2 + $0x30] sm:$0xff]
        %v4317 = vld [vmem:[#allocation2 + $0x38] sm:$0xff]
        %v4318 = vld [vmem:[%s292 + $0x1] sm:$0x1]
        %v4319 = vlaneseq
        %v4320 = vshrl.u32 %v4319, 7
        %v4321 = vsub.s32 0, %v4320
        %v4322 = vrot.slane %v4318, %v4321
        %v4323 = vmul.f32 %v4322, %v4314
        %v4324 = vmul.f32 %v4322, %v4315
        %v4325 = vmul.f32 %v4322, %v4316
        %v4326 = vmul.f32 %v4322, %v4317
        %v4327 = vadd.f32 %v4323, 0.0
        %v4328 = vadd.f32 %v4324, 0.0
        %v4329 = vadd.f32 %v4325, 0.0
        %v4330 = vadd.f32 %v4326, 0.0
        %v4331 = vld [vmem:[#allocation2 + $0x40] sm:$0xff]
        %v4332 = vld [vmem:[#allocation2 + $0x48] sm:$0xff]
        %v4333 = vld [vmem:[#allocation2 + $0x50] sm:$0xff]
        %v4334 = vld [vmem:[#allocation2 + $0x58] sm:$0xff]
        %v4335 = vld [vmem:[%s292 + $0x2] sm:$0x1]
        %v4336 = vlaneseq
        %v4337 = vshrl.u32 %v4336, 7
        %v4338 = vsub.s32 0, %v4337
        %v4339 = vrot.slane %v4335, %v4338
        %v4340 = vmul.f32 %v4339, %v4331
        %v4341 = vmul.f32 %v4339, %v4332
        %v4342 = vmul.f32 %v4339, %v4333
        %v4343 = vmul.f32 %v4339, %v4334
        %v4344 = vadd.f32 %v4340, 0.0
        %v4345 = vadd.f32 %v4341, 0.0
        %v4346 = vadd.f32 %v4342, 0.0
        %v4347 = vadd.f32 %v4343, 0.0
        %v4348 = vld [vmem:[#allocation2 + $0x60] sm:$0xff]
        %v4349 = vld [vmem:[#allocation2 + $0x68] sm:$0xff]
        %v4350 = vld [vmem:[#allocation2 + $0x70] sm:$0xff]
        %v4351 = vld [vmem:[#allocation2 + $0x78] sm:$0xff]
        %v4352 = vld [vmem:[%s292 + $0x3] sm:$0x1]
        %v4353 = vlaneseq
        %v4354 = vshrl.u32 %v4353, 7
        %v4355 = vsub.s32 0, %v4354
        %v4356 = vrot.slane %v4352, %v4355
        %v4357 = vmul.f32 %v4356, %v4348
        %v4358 = vmul.f32 %v4356, %v4349
        %v4359 = vmul.f32 %v4356, %v4350
        %v4360 = vmul.f32 %v4356, %v4351
        %v4361 = vadd.f32 %v4357, 0.0
        %v4362 = vadd.f32 %v4358, 0.0
        %v4363 = vadd.f32 %v4359, 0.0
        %v4364 = vadd.f32 %v4360, 0.0
        %v4365 = vld [vmem:[#allocation2 + $0x80] sm:$0xff]
        %v4366 = vld [vmem:[#allocation2 + $0x88] sm:$0xff]
        %v4367 = vld [vmem:[#allocation2 + $0x90] sm:$0xff]
        %v4368 = vld [vmem:[#allocation2 + $0x98] sm:$0xff]
        %v4369 = vld [vmem:[%s292 + $0x4] sm:$0x1]
        %v4370 = vlaneseq
        %v4371 = vshrl.u32 %v4370, 7
        %v4372 = vsub.s32 0, %v4371
        %v4373 = vrot.slane %v4369, %v4372
        %v4374 = vmul.f32 %v4373, %v4365
        %v4375 = vmul.f32 %v4373, %v4366
        %v4376 = vmul.f32 %v4373, %v4367
        %v4377 = vmul.f32 %v4373, %v4368
        %v4378 = vadd.f32 %v4310, %v4374
        %v4379 = vadd.f32 %v4311, %v4375
        %v4380 = vadd.f32 %v4312, %v4376
        %v4381 = vadd.f32 %v4313, %v4377
        %v4382 = vld [vmem:[#allocation2 + $0xa0] sm:$0xff]
        %v4383 = vld [vmem:[#allocation2 + $0xa8] sm:$0xff]
        %v4384 = vld [vmem:[#allocation2 + $0xb0] sm:$0xff]
        %v4385 = vld [vmem:[#allocation2 + $0xb8] sm:$0xff]
        %v4386 = vld [vmem:[%s292 + $0x5] sm:$0x1]
        %v4387 = vlaneseq
        %v4388 = vshrl.u32 %v4387, 7
        %v4389 = vsub.s32 0, %v4388
        %v4390 = vrot.slane %v4386, %v4389
        %v4391 = vmul.f32 %v4390, %v4382
        %v4392 = vmul.f32 %v4390, %v4383
        %v4393 = vmul.f32 %v4390, %v4384
        %v4394 = vmul.f32 %v4390, %v4385
        %v4395 = vadd.f32 %v4327, %v4391
        %v4396 = vadd.f32 %v4328, %v4392
        %v4397 = vadd.f32 %v4329, %v4393
        %v4398 = vadd.f32 %v4330, %v4394
        %v4399 = vld [vmem:[#allocation2 + $0xc0] sm:$0xff]
        %v4400 = vld [vmem:[#allocation2 + $0xc8] sm:$0xff]
        %v4401 = vld [vmem:[#allocation2 + $0xd0] sm:$0xff]
        %v4402 = vld [vmem:[#allocation2 + $0xd8] sm:$0xff]
        %v4403 = vld [vmem:[%s292 + $0x6] sm:$0x1]
        %v4404 = vlaneseq
        %v4405 = vshrl.u32 %v4404, 7
        %v4406 = vsub.s32 0, %v4405
        %v4407 = vrot.slane %v4403, %v4406
        %v4408 = vmul.f32 %v4407, %v4399
        %v4409 = vmul.f32 %v4407, %v4400
        %v4410 = vmul.f32 %v4407, %v4401
        %v4411 = vmul.f32 %v4407, %v4402
        %v4412 = vadd.f32 %v4344, %v4408
        %v4413 = vadd.f32 %v4345, %v4409
        %v4414 = vadd.f32 %v4346, %v4410
        %v4415 = vadd.f32 %v4347, %v4411
        %v4416 = vld [vmem:[#allocation2 + $0xe0] sm:$0xff]
        %v4417 = vld [vmem:[#allocation2 + $0xe8] sm:$0xff]
        %v4418 = vld [vmem:[#allocation2 + $0xf0] sm:$0xff]
        %v4419 = vld [vmem:[#allocation2 + $0xf8] sm:$0xff]
        %v4420 = vld [vmem:[%s292 + $0x7] sm:$0x1]
        %v4421 = vlaneseq
        %v4422 = vshrl.u32 %v4421, 7
        %v4423 = vsub.s32 0, %v4422
        %v4424 = vrot.slane %v4420, %v4423
        %v4425 = vmul.f32 %v4424, %v4416
        %v4426 = vmul.f32 %v4424, %v4417
        %v4427 = vmul.f32 %v4424, %v4418
        %v4428 = vmul.f32 %v4424, %v4419
        %v4429 = vadd.f32 %v4361, %v4425
        %v4430 = vadd.f32 %v4362, %v4426
        %v4431 = vadd.f32 %v4363, %v4427
        %v4432 = vadd.f32 %v4364, %v4428
        %v4433 = vld [vmem:[#allocation2 + $0x100] sm:$0xff]
        %v4434 = vld [vmem:[#allocation2 + $0x108] sm:$0xff]
        %v4435 = vld [vmem:[#allocation2 + $0x110] sm:$0xff]
        %v4436 = vld [vmem:[#allocation2 + $0x118] sm:$0xff]
        %v4437 = vld [vmem:[%s292 + $0x8] sm:$0x1]
        %v4438 = vlaneseq
        %v4439 = vshrl.u32 %v4438, 7
        %v4440 = vsub.s32 0, %v4439
        %v4441 = vrot.slane %v4437, %v4440
        %v4442 = vmul.f32 %v4441, %v4433
        %v4443 = vmul.f32 %v4441, %v4434
        %v4444 = vmul.f32 %v4441, %v4435
        %v4445 = vmul.f32 %v4441, %v4436
        %v4446 = vadd.f32 %v4378, %v4442
        %v4447 = vadd.f32 %v4379, %v4443
        %v4448 = vadd.f32 %v4380, %v4444
        %v4449 = vadd.f32 %v4381, %v4445
        %v4450 = vld [vmem:[#allocation2 + $0x120] sm:$0xff]
        %v4451 = vld [vmem:[#allocation2 + $0x128] sm:$0xff]
        %v4452 = vld [vmem:[#allocation2 + $0x130] sm:$0xff]
        %v4453 = vld [vmem:[#allocation2 + $0x138] sm:$0xff]
        %v4454 = vld [vmem:[%s292 + $0x9] sm:$0x1]
        %v4455 = vlaneseq
        %v4456 = vshrl.u32 %v4455, 7
        %v4457 = vsub.s32 0, %v4456
        %v4458 = vrot.slane %v4454, %v4457
        %v4459 = vmul.f32 %v4458, %v4450
        %v4460 = vmul.f32 %v4458, %v4451
        %v4461 = vmul.f32 %v4458, %v4452
        %v4462 = vmul.f32 %v4458, %v4453
        %v4463 = vadd.f32 %v4395, %v4459
        %v4464 = vadd.f32 %v4396, %v4460
        %v4465 = vadd.f32 %v4397, %v4461
        %v4466 = vadd.f32 %v4398, %v4462
        %v4467 = vld [vmem:[#allocation2 + $0x140] sm:$0xff]
        %v4468 = vld [vmem:[#allocation2 + $0x148] sm:$0xff]
        %v4469 = vld [vmem:[#allocation2 + $0x150] sm:$0xff]
        %v4470 = vld [vmem:[#allocation2 + $0x158] sm:$0xff]
        %v4471 = vld [vmem:[%s292 + $0xa] sm:$0x1]
        %v4472 = vlaneseq
        %v4473 = vshrl.u32 %v4472, 7
        %v4474 = vsub.s32 0, %v4473
        %v4475 = vrot.slane %v4471, %v4474
        %v4476 = vmul.f32 %v4475, %v4467
        %v4477 = vmul.f32 %v4475, %v4468
        %v4478 = vmul.f32 %v4475, %v4469
        %v4479 = vmul.f32 %v4475, %v4470
        %v4480 = vadd.f32 %v4412, %v4476
        %v4481 = vadd.f32 %v4413, %v4477
        %v4482 = vadd.f32 %v4414, %v4478
        %v4483 = vadd.f32 %v4415, %v4479
        %v4484 = vld [vmem:[#allocation2 + $0x160] sm:$0xff]
        %v4485 = vld [vmem:[#allocation2 + $0x168] sm:$0xff]
        %v4486 = vld [vmem:[#allocation2 + $0x170] sm:$0xff]
        %v4487 = vld [vmem:[#allocation2 + $0x178] sm:$0xff]
        %v4488 = vld [vmem:[%s292 + $0xb] sm:$0x1]
        %v4489 = vlaneseq
        %v4490 = vshrl.u32 %v4489, 7
        %v4491 = vsub.s32 0, %v4490
        %v4492 = vrot.slane %v4488, %v4491
        %v4493 = vmul.f32 %v4492, %v4484
        %v4494 = vmul.f32 %v4492, %v4485
        %v4495 = vmul.f32 %v4492, %v4486
        %v4496 = vmul.f32 %v4492, %v4487
        %v4497 = vadd.f32 %v4429, %v4493
        %v4498 = vadd.f32 %v4430, %v4494
        %v4499 = vadd.f32 %v4431, %v4495
        %v4500 = vadd.f32 %v4432, %v4496
        %v4501 = vld [vmem:[#allocation2 + $0x180] sm:$0xff]
        %v4502 = vld [vmem:[#allocation2 + $0x188] sm:$0xff]
        %v4503 = vld [vmem:[#allocation2 + $0x190] sm:$0xff]
        %v4504 = vld [vmem:[#allocation2 + $0x198] sm:$0xff]
        %v4505 = vld [vmem:[%s292 + $0xc] sm:$0x1]
        %v4506 = vlaneseq
        %v4507 = vshrl.u32 %v4506, 7
        %v4508 = vsub.s32 0, %v4507
        %v4509 = vrot.slane %v4505, %v4508
        %v4510 = vmul.f32 %v4509, %v4501
        %v4511 = vmul.f32 %v4509, %v4502
        %v4512 = vmul.f32 %v4509, %v4503
        %v4513 = vmul.f32 %v4509, %v4504
        %v4514 = vadd.f32 %v4446, %v4510
        %v4515 = vadd.f32 %v4447, %v4511
        %v4516 = vadd.f32 %v4448, %v4512
        %v4517 = vadd.f32 %v4449, %v4513
        %v4518 = vld [vmem:[#allocation2 + $0x1a0] sm:$0xff]
        %v4519 = vld [vmem:[#allocation2 + $0x1a8] sm:$0xff]
        %v4520 = vld [vmem:[#allocation2 + $0x1b0] sm:$0xff]
        %v4521 = vld [vmem:[#allocation2 + $0x1b8] sm:$0xff]
        %v4522 = vld [vmem:[%s292 + $0xd] sm:$0x1]
        %v4523 = vlaneseq
        %v4524 = vshrl.u32 %v4523, 7
        %v4525 = vsub.s32 0, %v4524
        %v4526 = vrot.slane %v4522, %v4525
        %v4527 = vmul.f32 %v4526, %v4518
        %v4528 = vmul.f32 %v4526, %v4519
        %v4529 = vmul.f32 %v4526, %v4520
        %v4530 = vmul.f32 %v4526, %v4521
        %v4531 = vadd.f32 %v4463, %v4527
        %v4532 = vadd.f32 %v4464, %v4528
        %v4533 = vadd.f32 %v4465, %v4529
        %v4534 = vadd.f32 %v4466, %v4530
        %v4535 = vld [vmem:[#allocation2 + $0x1c0] sm:$0xff]
        %v4536 = vld [vmem:[#allocation2 + $0x1c8] sm:$0xff]
        %v4537 = vld [vmem:[#allocation2 + $0x1d0] sm:$0xff]
        %v4538 = vld [vmem:[#allocation2 + $0x1d8] sm:$0xff]
        %v4539 = vld [vmem:[%s292 + $0xe] sm:$0x1]
        %v4540 = vlaneseq
        %v4541 = vshrl.u32 %v4540, 7
        %v4542 = vsub.s32 0, %v4541
        %v4543 = vrot.slane %v4539, %v4542
        %v4544 = vmul.f32 %v4543, %v4535
        %v4545 = vmul.f32 %v4543, %v4536
        %v4546 = vmul.f32 %v4543, %v4537
        %v4547 = vmul.f32 %v4543, %v4538
        %v4548 = vadd.f32 %v4480, %v4544
        %v4549 = vadd.f32 %v4481, %v4545
        %v4550 = vadd.f32 %v4482, %v4546
        %v4551 = vadd.f32 %v4483, %v4547
        %v4552 = vld [vmem:[#allocation2 + $0x1e0] sm:$0xff]
        %v4553 = vld [vmem:[#allocation2 + $0x1e8] sm:$0xff]
        %v4554 = vld [vmem:[#allocation2 + $0x1f0] sm:$0xff]
        %v4555 = vld [vmem:[#allocation2 + $0x1f8] sm:$0xff]
        %v4556 = vld [vmem:[%s292 + $0xf] sm:$0x1]
        %v4557 = vlaneseq
        %v4558 = vshrl.u32 %v4557, 7
        %v4559 = vsub.s32 0, %v4558
        %v4560 = vrot.slane %v4556, %v4559
        %v4561 = vmul.f32 %v4560, %v4552
        %v4562 = vmul.f32 %v4560, %v4553
        %v4563 = vmul.f32 %v4560, %v4554
        %v4564 = vmul.f32 %v4560, %v4555
        %v4565 = vadd.f32 %v4497, %v4561
        %v4566 = vadd.f32 %v4498, %v4562
        %v4567 = vadd.f32 %v4499, %v4563
        %v4568 = vadd.f32 %v4500, %v4564
        %v4569 = vld [vmem:[#allocation2 + $0x200] sm:$0xff]
        %v4570 = vld [vmem:[#allocation2 + $0x208] sm:$0xff]
        %v4571 = vld [vmem:[#allocation2 + $0x210] sm:$0xff]
        %v4572 = vld [vmem:[#allocation2 + $0x218] sm:$0xff]
        %v4573 = vld [vmem:[%s292 + $0x10] sm:$0x1]
        %v4574 = vlaneseq
        %v4575 = vshrl.u32 %v4574, 7
        %v4576 = vsub.s32 0, %v4575
        %v4577 = vrot.slane %v4573, %v4576
        %v4578 = vmul.f32 %v4577, %v4569
        %v4579 = vmul.f32 %v4577, %v4570
        %v4580 = vmul.f32 %v4577, %v4571
        %v4581 = vmul.f32 %v4577, %v4572
        %v4582 = vadd.f32 %v4514, %v4578
        %v4583 = vadd.f32 %v4515, %v4579
        %v4584 = vadd.f32 %v4516, %v4580
        %v4585 = vadd.f32 %v4517, %v4581
        %v4586 = vld [vmem:[#allocation2 + $0x220] sm:$0xff]
        %v4587 = vld [vmem:[#allocation2 + $0x228] sm:$0xff]
        %v4588 = vld [vmem:[#allocation2 + $0x230] sm:$0xff]
        %v4589 = vld [vmem:[#allocation2 + $0x238] sm:$0xff]
        %v4590 = vld [vmem:[%s292 + $0x11] sm:$0x1]
        %v4591 = vlaneseq
        %v4592 = vshrl.u32 %v4591, 7
        %v4593 = vsub.s32 0, %v4592
        %v4594 = vrot.slane %v4590, %v4593
        %v4595 = vmul.f32 %v4594, %v4586
        %v4596 = vmul.f32 %v4594, %v4587
        %v4597 = vmul.f32 %v4594, %v4588
        %v4598 = vmul.f32 %v4594, %v4589
        %v4599 = vadd.f32 %v4531, %v4595
        %v4600 = vadd.f32 %v4532, %v4596
        %v4601 = vadd.f32 %v4533, %v4597
        %v4602 = vadd.f32 %v4534, %v4598
        %v4603 = vld [vmem:[#allocation2 + $0x240] sm:$0xff]
        %v4604 = vld [vmem:[#allocation2 + $0x248] sm:$0xff]
        %v4605 = vld [vmem:[#allocation2 + $0x250] sm:$0xff]
        %v4606 = vld [vmem:[#allocation2 + $0x258] sm:$0xff]
        %v4607 = vld [vmem:[%s292 + $0x12] sm:$0x1]
        %v4608 = vlaneseq
        %v4609 = vshrl.u32 %v4608, 7
        %v4610 = vsub.s32 0, %v4609
        %v4611 = vrot.slane %v4607, %v4610
        %v4612 = vmul.f32 %v4611, %v4603
        %v4613 = vmul.f32 %v4611, %v4604
        %v4614 = vmul.f32 %v4611, %v4605
        %v4615 = vmul.f32 %v4611, %v4606
        %v4616 = vadd.f32 %v4548, %v4612
        %v4617 = vadd.f32 %v4549, %v4613
        %v4618 = vadd.f32 %v4550, %v4614
        %v4619 = vadd.f32 %v4551, %v4615
        %v4620 = vld [vmem:[#allocation2 + $0x260] sm:$0xff]
        %v4621 = vld [vmem:[#allocation2 + $0x268] sm:$0xff]
        %v4622 = vld [vmem:[#allocation2 + $0x270] sm:$0xff]
        %v4623 = vld [vmem:[#allocation2 + $0x278] sm:$0xff]
        %v4624 = vld [vmem:[%s292 + $0x13] sm:$0x1]
        %v4625 = vlaneseq
        %v4626 = vshrl.u32 %v4625, 7
        %v4627 = vsub.s32 0, %v4626
        %v4628 = vrot.slane %v4624, %v4627
        %v4629 = vmul.f32 %v4628, %v4620
        %v4630 = vmul.f32 %v4628, %v4621
        %v4631 = vmul.f32 %v4628, %v4622
        %v4632 = vmul.f32 %v4628, %v4623
        %v4633 = vadd.f32 %v4565, %v4629
        %v4634 = vadd.f32 %v4566, %v4630
        %v4635 = vadd.f32 %v4567, %v4631
        %v4636 = vadd.f32 %v4568, %v4632
        %v4637 = vld [vmem:[#allocation2 + $0x280] sm:$0xff]
        %v4638 = vld [vmem:[#allocation2 + $0x288] sm:$0xff]
        %v4639 = vld [vmem:[#allocation2 + $0x290] sm:$0xff]
        %v4640 = vld [vmem:[#allocation2 + $0x298] sm:$0xff]
        %v4641 = vld [vmem:[%s292 + $0x14] sm:$0x1]
        %v4642 = vlaneseq
        %v4643 = vshrl.u32 %v4642, 7
        %v4644 = vsub.s32 0, %v4643
        %v4645 = vrot.slane %v4641, %v4644
        %v4646 = vmul.f32 %v4645, %v4637
        %v4647 = vmul.f32 %v4645, %v4638
        %v4648 = vmul.f32 %v4645, %v4639
        %v4649 = vmul.f32 %v4645, %v4640
        %v4650 = vadd.f32 %v4582, %v4646
        %v4651 = vadd.f32 %v4583, %v4647
        %v4652 = vadd.f32 %v4584, %v4648
        %v4653 = vadd.f32 %v4585, %v4649
        %v4654 = vld [vmem:[#allocation2 + $0x2a0] sm:$0xff]
        %v4655 = vld [vmem:[#allocation2 + $0x2a8] sm:$0xff]
        %v4656 = vld [vmem:[#allocation2 + $0x2b0] sm:$0xff]
        %v4657 = vld [vmem:[#allocation2 + $0x2b8] sm:$0xff]
        %v4658 = vld [vmem:[%s292 + $0x15] sm:$0x1]
        %v4659 = vlaneseq
        %v4660 = vshrl.u32 %v4659, 7
        %v4661 = vsub.s32 0, %v4660
        %v4662 = vrot.slane %v4658, %v4661
        %v4663 = vmul.f32 %v4662, %v4654
        %v4664 = vmul.f32 %v4662, %v4655
        %v4665 = vmul.f32 %v4662, %v4656
        %v4666 = vmul.f32 %v4662, %v4657
        %v4667 = vadd.f32 %v4599, %v4663
        %v4668 = vadd.f32 %v4600, %v4664
        %v4669 = vadd.f32 %v4601, %v4665
        %v4670 = vadd.f32 %v4602, %v4666
        %v4671 = vld [vmem:[#allocation2 + $0x2c0] sm:$0xff]
        %v4672 = vld [vmem:[#allocation2 + $0x2c8] sm:$0xff]
        %v4673 = vld [vmem:[#allocation2 + $0x2d0] sm:$0xff]
        %v4674 = vld [vmem:[#allocation2 + $0x2d8] sm:$0xff]
        %v4675 = vld [vmem:[%s292 + $0x16] sm:$0x1]
        %v4676 = vlaneseq
        %v4677 = vshrl.u32 %v4676, 7
        %v4678 = vsub.s32 0, %v4677
        %v4679 = vrot.slane %v4675, %v4678
        %v4680 = vmul.f32 %v4679, %v4671
        %v4681 = vmul.f32 %v4679, %v4672
        %v4682 = vmul.f32 %v4679, %v4673
        %v4683 = vmul.f32 %v4679, %v4674
        %v4684 = vadd.f32 %v4616, %v4680
        %v4685 = vadd.f32 %v4617, %v4681
        %v4686 = vadd.f32 %v4618, %v4682
        %v4687 = vadd.f32 %v4619, %v4683
        %v4688 = vld [vmem:[#allocation2 + $0x2e0] sm:$0xff]
        %v4689 = vld [vmem:[#allocation2 + $0x2e8] sm:$0xff]
        %v4690 = vld [vmem:[#allocation2 + $0x2f0] sm:$0xff]
        %v4691 = vld [vmem:[#allocation2 + $0x2f8] sm:$0xff]
        %v4692 = vld [vmem:[%s292 + $0x17] sm:$0x1]
        %v4693 = vlaneseq
        %v4694 = vshrl.u32 %v4693, 7
        %v4695 = vsub.s32 0, %v4694
        %v4696 = vrot.slane %v4692, %v4695
        %v4697 = vmul.f32 %v4696, %v4688
        %v4698 = vmul.f32 %v4696, %v4689
        %v4699 = vmul.f32 %v4696, %v4690
        %v4700 = vmul.f32 %v4696, %v4691
        %v4701 = vadd.f32 %v4633, %v4697
        %v4702 = vadd.f32 %v4634, %v4698
        %v4703 = vadd.f32 %v4635, %v4699
        %v4704 = vadd.f32 %v4636, %v4700
        %v4705 = vld [vmem:[#allocation2 + $0x300] sm:$0xff]
        %v4706 = vld [vmem:[#allocation2 + $0x308] sm:$0xff]
        %v4707 = vld [vmem:[#allocation2 + $0x310] sm:$0xff]
        %v4708 = vld [vmem:[#allocation2 + $0x318] sm:$0xff]
        %v4709 = vld [vmem:[%s292 + $0x18] sm:$0x1]
        %v4710 = vlaneseq
        %v4711 = vshrl.u32 %v4710, 7
        %v4712 = vsub.s32 0, %v4711
        %v4713 = vrot.slane %v4709, %v4712
        %v4714 = vmul.f32 %v4713, %v4705
        %v4715 = vmul.f32 %v4713, %v4706
        %v4716 = vmul.f32 %v4713, %v4707
        %v4717 = vmul.f32 %v4713, %v4708
        %v4718 = vadd.f32 %v4650, %v4714
        %v4719 = vadd.f32 %v4651, %v4715
        %v4720 = vadd.f32 %v4652, %v4716
        %v4721 = vadd.f32 %v4653, %v4717
        %v4722 = vld [vmem:[#allocation2 + $0x320] sm:$0xff]
        %v4723 = vld [vmem:[#allocation2 + $0x328] sm:$0xff]
        %v4724 = vld [vmem:[#allocation2 + $0x330] sm:$0xff]
        %v4725 = vld [vmem:[#allocation2 + $0x338] sm:$0xff]
        %v4726 = vld [vmem:[%s292 + $0x19] sm:$0x1]
        %v4727 = vlaneseq
        %v4728 = vshrl.u32 %v4727, 7
        %v4729 = vsub.s32 0, %v4728
        %v4730 = vrot.slane %v4726, %v4729
        %v4731 = vmul.f32 %v4730, %v4722
        %v4732 = vmul.f32 %v4730, %v4723
        %v4733 = vmul.f32 %v4730, %v4724
        %v4734 = vmul.f32 %v4730, %v4725
        %v4735 = vadd.f32 %v4667, %v4731
        %v4736 = vadd.f32 %v4668, %v4732
        %v4737 = vadd.f32 %v4669, %v4733
        %v4738 = vadd.f32 %v4670, %v4734
        %v4739 = vld [vmem:[#allocation2 + $0x340] sm:$0xff]
        %v4740 = vld [vmem:[#allocation2 + $0x348] sm:$0xff]
        %v4741 = vld [vmem:[#allocation2 + $0x350] sm:$0xff]
        %v4742 = vld [vmem:[#allocation2 + $0x358] sm:$0xff]
        %v4743 = vld [vmem:[%s292 + $0x1a] sm:$0x1]
        %v4744 = vlaneseq
        %v4745 = vshrl.u32 %v4744, 7
        %v4746 = vsub.s32 0, %v4745
        %v4747 = vrot.slane %v4743, %v4746
        %v4748 = vmul.f32 %v4747, %v4739
        %v4749 = vmul.f32 %v4747, %v4740
        %v4750 = vmul.f32 %v4747, %v4741
        %v4751 = vmul.f32 %v4747, %v4742
        %v4752 = vadd.f32 %v4684, %v4748
        %v4753 = vadd.f32 %v4685, %v4749
        %v4754 = vadd.f32 %v4686, %v4750
        %v4755 = vadd.f32 %v4687, %v4751
        %v4756 = vld [vmem:[#allocation2 + $0x360] sm:$0xff]
        %v4757 = vld [vmem:[#allocation2 + $0x368] sm:$0xff]
        %v4758 = vld [vmem:[#allocation2 + $0x370] sm:$0xff]
        %v4759 = vld [vmem:[#allocation2 + $0x378] sm:$0xff]
        %v4760 = vld [vmem:[%s292 + $0x1b] sm:$0x1]
        %v4761 = vlaneseq
        %v4762 = vshrl.u32 %v4761, 7
        %v4763 = vsub.s32 0, %v4762
        %v4764 = vrot.slane %v4760, %v4763
        %v4765 = vmul.f32 %v4764, %v4756
        %v4766 = vmul.f32 %v4764, %v4757
        %v4767 = vmul.f32 %v4764, %v4758
        %v4768 = vmul.f32 %v4764, %v4759
        %v4769 = vadd.f32 %v4701, %v4765
        %v4770 = vadd.f32 %v4702, %v4766
        %v4771 = vadd.f32 %v4703, %v4767
        %v4772 = vadd.f32 %v4704, %v4768
        %v4773 = vld [vmem:[#allocation2 + $0x380] sm:$0xff]
        %v4774 = vld [vmem:[#allocation2 + $0x388] sm:$0xff]
        %v4775 = vld [vmem:[#allocation2 + $0x390] sm:$0xff]
        %v4776 = vld [vmem:[#allocation2 + $0x398] sm:$0xff]
        %v4777 = vld [vmem:[%s292 + $0x1c] sm:$0x1]
        %v4778 = vlaneseq
        %v4779 = vshrl.u32 %v4778, 7
        %v4780 = vsub.s32 0, %v4779
        %v4781 = vrot.slane %v4777, %v4780
        %v4782 = vmul.f32 %v4781, %v4773
        %v4783 = vmul.f32 %v4781, %v4774
        %v4784 = vmul.f32 %v4781, %v4775
        %v4785 = vmul.f32 %v4781, %v4776
        %v4786 = vadd.f32 %v4718, %v4782
        %v4787 = vadd.f32 %v4719, %v4783
        %v4788 = vadd.f32 %v4720, %v4784
        %v4789 = vadd.f32 %v4721, %v4785
        %v4790 = vld [vmem:[#allocation2 + $0x3a0] sm:$0xff]
        %v4791 = vld [vmem:[#allocation2 + $0x3a8] sm:$0xff]
        %v4792 = vld [vmem:[#allocation2 + $0x3b0] sm:$0xff]
        %v4793 = vld [vmem:[#allocation2 + $0x3b8] sm:$0xff]
        %v4794 = vld [vmem:[%s292 + $0x1d] sm:$0x1]
        %v4795 = vlaneseq
        %v4796 = vshrl.u32 %v4795, 7
        %v4797 = vsub.s32 0, %v4796
        %v4798 = vrot.slane %v4794, %v4797
        %v4799 = vmul.f32 %v4798, %v4790
        %v4800 = vmul.f32 %v4798, %v4791
        %v4801 = vmul.f32 %v4798, %v4792
        %v4802 = vmul.f32 %v4798, %v4793
        %v4803 = vadd.f32 %v4735, %v4799
        %v4804 = vadd.f32 %v4736, %v4800
        %v4805 = vadd.f32 %v4737, %v4801
        %v4806 = vadd.f32 %v4738, %v4802
        %v4807 = vld [vmem:[#allocation2 + $0x3c0] sm:$0xff]
        %v4808 = vld [vmem:[#allocation2 + $0x3c8] sm:$0xff]
        %v4809 = vld [vmem:[#allocation2 + $0x3d0] sm:$0xff]
        %v4810 = vld [vmem:[#allocation2 + $0x3d8] sm:$0xff]
        %v4811 = vld [vmem:[%s292 + $0x1e] sm:$0x1]
        %v4812 = vlaneseq
        %v4813 = vshrl.u32 %v4812, 7
        %v4814 = vsub.s32 0, %v4813
        %v4815 = vrot.slane %v4811, %v4814
        %v4816 = vmul.f32 %v4815, %v4807
        %v4817 = vmul.f32 %v4815, %v4808
        %v4818 = vmul.f32 %v4815, %v4809
        %v4819 = vmul.f32 %v4815, %v4810
        %v4820 = vadd.f32 %v4752, %v4816
        %v4821 = vadd.f32 %v4753, %v4817
        %v4822 = vadd.f32 %v4754, %v4818
        %v4823 = vadd.f32 %v4755, %v4819
        %v4824 = vld [vmem:[#allocation2 + $0x3e0] sm:$0xff]
        %v4825 = vld [vmem:[#allocation2 + $0x3e8] sm:$0xff]
        %v4826 = vld [vmem:[#allocation2 + $0x3f0] sm:$0xff]
        %v4827 = vld [vmem:[#allocation2 + $0x3f8] sm:$0xff]
        %v4828 = vld [vmem:[%s292 + $0x1f] sm:$0x1]
        %v4829 = vlaneseq
        %v4830 = vshrl.u32 %v4829, 7
        %v4831 = vsub.s32 0, %v4830
        %v4832 = vrot.slane %v4828, %v4831
        %v4833 = vmul.f32 %v4832, %v4824
        %v4834 = vmul.f32 %v4832, %v4825
        %v4835 = vmul.f32 %v4832, %v4826
        %v4836 = vmul.f32 %v4832, %v4827
        %v4837 = vadd.f32 %v4769, %v4833
        %v4838 = vadd.f32 %v4770, %v4834
        %v4839 = vadd.f32 %v4771, %v4835
        %v4840 = vadd.f32 %v4772, %v4836
        %v4841 = vld [vmem:[#allocation2 + $0x400] sm:$0xff]
        %v4842 = vld [vmem:[#allocation2 + $0x408] sm:$0xff]
        %v4843 = vld [vmem:[#allocation2 + $0x410] sm:$0xff]
        %v4844 = vld [vmem:[#allocation2 + $0x418] sm:$0xff]
        %v4845 = vld [vmem:[%s292 + $0x20] sm:$0x1]
        %v4846 = vlaneseq
        %v4847 = vshrl.u32 %v4846, 7
        %v4848 = vsub.s32 0, %v4847
        %v4849 = vrot.slane %v4845, %v4848
        %v4850 = vmul.f32 %v4849, %v4841
        %v4851 = vmul.f32 %v4849, %v4842
        %v4852 = vmul.f32 %v4849, %v4843
        %v4853 = vmul.f32 %v4849, %v4844
        %v4854 = vadd.f32 %v4786, %v4850
        %v4855 = vadd.f32 %v4787, %v4851
        %v4856 = vadd.f32 %v4788, %v4852
        %v4857 = vadd.f32 %v4789, %v4853
        %v4858 = vld [vmem:[#allocation2 + $0x420] sm:$0xff]
        %v4859 = vld [vmem:[#allocation2 + $0x428] sm:$0xff]
        %v4860 = vld [vmem:[#allocation2 + $0x430] sm:$0xff]
        %v4861 = vld [vmem:[#allocation2 + $0x438] sm:$0xff]
        %v4862 = vld [vmem:[%s292 + $0x21] sm:$0x1]
        %v4863 = vlaneseq
        %v4864 = vshrl.u32 %v4863, 7
        %v4865 = vsub.s32 0, %v4864
        %v4866 = vrot.slane %v4862, %v4865
        %v4867 = vmul.f32 %v4866, %v4858
        %v4868 = vmul.f32 %v4866, %v4859
        %v4869 = vmul.f32 %v4866, %v4860
        %v4870 = vmul.f32 %v4866, %v4861
        %v4871 = vadd.f32 %v4803, %v4867
        %v4872 = vadd.f32 %v4804, %v4868
        %v4873 = vadd.f32 %v4805, %v4869
        %v4874 = vadd.f32 %v4806, %v4870
        %v4875 = vld [vmem:[#allocation2 + $0x440] sm:$0xff]
        %v4876 = vld [vmem:[#allocation2 + $0x448] sm:$0xff]
        %v4877 = vld [vmem:[#allocation2 + $0x450] sm:$0xff]
        %v4878 = vld [vmem:[#allocation2 + $0x458] sm:$0xff]
        %v4879 = vld [vmem:[%s292 + $0x22] sm:$0x1]
        %v4880 = vlaneseq
        %v4881 = vshrl.u32 %v4880, 7
        %v4882 = vsub.s32 0, %v4881
        %v4883 = vrot.slane %v4879, %v4882
        %v4884 = vmul.f32 %v4883, %v4875
        %v4885 = vmul.f32 %v4883, %v4876
        %v4886 = vmul.f32 %v4883, %v4877
        %v4887 = vmul.f32 %v4883, %v4878
        %v4888 = vadd.f32 %v4820, %v4884
        %v4889 = vadd.f32 %v4821, %v4885
        %v4890 = vadd.f32 %v4822, %v4886
        %v4891 = vadd.f32 %v4823, %v4887
        %v4892 = vld [vmem:[#allocation2 + $0x460] sm:$0xff]
        %v4893 = vld [vmem:[#allocation2 + $0x468] sm:$0xff]
        %v4894 = vld [vmem:[#allocation2 + $0x470] sm:$0xff]
        %v4895 = vld [vmem:[#allocation2 + $0x478] sm:$0xff]
        %v4896 = vld [vmem:[%s292 + $0x23] sm:$0x1]
        %v4897 = vlaneseq
        %v4898 = vshrl.u32 %v4897, 7
        %v4899 = vsub.s32 0, %v4898
        %v4900 = vrot.slane %v4896, %v4899
        %v4901 = vmul.f32 %v4900, %v4892
        %v4902 = vmul.f32 %v4900, %v4893
        %v4903 = vmul.f32 %v4900, %v4894
        %v4904 = vmul.f32 %v4900, %v4895
        %v4905 = vadd.f32 %v4837, %v4901
        %v4906 = vadd.f32 %v4838, %v4902
        %v4907 = vadd.f32 %v4839, %v4903
        %v4908 = vadd.f32 %v4840, %v4904
        %v4909 = vld [vmem:[#allocation2 + $0x480] sm:$0xff]
        %v4910 = vld [vmem:[#allocation2 + $0x488] sm:$0xff]
        %v4911 = vld [vmem:[#allocation2 + $0x490] sm:$0xff]
        %v4912 = vld [vmem:[#allocation2 + $0x498] sm:$0xff]
        %v4913 = vld [vmem:[%s292 + $0x24] sm:$0x1]
        %v4914 = vlaneseq
        %v4915 = vshrl.u32 %v4914, 7
        %v4916 = vsub.s32 0, %v4915
        %v4917 = vrot.slane %v4913, %v4916
        %v4918 = vmul.f32 %v4917, %v4909
        %v4919 = vmul.f32 %v4917, %v4910
        %v4920 = vmul.f32 %v4917, %v4911
        %v4921 = vmul.f32 %v4917, %v4912
        %v4922 = vadd.f32 %v4854, %v4918
        %v4923 = vadd.f32 %v4855, %v4919
        %v4924 = vadd.f32 %v4856, %v4920
        %v4925 = vadd.f32 %v4857, %v4921
        %v4926 = vld [vmem:[#allocation2 + $0x4a0] sm:$0xff]
        %v4927 = vld [vmem:[#allocation2 + $0x4a8] sm:$0xff]
        %v4928 = vld [vmem:[#allocation2 + $0x4b0] sm:$0xff]
        %v4929 = vld [vmem:[#allocation2 + $0x4b8] sm:$0xff]
        %v4930 = vld [vmem:[%s292 + $0x25] sm:$0x1]
        %v4931 = vlaneseq
        %v4932 = vshrl.u32 %v4931, 7
        %v4933 = vsub.s32 0, %v4932
        %v4934 = vrot.slane %v4930, %v4933
        %v4935 = vmul.f32 %v4934, %v4926
        %v4936 = vmul.f32 %v4934, %v4927
        %v4937 = vmul.f32 %v4934, %v4928
        %v4938 = vmul.f32 %v4934, %v4929
        %v4939 = vadd.f32 %v4871, %v4935
        %v4940 = vadd.f32 %v4872, %v4936
        %v4941 = vadd.f32 %v4873, %v4937
        %v4942 = vadd.f32 %v4874, %v4938
        %v4943 = vld [vmem:[#allocation2 + $0x4c0] sm:$0xff]
        %v4944 = vld [vmem:[#allocation2 + $0x4c8] sm:$0xff]
        %v4945 = vld [vmem:[#allocation2 + $0x4d0] sm:$0xff]
        %v4946 = vld [vmem:[#allocation2 + $0x4d8] sm:$0xff]
        %v4947 = vld [vmem:[%s292 + $0x26] sm:$0x1]
        %v4948 = vlaneseq
        %v4949 = vshrl.u32 %v4948, 7
        %v4950 = vsub.s32 0, %v4949
        %v4951 = vrot.slane %v4947, %v4950
        %v4952 = vmul.f32 %v4951, %v4943
        %v4953 = vmul.f32 %v4951, %v4944
        %v4954 = vmul.f32 %v4951, %v4945
        %v4955 = vmul.f32 %v4951, %v4946
        %v4956 = vadd.f32 %v4888, %v4952
        %v4957 = vadd.f32 %v4889, %v4953
        %v4958 = vadd.f32 %v4890, %v4954
        %v4959 = vadd.f32 %v4891, %v4955
        %v4960 = vld [vmem:[#allocation2 + $0x4e0] sm:$0xff]
        %v4961 = vld [vmem:[#allocation2 + $0x4e8] sm:$0xff]
        %v4962 = vld [vmem:[#allocation2 + $0x4f0] sm:$0xff]
        %v4963 = vld [vmem:[#allocation2 + $0x4f8] sm:$0xff]
        %v4964 = vld [vmem:[%s292 + $0x27] sm:$0x1]
        %v4965 = vlaneseq
        %v4966 = vshrl.u32 %v4965, 7
        %v4967 = vsub.s32 0, %v4966
        %v4968 = vrot.slane %v4964, %v4967
        %v4969 = vmul.f32 %v4968, %v4960
        %v4970 = vmul.f32 %v4968, %v4961
        %v4971 = vmul.f32 %v4968, %v4962
        %v4972 = vmul.f32 %v4968, %v4963
        %v4973 = vadd.f32 %v4905, %v4969
        %v4974 = vadd.f32 %v4906, %v4970
        %v4975 = vadd.f32 %v4907, %v4971
        %v4976 = vadd.f32 %v4908, %v4972
        %v4977 = vadd.f32 %v4922, %v4939
        %v4978 = vadd.f32 %v4923, %v4940
        %v4979 = vadd.f32 %v4924, %v4941
        %v4980 = vadd.f32 %v4925, %v4942
        %v4981 = vadd.f32 %v4977, %v4956
        %v4982 = vadd.f32 %v4978, %v4957
        %v4983 = vadd.f32 %v4979, %v4958
        %v4984 = vadd.f32 %v4980, %v4959
        %v4985 = vadd.f32 %v4981, %v4973
        %v4986 = vadd.f32 %v4982, %v4974
        %v4987 = vadd.f32 %v4983, %v4975
        %v4988 = vadd.f32 %v4984, %v4976
        %v4989 = vmax.f32 %v4985, 0.0
        %v4990 = vmax.f32 %v4986, 0.0
        %v4991 = vmax.f32 %v4987, 0.0
        %v4992 = vmax.f32 %v4988, 0.0
        %4993 = vst [vmem:[#allocation3] sm:$0xff] %v4989
        %4994 = vst [vmem:[#allocation3 + $0x8] sm:$0xff] %v4990
        %4995 = vst [vmem:[#allocation3 + $0x10] sm:$0xff] %v4991
        %4996 = vst [vmem:[#allocation3 + $0x18] sm:$0xff] %v4992
        %v4997 = vld [vmem:[#allocation2 + $0x920] sm:$0xff]
        %v4998 = vld [vmem:[#allocation2 + $0x928] sm:$0xff]
        %v4999 = vld [vmem:[#allocation2 + $0x930] sm:$0xff]
        %v5000 = vld [vmem:[#allocation2 + $0x938] sm:$0xff]
        %v5001 = vld [vmem:[#allocation2 + $0x520] sm:$0xff]
        %v5002 = vld [vmem:[#allocation2 + $0x528] sm:$0xff]
        %v5003 = vld [vmem:[#allocation2 + $0x530] sm:$0xff]
        %v5004 = vld [vmem:[#allocation2 + $0x538] sm:$0xff]
        %v5005 = vld [vmem:[#allocation3] sm:$0x1]
        %v5006 = vlaneseq
        %v5007 = vshrl.u32 %v5006, 7
        %v5008 = vsub.s32 0, %v5007
        %v5009 = vrot.slane %v5005, %v5008
        %v5010 = vmul.f32 %v5009, %v5001
        %v5011 = vmul.f32 %v5009, %v5002
        %v5012 = vmul.f32 %v5009, %v5003
        %v5013 = vmul.f32 %v5009, %v5004
        %v5014 = vadd.f32 %v4997, %v5010
        %v5015 = vadd.f32 %v4998, %v5011
        %v5016 = vadd.f32 %v4999, %v5012
        %v5017 = vadd.f32 %v5000, %v5013
        %v5018 = vld [vmem:[#allocation2 + $0x540] sm:$0xff]
        %v5019 = vld [vmem:[#allocation2 + $0x548] sm:$0xff]
        %v5020 = vld [vmem:[#allocation2 + $0x550] sm:$0xff]
        %v5021 = vld [vmem:[#allocation2 + $0x558] sm:$0xff]
        %v5022 = vld [vmem:[#allocation3 + $0x1] sm:$0x1]
        %v5023 = vlaneseq
        %v5024 = vshrl.u32 %v5023, 7
        %v5025 = vsub.s32 0, %v5024
        %v5026 = vrot.slane %v5022, %v5025
        %v5027 = vmul.f32 %v5026, %v5018
        %v5028 = vmul.f32 %v5026, %v5019
        %v5029 = vmul.f32 %v5026, %v5020
        %v5030 = vmul.f32 %v5026, %v5021
        %v5031 = vadd.f32 %v5027, 0.0
        %v5032 = vadd.f32 %v5028, 0.0
        %v5033 = vadd.f32 %v5029, 0.0
        %v5034 = vadd.f32 %v5030, 0.0
        %v5035 = vld [vmem:[#allocation2 + $0x560] sm:$0xff]
        %v5036 = vld [vmem:[#allocation2 + $0x568] sm:$0xff]
        %v5037 = vld [vmem:[#allocation2 + $0x570] sm:$0xff]
        %v5038 = vld [vmem:[#allocation2 + $0x578] sm:$0xff]
        %v5039 = vld [vmem:[#allocation3 + $0x2] sm:$0x1]
        %v5040 = vlaneseq
        %v5041 = vshrl.u32 %v5040, 7
        %v5042 = vsub.s32 0, %v5041
        %v5043 = vrot.slane %v5039, %v5042
        %v5044 = vmul.f32 %v5043, %v5035
        %v5045 = vmul.f32 %v5043, %v5036
        %v5046 = vmul.f32 %v5043, %v5037
        %v5047 = vmul.f32 %v5043, %v5038
        %v5048 = vadd.f32 %v5044, 0.0
        %v5049 = vadd.f32 %v5045, 0.0
        %v5050 = vadd.f32 %v5046, 0.0
        %v5051 = vadd.f32 %v5047, 0.0
        %v5052 = vld [vmem:[#allocation2 + $0x580] sm:$0xff]
        %v5053 = vld [vmem:[#allocation2 + $0x588] sm:$0xff]
        %v5054 = vld [vmem:[#allocation2 + $0x590] sm:$0xff]
        %v5055 = vld [vmem:[#allocation2 + $0x598] sm:$0xff]
        %v5056 = vld [vmem:[#allocation3 + $0x3] sm:$0x1]
        %v5057 = vlaneseq
        %v5058 = vshrl.u32 %v5057, 7
        %v5059 = vsub.s32 0, %v5058
        %v5060 = vrot.slane %v5056, %v5059
        %v5061 = vmul.f32 %v5060, %v5052
        %v5062 = vmul.f32 %v5060, %v5053
        %v5063 = vmul.f32 %v5060, %v5054
        %v5064 = vmul.f32 %v5060, %v5055
        %v5065 = vadd.f32 %v5061, 0.0
        %v5066 = vadd.f32 %v5062, 0.0
        %v5067 = vadd.f32 %v5063, 0.0
        %v5068 = vadd.f32 %v5064, 0.0
        %v5069 = vld [vmem:[#allocation2 + $0x5a0] sm:$0xff]
        %v5070 = vld [vmem:[#allocation2 + $0x5a8] sm:$0xff]
        %v5071 = vld [vmem:[#allocation2 + $0x5b0] sm:$0xff]
        %v5072 = vld [vmem:[#allocation2 + $0x5b8] sm:$0xff]
        %v5073 = vld [vmem:[#allocation3 + $0x4] sm:$0x1]
        %v5074 = vlaneseq
        %v5075 = vshrl.u32 %v5074, 7
        %v5076 = vsub.s32 0, %v5075
        %v5077 = vrot.slane %v5073, %v5076
        %v5078 = vmul.f32 %v5077, %v5069
        %v5079 = vmul.f32 %v5077, %v5070
        %v5080 = vmul.f32 %v5077, %v5071
        %v5081 = vmul.f32 %v5077, %v5072
        %v5082 = vadd.f32 %v5014, %v5078
        %v5083 = vadd.f32 %v5015, %v5079
        %v5084 = vadd.f32 %v5016, %v5080
        %v5085 = vadd.f32 %v5017, %v5081
        %v5086 = vld [vmem:[#allocation2 + $0x5c0] sm:$0xff]
        %v5087 = vld [vmem:[#allocation2 + $0x5c8] sm:$0xff]
        %v5088 = vld [vmem:[#allocation2 + $0x5d0] sm:$0xff]
        %v5089 = vld [vmem:[#allocation2 + $0x5d8] sm:$0xff]
        %v5090 = vld [vmem:[#allocation3 + $0x5] sm:$0x1]
        %v5091 = vlaneseq
        %v5092 = vshrl.u32 %v5091, 7
        %v5093 = vsub.s32 0, %v5092
        %v5094 = vrot.slane %v5090, %v5093
        %v5095 = vmul.f32 %v5094, %v5086
        %v5096 = vmul.f32 %v5094, %v5087
        %v5097 = vmul.f32 %v5094, %v5088
        %v5098 = vmul.f32 %v5094, %v5089
        %v5099 = vadd.f32 %v5031, %v5095
        %v5100 = vadd.f32 %v5032, %v5096
        %v5101 = vadd.f32 %v5033, %v5097
        %v5102 = vadd.f32 %v5034, %v5098
        %v5103 = vld [vmem:[#allocation2 + $0x5e0] sm:$0xff]
        %v5104 = vld [vmem:[#allocation2 + $0x5e8] sm:$0xff]
        %v5105 = vld [vmem:[#allocation2 + $0x5f0] sm:$0xff]
        %v5106 = vld [vmem:[#allocation2 + $0x5f8] sm:$0xff]
        %v5107 = vld [vmem:[#allocation3 + $0x6] sm:$0x1]
        %v5108 = vlaneseq
        %v5109 = vshrl.u32 %v5108, 7
        %v5110 = vsub.s32 0, %v5109
        %v5111 = vrot.slane %v5107, %v5110
        %v5112 = vmul.f32 %v5111, %v5103
        %v5113 = vmul.f32 %v5111, %v5104
        %v5114 = vmul.f32 %v5111, %v5105
        %v5115 = vmul.f32 %v5111, %v5106
        %v5116 = vadd.f32 %v5048, %v5112
        %v5117 = vadd.f32 %v5049, %v5113
        %v5118 = vadd.f32 %v5050, %v5114
        %v5119 = vadd.f32 %v5051, %v5115
        %v5120 = vld [vmem:[#allocation2 + $0x600] sm:$0xff]
        %v5121 = vld [vmem:[#allocation2 + $0x608] sm:$0xff]
        %v5122 = vld [vmem:[#allocation2 + $0x610] sm:$0xff]
        %v5123 = vld [vmem:[#allocation2 + $0x618] sm:$0xff]
        %v5124 = vld [vmem:[#allocation3 + $0x7] sm:$0x1]
        %v5125 = vlaneseq
        %v5126 = vshrl.u32 %v5125, 7
        %v5127 = vsub.s32 0, %v5126
        %v5128 = vrot.slane %v5124, %v5127
        %v5129 = vmul.f32 %v5128, %v5120
        %v5130 = vmul.f32 %v5128, %v5121
        %v5131 = vmul.f32 %v5128, %v5122
        %v5132 = vmul.f32 %v5128, %v5123
        %v5133 = vadd.f32 %v5065, %v5129
        %v5134 = vadd.f32 %v5066, %v5130
        %v5135 = vadd.f32 %v5067, %v5131
        %v5136 = vadd.f32 %v5068, %v5132
        %v5137 = vld [vmem:[#allocation2 + $0x620] sm:$0xff]
        %v5138 = vld [vmem:[#allocation2 + $0x628] sm:$0xff]
        %v5139 = vld [vmem:[#allocation2 + $0x630] sm:$0xff]
        %v5140 = vld [vmem:[#allocation2 + $0x638] sm:$0xff]
        %v5141 = vld [vmem:[#allocation3 + $0x8] sm:$0x1]
        %v5142 = vlaneseq
        %v5143 = vshrl.u32 %v5142, 7
        %v5144 = vsub.s32 0, %v5143
        %v5145 = vrot.slane %v5141, %v5144
        %v5146 = vmul.f32 %v5145, %v5137
        %v5147 = vmul.f32 %v5145, %v5138
        %v5148 = vmul.f32 %v5145, %v5139
        %v5149 = vmul.f32 %v5145, %v5140
        %v5150 = vadd.f32 %v5082, %v5146
        %v5151 = vadd.f32 %v5083, %v5147
        %v5152 = vadd.f32 %v5084, %v5148
        %v5153 = vadd.f32 %v5085, %v5149
        %v5154 = vld [vmem:[#allocation2 + $0x640] sm:$0xff]
        %v5155 = vld [vmem:[#allocation2 + $0x648] sm:$0xff]
        %v5156 = vld [vmem:[#allocation2 + $0x650] sm:$0xff]
        %v5157 = vld [vmem:[#allocation2 + $0x658] sm:$0xff]
        %v5158 = vld [vmem:[#allocation3 + $0x9] sm:$0x1]
        %v5159 = vlaneseq
        %v5160 = vshrl.u32 %v5159, 7
        %v5161 = vsub.s32 0, %v5160
        %v5162 = vrot.slane %v5158, %v5161
        %v5163 = vmul.f32 %v5162, %v5154
        %v5164 = vmul.f32 %v5162, %v5155
        %v5165 = vmul.f32 %v5162, %v5156
        %v5166 = vmul.f32 %v5162, %v5157
        %v5167 = vadd.f32 %v5099, %v5163
        %v5168 = vadd.f32 %v5100, %v5164
        %v5169 = vadd.f32 %v5101, %v5165
        %v5170 = vadd.f32 %v5102, %v5166
        %v5171 = vld [vmem:[#allocation2 + $0x660] sm:$0xff]
        %v5172 = vld [vmem:[#allocation2 + $0x668] sm:$0xff]
        %v5173 = vld [vmem:[#allocation2 + $0x670] sm:$0xff]
        %v5174 = vld [vmem:[#allocation2 + $0x678] sm:$0xff]
        %v5175 = vld [vmem:[#allocation3 + $0xa] sm:$0x1]
        %v5176 = vlaneseq
        %v5177 = vshrl.u32 %v5176, 7
        %v5178 = vsub.s32 0, %v5177
        %v5179 = vrot.slane %v5175, %v5178
        %v5180 = vmul.f32 %v5179, %v5171
        %v5181 = vmul.f32 %v5179, %v5172
        %v5182 = vmul.f32 %v5179, %v5173
        %v5183 = vmul.f32 %v5179, %v5174
        %v5184 = vadd.f32 %v5116, %v5180
        %v5185 = vadd.f32 %v5117, %v5181
        %v5186 = vadd.f32 %v5118, %v5182
        %v5187 = vadd.f32 %v5119, %v5183
        %v5188 = vld [vmem:[#allocation2 + $0x680] sm:$0xff]
        %v5189 = vld [vmem:[#allocation2 + $0x688] sm:$0xff]
        %v5190 = vld [vmem:[#allocation2 + $0x690] sm:$0xff]
        %v5191 = vld [vmem:[#allocation2 + $0x698] sm:$0xff]
        %v5192 = vld [vmem:[#allocation3 + $0xb] sm:$0x1]
        %v5193 = vlaneseq
        %v5194 = vshrl.u32 %v5193, 7
        %v5195 = vsub.s32 0, %v5194
        %v5196 = vrot.slane %v5192, %v5195
        %v5197 = vmul.f32 %v5196, %v5188
        %v5198 = vmul.f32 %v5196, %v5189
        %v5199 = vmul.f32 %v5196, %v5190
        %v5200 = vmul.f32 %v5196, %v5191
        %v5201 = vadd.f32 %v5133, %v5197
        %v5202 = vadd.f32 %v5134, %v5198
        %v5203 = vadd.f32 %v5135, %v5199
        %v5204 = vadd.f32 %v5136, %v5200
        %v5205 = vld [vmem:[#allocation2 + $0x6a0] sm:$0xff]
        %v5206 = vld [vmem:[#allocation2 + $0x6a8] sm:$0xff]
        %v5207 = vld [vmem:[#allocation2 + $0x6b0] sm:$0xff]
        %v5208 = vld [vmem:[#allocation2 + $0x6b8] sm:$0xff]
        %v5209 = vld [vmem:[#allocation3 + $0xc] sm:$0x1]
        %v5210 = vlaneseq
        %v5211 = vshrl.u32 %v5210, 7
        %v5212 = vsub.s32 0, %v5211
        %v5213 = vrot.slane %v5209, %v5212
        %v5214 = vmul.f32 %v5213, %v5205
        %v5215 = vmul.f32 %v5213, %v5206
        %v5216 = vmul.f32 %v5213, %v5207
        %v5217 = vmul.f32 %v5213, %v5208
        %v5218 = vadd.f32 %v5150, %v5214
        %v5219 = vadd.f32 %v5151, %v5215
        %v5220 = vadd.f32 %v5152, %v5216
        %v5221 = vadd.f32 %v5153, %v5217
        %v5222 = vld [vmem:[#allocation2 + $0x6c0] sm:$0xff]
        %v5223 = vld [vmem:[#allocation2 + $0x6c8] sm:$0xff]
        %v5224 = vld [vmem:[#allocation2 + $0x6d0] sm:$0xff]
        %v5225 = vld [vmem:[#allocation2 + $0x6d8] sm:$0xff]
        %v5226 = vld [vmem:[#allocation3 + $0xd] sm:$0x1]
        %v5227 = vlaneseq
        %v5228 = vshrl.u32 %v5227, 7
        %v5229 = vsub.s32 0, %v5228
        %v5230 = vrot.slane %v5226, %v5229
        %v5231 = vmul.f32 %v5230, %v5222
        %v5232 = vmul.f32 %v5230, %v5223
        %v5233 = vmul.f32 %v5230, %v5224
        %v5234 = vmul.f32 %v5230, %v5225
        %v5235 = vadd.f32 %v5167, %v5231
        %v5236 = vadd.f32 %v5168, %v5232
        %v5237 = vadd.f32 %v5169, %v5233
        %v5238 = vadd.f32 %v5170, %v5234
        %v5239 = vld [vmem:[#allocation2 + $0x6e0] sm:$0xff]
        %v5240 = vld [vmem:[#allocation2 + $0x6e8] sm:$0xff]
        %v5241 = vld [vmem:[#allocation2 + $0x6f0] sm:$0xff]
        %v5242 = vld [vmem:[#allocation2 + $0x6f8] sm:$0xff]
        %v5243 = vld [vmem:[#allocation3 + $0xe] sm:$0x1]
        %v5244 = vlaneseq
        %v5245 = vshrl.u32 %v5244, 7
        %v5246 = vsub.s32 0, %v5245
        %v5247 = vrot.slane %v5243, %v5246
        %v5248 = vmul.f32 %v5247, %v5239
        %v5249 = vmul.f32 %v5247, %v5240
        %v5250 = vmul.f32 %v5247, %v5241
        %v5251 = vmul.f32 %v5247, %v5242
        %v5252 = vadd.f32 %v5184, %v5248
        %v5253 = vadd.f32 %v5185, %v5249
        %v5254 = vadd.f32 %v5186, %v5250
        %v5255 = vadd.f32 %v5187, %v5251
        %v5256 = vld [vmem:[#allocation2 + $0x700] sm:$0xff]
        %v5257 = vld [vmem:[#allocation2 + $0x708] sm:$0xff]
        %v5258 = vld [vmem:[#allocation2 + $0x710] sm:$0xff]
        %v5259 = vld [vmem:[#allocation2 + $0x718] sm:$0xff]
        %v5260 = vld [vmem:[#allocation3 + $0xf] sm:$0x1]
        %v5261 = vlaneseq
        %v5262 = vshrl.u32 %v5261, 7
        %v5263 = vsub.s32 0, %v5262
        %v5264 = vrot.slane %v5260, %v5263
        %v5265 = vmul.f32 %v5264, %v5256
        %v5266 = vmul.f32 %v5264, %v5257
        %v5267 = vmul.f32 %v5264, %v5258
        %v5268 = vmul.f32 %v5264, %v5259
        %v5269 = vadd.f32 %v5201, %v5265
        %v5270 = vadd.f32 %v5202, %v5266
        %v5271 = vadd.f32 %v5203, %v5267
        %v5272 = vadd.f32 %v5204, %v5268
        %v5273 = vld [vmem:[#allocation2 + $0x720] sm:$0xff]
        %v5274 = vld [vmem:[#allocation2 + $0x728] sm:$0xff]
        %v5275 = vld [vmem:[#allocation2 + $0x730] sm:$0xff]
        %v5276 = vld [vmem:[#allocation2 + $0x738] sm:$0xff]
        %v5277 = vld [vmem:[#allocation3 + $0x10] sm:$0x1]
        %v5278 = vlaneseq
        %v5279 = vshrl.u32 %v5278, 7
        %v5280 = vsub.s32 0, %v5279
        %v5281 = vrot.slane %v5277, %v5280
        %v5282 = vmul.f32 %v5281, %v5273
        %v5283 = vmul.f32 %v5281, %v5274
        %v5284 = vmul.f32 %v5281, %v5275
        %v5285 = vmul.f32 %v5281, %v5276
        %v5286 = vadd.f32 %v5218, %v5282
        %v5287 = vadd.f32 %v5219, %v5283
        %v5288 = vadd.f32 %v5220, %v5284
        %v5289 = vadd.f32 %v5221, %v5285
        %v5290 = vld [vmem:[#allocation2 + $0x740] sm:$0xff]
        %v5291 = vld [vmem:[#allocation2 + $0x748] sm:$0xff]
        %v5292 = vld [vmem:[#allocation2 + $0x750] sm:$0xff]
        %v5293 = vld [vmem:[#allocation2 + $0x758] sm:$0xff]
        %v5294 = vld [vmem:[#allocation3 + $0x11] sm:$0x1]
        %v5295 = vlaneseq
        %v5296 = vshrl.u32 %v5295, 7
        %v5297 = vsub.s32 0, %v5296
        %v5298 = vrot.slane %v5294, %v5297
        %v5299 = vmul.f32 %v5298, %v5290
        %v5300 = vmul.f32 %v5298, %v5291
        %v5301 = vmul.f32 %v5298, %v5292
        %v5302 = vmul.f32 %v5298, %v5293
        %v5303 = vadd.f32 %v5235, %v5299
        %v5304 = vadd.f32 %v5236, %v5300
        %v5305 = vadd.f32 %v5237, %v5301
        %v5306 = vadd.f32 %v5238, %v5302
        %v5307 = vld [vmem:[#allocation2 + $0x760] sm:$0xff]
        %v5308 = vld [vmem:[#allocation2 + $0x768] sm:$0xff]
        %v5309 = vld [vmem:[#allocation2 + $0x770] sm:$0xff]
        %v5310 = vld [vmem:[#allocation2 + $0x778] sm:$0xff]
        %v5311 = vld [vmem:[#allocation3 + $0x12] sm:$0x1]
        %v5312 = vlaneseq
        %v5313 = vshrl.u32 %v5312, 7
        %v5314 = vsub.s32 0, %v5313
        %v5315 = vrot.slane %v5311, %v5314
        %v5316 = vmul.f32 %v5315, %v5307
        %v5317 = vmul.f32 %v5315, %v5308
        %v5318 = vmul.f32 %v5315, %v5309
        %v5319 = vmul.f32 %v5315, %v5310
        %v5320 = vadd.f32 %v5252, %v5316
        %v5321 = vadd.f32 %v5253, %v5317
        %v5322 = vadd.f32 %v5254, %v5318
        %v5323 = vadd.f32 %v5255, %v5319
        %v5324 = vld [vmem:[#allocation2 + $0x780] sm:$0xff]
        %v5325 = vld [vmem:[#allocation2 + $0x788] sm:$0xff]
        %v5326 = vld [vmem:[#allocation2 + $0x790] sm:$0xff]
        %v5327 = vld [vmem:[#allocation2 + $0x798] sm:$0xff]
        %v5328 = vld [vmem:[#allocation3 + $0x13] sm:$0x1]
        %v5329 = vlaneseq
        %v5330 = vshrl.u32 %v5329, 7
        %v5331 = vsub.s32 0, %v5330
        %v5332 = vrot.slane %v5328, %v5331
        %v5333 = vmul.f32 %v5332, %v5324
        %v5334 = vmul.f32 %v5332, %v5325
        %v5335 = vmul.f32 %v5332, %v5326
        %v5336 = vmul.f32 %v5332, %v5327
        %v5337 = vadd.f32 %v5269, %v5333
        %v5338 = vadd.f32 %v5270, %v5334
        %v5339 = vadd.f32 %v5271, %v5335
        %v5340 = vadd.f32 %v5272, %v5336
        %v5341 = vld [vmem:[#allocation2 + $0x7a0] sm:$0xff]
        %v5342 = vld [vmem:[#allocation2 + $0x7a8] sm:$0xff]
        %v5343 = vld [vmem:[#allocation2 + $0x7b0] sm:$0xff]
        %v5344 = vld [vmem:[#allocation2 + $0x7b8] sm:$0xff]
        %v5345 = vld [vmem:[#allocation3 + $0x14] sm:$0x1]
        %v5346 = vlaneseq
        %v5347 = vshrl.u32 %v5346, 7
        %v5348 = vsub.s32 0, %v5347
        %v5349 = vrot.slane %v5345, %v5348
        %v5350 = vmul.f32 %v5349, %v5341
        %v5351 = vmul.f32 %v5349, %v5342
        %v5352 = vmul.f32 %v5349, %v5343
        %v5353 = vmul.f32 %v5349, %v5344
        %v5354 = vadd.f32 %v5286, %v5350
        %v5355 = vadd.f32 %v5287, %v5351
        %v5356 = vadd.f32 %v5288, %v5352
        %v5357 = vadd.f32 %v5289, %v5353
        %v5358 = vld [vmem:[#allocation2 + $0x7c0] sm:$0xff]
        %v5359 = vld [vmem:[#allocation2 + $0x7c8] sm:$0xff]
        %v5360 = vld [vmem:[#allocation2 + $0x7d0] sm:$0xff]
        %v5361 = vld [vmem:[#allocation2 + $0x7d8] sm:$0xff]
        %v5362 = vld [vmem:[#allocation3 + $0x15] sm:$0x1]
        %v5363 = vlaneseq
        %v5364 = vshrl.u32 %v5363, 7
        %v5365 = vsub.s32 0, %v5364
        %v5366 = vrot.slane %v5362, %v5365
        %v5367 = vmul.f32 %v5366, %v5358
        %v5368 = vmul.f32 %v5366, %v5359
        %v5369 = vmul.f32 %v5366, %v5360
        %v5370 = vmul.f32 %v5366, %v5361
        %v5371 = vadd.f32 %v5303, %v5367
        %v5372 = vadd.f32 %v5304, %v5368
        %v5373 = vadd.f32 %v5305, %v5369
        %v5374 = vadd.f32 %v5306, %v5370
        %v5375 = vld [vmem:[#allocation2 + $0x7e0] sm:$0xff]
        %v5376 = vld [vmem:[#allocation2 + $0x7e8] sm:$0xff]
        %v5377 = vld [vmem:[#allocation2 + $0x7f0] sm:$0xff]
        %v5378 = vld [vmem:[#allocation2 + $0x7f8] sm:$0xff]
        %v5379 = vld [vmem:[#allocation3 + $0x16] sm:$0x1]
        %v5380 = vlaneseq
        %v5381 = vshrl.u32 %v5380, 7
        %v5382 = vsub.s32 0, %v5381
        %v5383 = vrot.slane %v5379, %v5382
        %v5384 = vmul.f32 %v5383, %v5375
        %v5385 = vmul.f32 %v5383, %v5376
        %v5386 = vmul.f32 %v5383, %v5377
        %v5387 = vmul.f32 %v5383, %v5378
        %v5388 = vadd.f32 %v5320, %v5384
        %v5389 = vadd.f32 %v5321, %v5385
        %v5390 = vadd.f32 %v5322, %v5386
        %v5391 = vadd.f32 %v5323, %v5387
        %v5392 = vld [vmem:[#allocation2 + $0x800] sm:$0xff]
        %v5393 = vld [vmem:[#allocation2 + $0x808] sm:$0xff]
        %v5394 = vld [vmem:[#allocation2 + $0x810] sm:$0xff]
        %v5395 = vld [vmem:[#allocation2 + $0x818] sm:$0xff]
        %v5396 = vld [vmem:[#allocation3 + $0x17] sm:$0x1]
        %v5397 = vlaneseq
        %v5398 = vshrl.u32 %v5397, 7
        %v5399 = vsub.s32 0, %v5398
        %v5400 = vrot.slane %v5396, %v5399
        %v5401 = vmul.f32 %v5400, %v5392
        %v5402 = vmul.f32 %v5400, %v5393
        %v5403 = vmul.f32 %v5400, %v5394
        %v5404 = vmul.f32 %v5400, %v5395
        %v5405 = vadd.f32 %v5337, %v5401
        %v5406 = vadd.f32 %v5338, %v5402
        %v5407 = vadd.f32 %v5339, %v5403
        %v5408 = vadd.f32 %v5340, %v5404
        %v5409 = vld [vmem:[#allocation2 + $0x820] sm:$0xff]
        %v5410 = vld [vmem:[#allocation2 + $0x828] sm:$0xff]
        %v5411 = vld [vmem:[#allocation2 + $0x830] sm:$0xff]
        %v5412 = vld [vmem:[#allocation2 + $0x838] sm:$0xff]
        %v5413 = vld [vmem:[#allocation3 + $0x18] sm:$0x1]
        %v5414 = vlaneseq
        %v5415 = vshrl.u32 %v5414, 7
        %v5416 = vsub.s32 0, %v5415
        %v5417 = vrot.slane %v5413, %v5416
        %v5418 = vmul.f32 %v5417, %v5409
        %v5419 = vmul.f32 %v5417, %v5410
        %v5420 = vmul.f32 %v5417, %v5411
        %v5421 = vmul.f32 %v5417, %v5412
        %v5422 = vadd.f32 %v5354, %v5418
        %v5423 = vadd.f32 %v5355, %v5419
        %v5424 = vadd.f32 %v5356, %v5420
        %v5425 = vadd.f32 %v5357, %v5421
        %v5426 = vld [vmem:[#allocation2 + $0x840] sm:$0xff]
        %v5427 = vld [vmem:[#allocation2 + $0x848] sm:$0xff]
        %v5428 = vld [vmem:[#allocation2 + $0x850] sm:$0xff]
        %v5429 = vld [vmem:[#allocation2 + $0x858] sm:$0xff]
        %v5430 = vld [vmem:[#allocation3 + $0x19] sm:$0x1]
        %v5431 = vlaneseq
        %v5432 = vshrl.u32 %v5431, 7
        %v5433 = vsub.s32 0, %v5432
        %v5434 = vrot.slane %v5430, %v5433
        %v5435 = vmul.f32 %v5434, %v5426
        %v5436 = vmul.f32 %v5434, %v5427
        %v5437 = vmul.f32 %v5434, %v5428
        %v5438 = vmul.f32 %v5434, %v5429
        %v5439 = vadd.f32 %v5371, %v5435
        %v5440 = vadd.f32 %v5372, %v5436
        %v5441 = vadd.f32 %v5373, %v5437
        %v5442 = vadd.f32 %v5374, %v5438
        %v5443 = vld [vmem:[#allocation2 + $0x860] sm:$0xff]
        %v5444 = vld [vmem:[#allocation2 + $0x868] sm:$0xff]
        %v5445 = vld [vmem:[#allocation2 + $0x870] sm:$0xff]
        %v5446 = vld [vmem:[#allocation2 + $0x878] sm:$0xff]
        %v5447 = vld [vmem:[#allocation3 + $0x1a] sm:$0x1]
        %v5448 = vlaneseq
        %v5449 = vshrl.u32 %v5448, 7
        %v5450 = vsub.s32 0, %v5449
        %v5451 = vrot.slane %v5447, %v5450
        %v5452 = vmul.f32 %v5451, %v5443
        %v5453 = vmul.f32 %v5451, %v5444
        %v5454 = vmul.f32 %v5451, %v5445
        %v5455 = vmul.f32 %v5451, %v5446
        %v5456 = vadd.f32 %v5388, %v5452
        %v5457 = vadd.f32 %v5389, %v5453
        %v5458 = vadd.f32 %v5390, %v5454
        %v5459 = vadd.f32 %v5391, %v5455
        %v5460 = vld [vmem:[#allocation2 + $0x880] sm:$0xff]
        %v5461 = vld [vmem:[#allocation2 + $0x888] sm:$0xff]
        %v5462 = vld [vmem:[#allocation2 + $0x890] sm:$0xff]
        %v5463 = vld [vmem:[#allocation2 + $0x898] sm:$0xff]
        %v5464 = vld [vmem:[#allocation3 + $0x1b] sm:$0x1]
        %v5465 = vlaneseq
        %v5466 = vshrl.u32 %v5465, 7
        %v5467 = vsub.s32 0, %v5466
        %v5468 = vrot.slane %v5464, %v5467
        %v5469 = vmul.f32 %v5468, %v5460
        %v5470 = vmul.f32 %v5468, %v5461
        %v5471 = vmul.f32 %v5468, %v5462
        %v5472 = vmul.f32 %v5468, %v5463
        %v5473 = vadd.f32 %v5405, %v5469
        %v5474 = vadd.f32 %v5406, %v5470
        %v5475 = vadd.f32 %v5407, %v5471
        %v5476 = vadd.f32 %v5408, %v5472
        %v5477 = vld [vmem:[#allocation2 + $0x8a0] sm:$0xff]
        %v5478 = vld [vmem:[#allocation2 + $0x8a8] sm:$0xff]
        %v5479 = vld [vmem:[#allocation2 + $0x8b0] sm:$0xff]
        %v5480 = vld [vmem:[#allocation2 + $0x8b8] sm:$0xff]
        %v5481 = vld [vmem:[#allocation3 + $0x1c] sm:$0x1]
        %v5482 = vlaneseq
        %v5483 = vshrl.u32 %v5482, 7
        %v5484 = vsub.s32 0, %v5483
        %v5485 = vrot.slane %v5481, %v5484
        %v5486 = vmul.f32 %v5485, %v5477
        %v5487 = vmul.f32 %v5485, %v5478
        %v5488 = vmul.f32 %v5485, %v5479
        %v5489 = vmul.f32 %v5485, %v5480
        %v5490 = vadd.f32 %v5422, %v5486
        %v5491 = vadd.f32 %v5423, %v5487
        %v5492 = vadd.f32 %v5424, %v5488
        %v5493 = vadd.f32 %v5425, %v5489
        %v5494 = vld [vmem:[#allocation2 + $0x8c0] sm:$0xff]
        %v5495 = vld [vmem:[#allocation2 + $0x8c8] sm:$0xff]
        %v5496 = vld [vmem:[#allocation2 + $0x8d0] sm:$0xff]
        %v5497 = vld [vmem:[#allocation2 + $0x8d8] sm:$0xff]
        %v5498 = vld [vmem:[#allocation3 + $0x1d] sm:$0x1]
        %v5499 = vlaneseq
        %v5500 = vshrl.u32 %v5499, 7
        %v5501 = vsub.s32 0, %v5500
        %v5502 = vrot.slane %v5498, %v5501
        %v5503 = vmul.f32 %v5502, %v5494
        %v5504 = vmul.f32 %v5502, %v5495
        %v5505 = vmul.f32 %v5502, %v5496
        %v5506 = vmul.f32 %v5502, %v5497
        %v5507 = vadd.f32 %v5439, %v5503
        %v5508 = vadd.f32 %v5440, %v5504
        %v5509 = vadd.f32 %v5441, %v5505
        %v5510 = vadd.f32 %v5442, %v5506
        %v5511 = vld [vmem:[#allocation2 + $0x8e0] sm:$0xff]
        %v5512 = vld [vmem:[#allocation2 + $0x8e8] sm:$0xff]
        %v5513 = vld [vmem:[#allocation2 + $0x8f0] sm:$0xff]
        %v5514 = vld [vmem:[#allocation2 + $0x8f8] sm:$0xff]
        %v5515 = vld [vmem:[#allocation3 + $0x1e] sm:$0x1]
        %v5516 = vlaneseq
        %v5517 = vshrl.u32 %v5516, 7
        %v5518 = vsub.s32 0, %v5517
        %v5519 = vrot.slane %v5515, %v5518
        %v5520 = vmul.f32 %v5519, %v5511
        %v5521 = vmul.f32 %v5519, %v5512
        %v5522 = vmul.f32 %v5519, %v5513
        %v5523 = vmul.f32 %v5519, %v5514
        %v5524 = vadd.f32 %v5456, %v5520
        %v5525 = vadd.f32 %v5457, %v5521
        %v5526 = vadd.f32 %v5458, %v5522
        %v5527 = vadd.f32 %v5459, %v5523
        %v5528 = vld [vmem:[#allocation2 + $0x900] sm:$0xff]
        %v5529 = vld [vmem:[#allocation2 + $0x908] sm:$0xff]
        %v5530 = vld [vmem:[#allocation2 + $0x910] sm:$0xff]
        %v5531 = vld [vmem:[#allocation2 + $0x918] sm:$0xff]
        %v5532 = vld [vmem:[#allocation3 + $0x1f] sm:$0x1]
        %v5533 = vlaneseq
        %v5534 = vshrl.u32 %v5533, 7
        %v5535 = vsub.s32 0, %v5534
        %v5536 = vrot.slane %v5532, %v5535
        %v5537 = vmul.f32 %v5536, %v5528
        %v5538 = vmul.f32 %v5536, %v5529
        %v5539 = vmul.f32 %v5536, %v5530
        %v5540 = vmul.f32 %v5536, %v5531
        %v5541 = vadd.f32 %v5473, %v5537
        %v5542 = vadd.f32 %v5474, %v5538
        %v5543 = vadd.f32 %v5475, %v5539
        %v5544 = vadd.f32 %v5476, %v5540
        %v5545 = vadd.f32 %v5490, %v5507
        %v5546 = vadd.f32 %v5491, %v5508
        %v5547 = vadd.f32 %v5492, %v5509
        %v5548 = vadd.f32 %v5493, %v5510
        %v5549 = vadd.f32 %v5545, %v5524
        %v5550 = vadd.f32 %v5546, %v5525
        %v5551 = vadd.f32 %v5547, %v5526
        %v5552 = vadd.f32 %v5548, %v5527
        %v5553 = vadd.f32 %v5549, %v5541
        %v5554 = vadd.f32 %v5550, %v5542
        %v5555 = vadd.f32 %v5551, %v5543
        %v5556 = vadd.f32 %v5552, %v5544
        %v5557 = vmax.f32 %v5553, 0.0
        %v5558 = vmax.f32 %v5554, 0.0
        %v5559 = vmax.f32 %v5555, 0.0
        %v5560 = vmax.f32 %v5556, 0.0
        %v5561 = vld [vmem:[#allocation2 + $0x940] sm:$0xff]
        %v5562 = vld [vmem:[#allocation2 + $0x948] sm:$0xff]
        %v5563 = vld [vmem:[#allocation2 + $0x950] sm:$0xff]
        %v5564 = vld [vmem:[#allocation2 + $0x958] sm:$0xff]
        %v5565 = vmul.f32 %v5557, %v5561
        %v5566 = vmul.f32 %v5558, %v5562
        %v5567 = vmul.f32 %v5559, %v5563
        %v5568 = vmul.f32 %v5560, %v5564
        %v5569 = vadd.f32 %v5565, %v5566
        %v5570 = vadd.f32 %v5569, %v5567
        %v5571 = vadd.f32 %v5570, %v5568
        %v5572 = vrot.slane %v5571, 4
        %v5573 = vadd.f32 %v5571, %v5572
        %v5574 = vrot.slane %v5573, 2
        %v5575 = vadd.f32 %v5573, %v5574
        %v5576 = vrot.slane %v5575, 1
        %v5577 = vadd.f32 %v5575, %v5576
        %v5578 = vld [vmem:[#allocation2 + $0x960] sm:$0x1]
        %v5579 = vadd.f32 %v5577, %v5578
        %5580 = vst [vmem:[%s317] sm:$0x1] %v5579
        %s5581 = sand.u32 %s120, 1
        %s5582 = scalar_lea.sflag [#allocation7], %s5581
        %s5583 = sand.u32 %s120, 1
        %s5584 = scalar_lea.vmem [#allocation6], %s5583
        // Predicated region
        $region116: #{tpu_custom_call.1} parent=106 // pred_check
          %p5585 = pneg %p130
        $region117: #{tpu_custom_call.1} parent=106 // pred_check_branch
          %5587 = sbr.rel (%p5585) target = $region119
        $region118: #{tpu_custom_call.1} parent=106 // pred_region
          %s5589 = ssub.s32 16, 16
          %5590 = vsyncadd %s5582, %s5589
          %s5591 = smul.addr %s18, 16
          %s5592 = scalar_lea.hbm %s4, %s5591
          %s5594 = sshll.u32 %s5584, 4
          %s5595 = int_to_ptr.vmem [resolvable:$true] %s5594
          %5597 = dma.vmem_to_hbm [thread:$0]  %s5595, 16, %s5592, %s5582
        $region119: #{tpu_custom_call.1} parent=106 // pred_fallthru
          _
      $region107: #{tpu_custom_call.1} parent=5 // pred_fallthru
        _
      %p5598 = scmp.le.s32.totalorder 2, %s13
      // Predicated region
      $region120: #{tpu_custom_call.1} parent=5 // pred_check
        %p5599 = pneg %p5598
      $region121: #{tpu_custom_call.1} parent=5 // pred_check_branch
        %5601 = sbr.rel (%p5599) target = $region123
      $region122: #{tpu_custom_call.1} parent=5 // pred_region
        %s5602 = ssub.s32 %s13, 2
        // Predicated region
        $region124: #{tpu_custom_call.1} parent=122 // pred_check
          %p5603 = pneg %p136
        $region125: #{tpu_custom_call.1} parent=122 // pred_check_branch
          %5605 = sbr.rel (%p5603) target = $region127
        $region126: #{tpu_custom_call.1} parent=122 // pred_region
          %s5606 = sand.u32 %s121, 1
          %s5607 = scalar_lea.sflag [#allocation7], %s5606
          %s5608 = sand.u32 %s121, 1
          %s5609 = scalar_lea.vmem [#allocation6], %s5608
          %5610 = dma.done %s5607, 16
        $region127: #{tpu_custom_call.1} parent=122 // pred_fallthru
          _
      $region123: #{tpu_custom_call.1} parent=5 // pred_fallthru
        _
    $region6: #{tpu_custom_call.1} parent=1 // loop_footer
      %s17 = sadd.s32 1, %s13
    $region7: #{tpu_custom_call.1} parent=1 // loop_footer_branch
      %12 = sbr.rel target = $region3
    $region8: #{tpu_custom_call.1} parent=1 // loop_exit
      _
    %5611 = vsyncpa [#allocation7], 1
    %s5612 = scalar_lea.sflag [#allocation7], 1
    %5613 = vsyncpa %s5612, 1

</llo_original>
